<compile_context>
chip_gen: v7x
topology: tpu7x:2x2x1
jax: 0.10.0
libtpu: 0.0.40
codegen_flags: <defaults>
</compile_context>

<pallas_src>
import functools
import math

import jax
import jax.numpy as jnp
from jax.experimental import pallas as pl
from jax.experimental.pallas import tpu as pltpu


# ----------------------------- small helpers --------------------------------

def _round_up(x, m):
    return (x + m - 1) // m * m


def _pick_row_tile(M, max_tile=256):
    """Row tile: as large as possible, but prefer >=2 blocks for megacore."""
    cands = [t for t in (512, 256, 128, 64, 32, 16, 8) if t <= max_tile]
    for t in cands:
        if M % t == 0 and M // t >= 2:
            return t, M
    for t in cands:
        if M % t == 0:
            return t, M
    Mp = _round_up(M, 8)
    t = min(max_tile, Mp)
    return t, _round_up(Mp, t)


def _pick_col_tile(N):
    for t in (256, 128):          # 256 fills the v6e/v7x 256x256 MXU; lane-dense
        if N % t == 0:
            return t
    return N


def _pad_rows(x, Mp):
    pad = Mp - x.shape[0]
    return jnp.pad(x, ((0, pad), (0, 0))) if pad else x


SMEM_SPEC = pl.BlockSpec(memory_space=pltpu.MemorySpace.SMEM)


# ------------------------------ Pallas kernels -------------------------------

def _linear_kernel(x_ref, w_ref, b_ref, o_ref):
    # o = x @ w + b   (bf16 MXU operands, f32 accumulate, bf16 output)
    y = jnp.dot(x_ref[...].astype(jnp.bfloat16), w_ref[...],
                preferred_element_type=jnp.float32) + b_ref[...]
    o_ref[...] = y.astype(o_ref.dtype)


def _linear_res_kernel(x_ref, w_ref, b_ref, res_ref, rw_ref, o_ref):
    # o = res + rw * (x @ w + b)   (ReZero residual fused; residual stream f32)
    y = jnp.dot(x_ref[...].astype(jnp.bfloat16), w_ref[...],
                preferred_element_type=jnp.float32) + b_ref[...]
    o_ref[...] = res_ref[...] + rw_ref[0, 0] * y


# ------------------------------ kernel wrappers -------------------------------

def pallas_linear(x, w, b, out_dtype=jnp.bfloat16):
    """x:[M,K] @ w:[K,N](bf16) + b:[N] -> [M,N] bf16 (cast done in-kernel)."""
    M, K = x.shape
    N = w.shape[1]
    tn = _pick_col_tile(N)
    tm, Mp = _pick_row_tile(M)
    xp = _pad_rows(x, Mp)
    # TODO(synk): for very large K on v7x, add a K grid axis ('arbitrary') + accumulator
    # instead of loading full-K blocks.
    out = pl.pallas_call(
        _linear_kernel,
        out_shape=jax.ShapeDtypeStruct((Mp, N), out_dtype),
        grid=(Mp // tm, N // tn),
        in_specs=[
            pl.BlockSpec((tm, K), lambda i, j: (i, 0)),
            pl.BlockSpec((K, tn), lambda i, j: (0, j)),
            pl.BlockSpec((1, tn), lambda i, j: (0, j)),
        ],
        out_specs=pl.BlockSpec((tm, tn), lambda i, j: (i, j)),
        compiler_params=pltpu.CompilerParams(
            dimension_semantics=("parallel", "parallel")),
    )(xp, w, b[None, :].astype(jnp.float32))
    return out[:M] if Mp != M else out


def pallas_linear_residual(x, w, b, res, rw):
    """res + rw * (x @ w + b); x bf16-cast in-kernel, res/rw stay f32."""
    M, K = x.shape
    N = w.shape[1]
    tn = _pick_col_tile(N)
    tm, Mp = _pick_row_tile(M)
    xp = _pad_rows(x, Mp)
    rp = _pad_rows(res.astype(jnp.float32), Mp)
    out = pl.pallas_call(
        _linear_res_kernel,
        out_shape=jax.ShapeDtypeStruct((Mp, N), jnp.float32),
        grid=(Mp // tm, N // tn),
        in_specs=[
            pl.BlockSpec((tm, K), lambda i, j: (i, 0)),
            pl.BlockSpec((K, tn), lambda i, j: (0, j)),
            pl.BlockSpec((1, tn), lambda i, j: (0, j)),
            pl.BlockSpec((tm, tn), lambda i, j: (i, j)),
            SMEM_SPEC,
        ],
        out_specs=pl.BlockSpec((tm, tn), lambda i, j: (i, j)),
        compiler_params=pltpu.CompilerParams(
            dimension_semantics=("parallel", "parallel")),
    )(xp, w, b[None, :].astype(jnp.float32), rp,
      rw.astype(jnp.float32).reshape(1, 1))
    return out[:M] if Mp != M else out


def pallas_ffn_residual(x, w1, b1, w2, b2, rw, activation="relu"):
    """x + rw * linear2(act(linear1(x))) with the hidden dim F as an 'arbitrary'
    reduction grid axis (VMEM accumulator) so W1/W2 never sit fully in VMEM."""
    M, E = x.shape
    F = w1.shape[1]
    tm, Mp = _pick_row_tile(M)
    tf = next((t for t in (512, 256, 128) if F % t == 0), F)
    xp = _pad_rows(x, Mp)

    if activation == "relu":
        act = lambda h: jnp.maximum(h, 0.0)
    elif activation == "gelu":
        act = lambda h: jax.nn.gelu(h, approximate=True)
    else:
        raise ValueError(f"unsupported activation {activation!r}")

    def kernel(x_ref, w1_ref, b1_ref, w2_ref, b2_ref, rw_ref, o_ref, acc_ref):
        j = pl.program_id(1)

        @pl.when(j == 0)
        def _():
            acc_ref[...] = jnp.zeros_like(acc_ref)

        h = jnp.dot(x_ref[...].astype(jnp.bfloat16), w1_ref[...],
                    preferred_element_type=jnp.float32) + b1_ref[...]
        h = act(h)
        # dropout between activation and linear2 is identity in eval mode.
        acc_ref[...] += jnp.dot(h.astype(jnp.bfloat16), w2_ref[...],
                                preferred_element_type=jnp.float32)

        @pl.when(j == pl.num_programs(1) - 1)
        def _():
            o_ref[...] = (x_ref[...].astype(jnp.float32)
                          + rw_ref[0, 0] * (acc_ref[...] + b2_ref[...]))

    out = pl.pallas_call(
        kernel,
        out_shape=jax.ShapeDtypeStruct((Mp, E), jnp.float32),
        grid=(Mp // tm, F // tf),
        in_specs=[
            pl.BlockSpec((tm, E), lambda i, j: (i, 0)),
            pl.BlockSpec((E, tf), lambda i, j: (0, j)),
            pl.BlockSpec((1, tf), lambda i, j: (0, j)),
            pl.BlockSpec((tf, E), lambda i, j: (j, 0)),
            pl.BlockSpec((1, E), lambda i, j: (0, 0)),
            SMEM_SPEC,
        ],
        out_specs=pl.BlockSpec((tm, E), lambda i, j: (i, 0)),
        scratch_shapes=[pltpu.VMEM((tm, E), jnp.float32)],
        compiler_params=pltpu.CompilerParams(
            dimension_semantics=("parallel", "arbitrary")),
    )(xp, w1, b1[None, :].astype(jnp.float32), w2,
      b2[None, :].astype(jnp.float32), rw.astype(jnp.float32).reshape(1, 1))
    return out[:M] if Mp != M else out


def pallas_mha_core(q, k_t, v, bias, *, return_mean_probs=False):
    """Scaled dot-product attention, all heads per grid step.

    q: [B,H,Lq,Dh] bf16, k_t: [B,H,Dh,Lk] bf16 (pre-transposed), v: [B,H,Lk,Dh] bf16,
    bias: [B,Lq,Lk] f32 additive (0 / -1e30; padded key columns carry -1e30).
    Returns (attn_out [B,H,Lq,Dh] bf16, head-mean probs [B,Lq,Lk] f32 or None).
    """
    B, H, Lq, Dh = q.shape
    Lk = v.shape[2]
    scale = 1.0 / math.sqrt(Dh)

    def kernel(q_ref, k_ref, v_ref, b_ref, o_ref, *p_out):
        # QK^T: bf16 operands, f32 MXU accumulation; k is pre-transposed so the
        # contraction is lhs-last x rhs-first (no in-kernel XLU transpose).
        s = jnp.einsum("hqd,hdk->hqk", q_ref[0], k_ref[0],
                       preferred_element_type=jnp.float32)
        s = s * scale + b_ref[...]
        s = s - jnp.max(s, axis=-1, keepdims=True)
        e = jnp.exp(s)
        # divide on the EUP slot (approx reciprocal), off the VALU.
        p = e * pl.reciprocal(jnp.sum(e, axis=-1, keepdims=True), approx=True)
        o = jnp.einsum("hqk,hkd->hqd", p.astype(v_ref.dtype), v_ref[0],
                       preferred_element_type=jnp.float32)
        o_ref[0] = o.astype(o_ref.dtype)
        if p_out:
            p_out[0][0] = jnp.mean(p, axis=0)     # head-mean, computed in-kernel

    out_shape = [jax.ShapeDtypeStruct((B, H, Lq, Dh), jnp.bfloat16)]
    out_specs = [pl.BlockSpec((1, H, Lq, Dh), lambda b: (b, 0, 0, 0))]
    if return_mean_probs:
        out_shape.append(jax.ShapeDtypeStruct((B, Lq, Lk), jnp.float32))
        out_specs.append(pl.BlockSpec((1, Lq, Lk), lambda b: (b, 0, 0)))

    outs = pl.pallas_call(
        kernel,
        out_shape=tuple(out_shape),
        grid=(B,),
        in_specs=[
            pl.BlockSpec((1, H, Lq, Dh), lambda b: (b, 0, 0, 0)),
            pl.BlockSpec((1, H, Dh, Lk), lambda b: (b, 0, 0, 0)),
            pl.BlockSpec((1, H, Lk, Dh), lambda b: (b, 0, 0, 0)),
            pl.BlockSpec((1, Lq, Lk), lambda b: (b, 0, 0)),
        ],
        out_specs=tuple(out_specs),
        compiler_params=pltpu.CompilerParams(
            dimension_semantics=("parallel",)),
    )(q, k_t, v, bias)
    if return_mean_probs:
        return outs[0], outs[1]
    return outs[0], None


# ------------------------------ plain-JAX glue --------------------------------

def _build_attn_bias(B, Lq, Lk, Lqp, Lkp, attn_mask, key_padding_mask):
    bias = jnp.zeros((B, Lq, Lk), jnp.float32)
    if attn_mask is not None:
        # TODO(synk): 3-D per-head attn_mask ([B*H, Lq, Lk]) not supported; 2-D only.
        if jnp.issubdtype(attn_mask.dtype, jnp.bool_):
            am = jnp.where(attn_mask, -1e30, 0.0).astype(jnp.float32)
        else:
            am = attn_mask.astype(jnp.float32)
        bias = bias + am[None, :, :]
    if key_padding_mask is not None:
        bias = bias + jnp.where(key_padding_mask[:, None, :], -1e30, 0.0)
    # Pad key axis to a lane-dense multiple of 128 with -1e30 (exact: padded keys
    # get zero probability); pad query rows with 0 (sliced off later).
    if Lkp > Lk:
        bias = jnp.pad(bias, ((0, 0), (0, 0), (0, Lkp - Lk)), constant_values=-1e30)
    if Lqp > Lq:
        bias = jnp.pad(bias, ((0, 0), (0, Lqp - Lq), (0, 0)))
    return bias


def mod_rztx_decoder_layer(params, tgt, memory,
                           tgt_mask=None, memory_mask=None,
                           tgt_key_padding_mask=None,
                           memory_key_padding_mask=None,
                           *, nhead, activation="relu"):
    """ReZero decoder layer forward (eval mode: all dropouts are identity).

    tgt: [Lt, B, E], memory: [Lm, B, E]  (PyTorch seq-first layout).
    Returns (tgt_out [Lt, B, E], src_attn_weights [B, Lt, Lm]).
    """
    Lt, B, E = tgt.shape
    Lm = memory.shape[0]
    H = nhead
    Dh = E // H
    Ltp = _round_up(Lt, 8)          # query-axis padding (sublane alignment)
    Ltp_k = _round_up(Lt, 128)      # key-axis padding (lane-dense)
    Lmp_k = _round_up(Lm, 128)

    # TODO(synk): projections could write head-major layouts directly via out_specs;
    # here the (cheap, bf16) head reshapes/transposes stay in XLA.
    def heads(rows, L, Lp):         # [L*B, E] -> [B, H, Lp, Dh]
        x = jnp.transpose(rows.reshape(L, B, H, Dh), (1, 2, 0, 3))
        if Lp > L:
            x = jnp.pad(x, ((0, 0), (0, 0), (0, Lp - L), (0, 0)))
        return x

    def heads_kT(rows, L, Lp):      # [L*B, E] -> [B, H, Dh, Lp]
        x = jnp.transpose(rows.reshape(L, B, H, Dh), (1, 2, 3, 0))
        if Lp > L:
            x = jnp.pad(x, ((0, 0), (0, 0), (0, 0), (0, Lp - L)))
        return x

    def merge_heads(x, L):          # [B, H, Lp, Dh] -> [L*B, E]
        return jnp.transpose(x[:, :, :L, :], (2, 0, 1, 3)).reshape(L * B, E)

    tgt_rows = tgt.reshape(Lt * B, E).astype(jnp.float32)   # f32 residual stream
    mem_rows = memory.reshape(Lm * B, E)

    # --- self-attention + ReZero residual ------------------------------------
    qkv = pallas_linear(tgt_rows, params["self_w_in"], params["self_b_in"])   # bf16
    q, k, v = jnp.split(qkv, 3, axis=1)
    bias_self = _build_attn_bias(B, Lt, Lt, Ltp, Ltp_k,
                                 tgt_mask, tgt_key_padding_mask)
    attn, _ = pallas_mha_core(heads(q, Lt, Ltp), heads_kT(k, Lt, Ltp_k),
                              heads(v, Lt, Ltp_k), bias_self)
    tgt_rows = pallas_linear_residual(merge_heads(attn, Lt),
                                      params["self_w_out"], params["self_b_out"],
                                      tgt_rows, params["resweight"])

    # --- cross-attention (memory) + ReZero residual ---------------------------
    q2 = pallas_linear(tgt_rows, params["cross_w_q"], params["cross_b_q"])
    kv2 = pallas_linear(mem_rows, params["cross_w_kv"], params["cross_b_kv"])
    k2, v2 = jnp.split(kv2, 2, axis=1)
    bias_cross = _build_attn_bias(B, Lt, Lm, Ltp, Lmp_k,
                                  memory_mask, memory_key_padding_mask)
    attn2, probs2 = pallas_mha_core(heads(q2, Lt, Ltp), heads_kT(k2, Lm, Lmp_k),
                                    heads(v2, Lm, Lmp_k), bias_cross,
                                    return_mean_probs=True)
    # PyTorch MultiheadAttention returns head-averaged weights; computed in-kernel.
    src_attn_weights = probs2[:, :Lt, :Lm]
    tgt_rows = pallas_linear_residual(merge_heads(attn2, Lt),
                                      params["cross_w_out"], params["cross_b_out"],
                                      tgt_rows, params["resweight_src"])

    # --- feed-forward (linear1 -> act -> linear2) + ReZero residual -----------
    tgt_rows = pallas_ffn_residual(tgt_rows, params["w1"], params["b1"],
                                   params["w2"], params["b2"],
                                   params["resweight"], activation=activation)

    return tgt_rows.reshape(Lt, B, E), src_attn_weights


def init_params(key, d_model, nhead, dim_feedforward):
    assert d_model % nhead == 0
    E, F = d_model, dim_feedforward
    ks = jax.random.split(key, 10)

    def xavier(k, shape):
        limit = math.sqrt(6.0 / (shape[0] + shape[1]))
        return jax.random.uniform(k, shape, jnp.float32, -limit, limit)

    def lin_bias(k, n, fan_in):
        bound = 1.0 / math.sqrt(fan_in)
        return jax.random.uniform(k, (n,), jnp.float32, -bound, bound)

    # Weights stored pre-transposed ([in, out]) in bf16 for the MXU; biases and
    # ReZero gates stay f32.
    return {
        "self_w_in":  xavier(ks[0], (E, 3 * E)).astype(jnp.bfloat16),
        "self_b_in":  jnp.zeros((3 * E,), jnp.float32),
        "self_w_out": xavier(ks[1], (E, E)).astype(jnp.bfloat16),
        "self_b_out": jnp.zeros((E,), jnp.float32),
        "cross_w_q":  xavier(ks[2], (E, E)).astype(jnp.bfloat16),
        "cross_b_q":  jnp.zeros((E,), jnp.float32),
        "cross_w_kv": xavier(ks[3], (E, 2 * E)).astype(jnp.bfloat16),
        "cross_b_kv": jnp.zeros((2 * E,), jnp.float32),
        "cross_w_out": xavier(ks[4], (E, E)).astype(jnp.bfloat16),
        "cross_b_out": jnp.zeros((E,), jnp.float32),
        "w1": xavier(ks[5], (E, F)).astype(jnp.bfloat16),
        "b1": lin_bias(ks[6], F, E),
        "w2": xavier(ks[7], (F, E)).astype(jnp.bfloat16),
        "b2": lin_bias(ks[8], E, F),
        # Reference __init__ sets both ReZero gates to 0 (layer is identity at init).
        "resweight":     jnp.zeros((), jnp.float32),
        "resweight_src": jnp.zeros((), jnp.float32),
    }


# ----------------------------------- demo -------------------------------------

if __name__ == "__main__":
    key = jax.random.PRNGKey(0)
    d_model, nhead, dim_feedforward = 256, 2, 512     # head_dim = 128 (lane-dense)
    B, Lt, Lm = 2, 16, 24

    k_par, k_tgt, k_mem = jax.random.split(key, 3)
    params = init_params(k_par, d_model, nhead, dim_feedforward)
    tgt = jax.random.normal(k_tgt, (Lt, B, d_model), jnp.float32)
    memory = jax.random.normal(k_mem, (Lm, B, d_model), jnp.float32)

    layer = jax.jit(functools.partial(mod_rztx_decoder_layer,
                                      nhead=nhead, activation="relu"))

    # 1) With the reference init (resweight = resweight_src = 0) the layer is the
    #    identity on tgt — exact correctness check of the residual plumbing.
    out0, attn_w0 = layer(params, tgt, memory)
    jax.block_until_ready(out0)
    assert out0.shape == (Lt, B, d_model)
    assert attn_w0.shape == (B, Lt, Lm)
    assert bool(jnp.allclose(out0, tgt, atol=1e-6))

    # 2) Non-zero ReZero gates (as after training) exercise all three branches.
    params = dict(params,
                  resweight=jnp.asarray(0.5, jnp.float32),
                  resweight_src=jnp.asarray(0.25, jnp.float32))
    out, attn_w = layer(params, tgt, memory)
    jax.block_until_ready(out)
    jax.block_until_ready(attn_w)

    assert out.shape == (Lt, B, d_model)
    assert attn_w.shape == (B, Lt, Lm)
    assert bool(jnp.all(jnp.isfinite(out)))
    assert bool(jnp.all(jnp.isfinite(attn_w)))
    # softmax uses pl.reciprocal(approx=True) (EUP), so allow ~1e-3 relative slack.
    assert bool(jnp.allclose(jnp.sum(attn_w, axis=-1), 1.0, atol=5e-3))
    print("KERNEL_OK")
</pallas_src>

<mosaic_0001>
module attributes {stable_mosaic.version = 11 : i64} {
  func.func @_linear_kernel(%arg0: i32, %arg1: i32, %arg2: memref<16x256xf32, #tpu.memory_space<vmem>>, %arg3: memref<256x256xbf16, #tpu.memory_space<vmem>>, %arg4: memref<1x256xf32, #tpu.memory_space<vmem>>, %arg5: memref<16x256xbf16, #tpu.memory_space<vmem>>) attributes {dimension_semantics = [#tpu.dimension_semantics<parallel>, #tpu.dimension_semantics<parallel>], iteration_bounds = array<i64: 2, 3>, scalar_prefetch = 0 : i64, scratch_operands = 0 : i64, tpu.core_type = #tpu.core_type<tc>, window_params = [{transform_indices = @transform_0, window_bounds = array<i64: 16, 256>}, {transform_indices = @transform_1, window_bounds = array<i64: 256, 256>}, {transform_indices = @transform_2, window_bounds = array<i64: 1, 256>}, {transform_indices = @transform_3, window_bounds = array<i64: 16, 256>}]} {
    %c0 = arith.constant 0 : index
    %c0_0 = arith.constant 0 : index
    %0 = vector.load %arg2[%c0, %c0_0] : memref<16x256xf32, #tpu.memory_space<vmem>>, vector<16x256xf32>
    %1 = arith.truncf %0 : vector<16x256xf32> to vector<16x256xbf16>
    %c0_1 = arith.constant 0 : index
    %c0_2 = arith.constant 0 : index
    %2 = vector.load %arg3[%c0_1, %c0_2] : memref<256x256xbf16, #tpu.memory_space<vmem>>, vector<256x256xbf16>
    %cst = arith.constant dense<0.000000e+00> : vector<16x256xf32>
    %3 = tpu.matmul %1, %2, %cst {dimension_numbers = #tpu.dot_dimension_numbers<[1], [0], [0], [1], [0, 0, 1, 1], [], []>} : vector<16x256xbf16>, vector<256x256xbf16>, vector<16x256xf32> -> vector<16x256xf32>
    %c0_3 = arith.constant 0 : index
    %c0_4 = arith.constant 0 : index
    %4 = vector.load %arg4[%c0_3, %c0_4] : memref<1x256xf32, #tpu.memory_space<vmem>>, vector<1x256xf32>
    %5 = vector.broadcast %4 : vector<1x256xf32> to vector<16x256xf32>
    %6 = arith.addf %3, %5 : vector<16x256xf32>
    %7 = arith.truncf %6 : vector<16x256xf32> to vector<16x256xbf16>
    %c0_5 = arith.constant 0 : index
    %c0_6 = arith.constant 0 : index
    %8 = vector.load %arg5[%c0_5, %c0_6] : memref<16x256xbf16, #tpu.memory_space<vmem>>, vector<16x256xbf16>
    tpu.vector_store %arg5[%c0_5, %c0_6], %7 {strides = array<i32>} : memref<16x256xbf16, #tpu.memory_space<vmem>>, vector<16x256xbf16>,
    return
  }
  func.func @transform_0(%arg0: i32, %arg1: i32) -> (i32, i32) {
    %c0_i32 = arith.constant 0 : i32
    %c0_i32_0 = arith.constant 0 : i32
    return %arg0, %c0_i32 : i32, i32
  }
  func.func @transform_1(%arg0: i32, %arg1: i32) -> (i32, i32) {
    %c0_i32 = arith.constant 0 : i32
    %c0_i32_0 = arith.constant 0 : i32
    return %c0_i32, %arg1 : i32, i32
  }
  func.func @transform_2(%arg0: i32, %arg1: i32) -> (i32, i32) {
    %c0_i32 = arith.constant 0 : i32
    %c0_i32_0 = arith.constant 0 : i32
    return %c0_i32, %arg1 : i32, i32
  }
  func.func @transform_3(%arg0: i32, %arg1: i32) -> (i32, i32) {
    %c0_i32 = arith.constant 0 : i32
    return %arg0, %arg1 : i32, i32
  }
}

module attributes {stable_mosaic.version = 11 : i64} {
  func.func @kernel(%arg0: i32, %arg1: memref<1x2x16x128xbf16, #tpu.memory_space<vmem>>, %arg2: memref<1x2x128x128xbf16, #tpu.memory_space<vmem>>, %arg3: memref<1x2x128x128xbf16, #tpu.memory_space<vmem>>, %arg4: memref<1x16x128xf32, #tpu.memory_space<vmem>>, %arg5: memref<1x2x16x128xbf16, #tpu.memory_space<vmem>>) attributes {dimension_semantics = [#tpu.dimension_semantics<parallel>], iteration_bounds = array<i64: 2>, scalar_prefetch = 0 : i64, scratch_operands = 0 : i64, tpu.core_type = #tpu.core_type<tc>, window_params = [{transform_indices = @transform_0, window_bounds = array<i64: 1, 2, 16, 128>}, {transform_indices = @transform_1, window_bounds = array<i64: 1, 2, 128, 128>}, {transform_indices = @transform_2, window_bounds = array<i64: 1, 2, 128, 128>}, {transform_indices = @transform_3, window_bounds = array<i64: 1, 16, 128>}, {transform_indices = @transform_4, window_bounds = array<i64: 1, 2, 16, 128>}]} {
    %c0 = arith.constant 0 : index
    %c0_0 = arith.constant 0 : index
    %c0_1 = arith.constant 0 : index
    %c0_2 = arith.constant 0 : index
    %0 = vector.load %arg1[%c0, %c0_0, %c0_1, %c0_2] : memref<1x2x16x128xbf16, #tpu.memory_space<vmem>>, vector<1x2x16x128xbf16>
    %1 = vector.shape_cast %0 : vector<1x2x16x128xbf16> to vector<2x16x128xbf16>
    %c0_3 = arith.constant 0 : index
    %c0_4 = arith.constant 0 : index
    %c0_5 = arith.constant 0 : index
    %c0_6 = arith.constant 0 : index
    %2 = vector.load %arg2[%c0_3, %c0_4, %c0_5, %c0_6] : memref<1x2x128x128xbf16, #tpu.memory_space<vmem>>, vector<1x2x128x128xbf16>
    %3 = vector.shape_cast %2 : vector<1x2x128x128xbf16> to vector<2x128x128xbf16>
    "tpu.trace_start"() <{level = 10 : i32, message = "hqd,hdk->hqk"}> : () -> ()
    %cst = arith.constant dense<0.000000e+00> : vector<2x16x128xf32>
    %4 = tpu.matmul %1, %3, %cst {dimension_numbers = #tpu.dot_dimension_numbers<[2], [1], [1], [2], [0, 0, 0, 1, 1, 2], [0], [0]>} : vector<2x16x128xbf16>, vector<2x128x128xbf16>, vector<2x16x128xf32> -> vector<2x16x128xf32>
    "tpu.trace_stop"() : () -> ()
    %cst_7 = arith.constant 0.0883883461 : f32
    %5 = vector.broadcast %cst_7 : f32 to vector<2x16x128xf32>
    %6 = arith.mulf %4, %5 : vector<2x16x128xf32>
    %c0_8 = arith.constant 0 : index
    %c0_9 = arith.constant 0 : index
    %c0_10 = arith.constant 0 : index
    %7 = vector.load %arg4[%c0_8, %c0_9, %c0_10] : memref<1x16x128xf32, #tpu.memory_space<vmem>>, vector<1x16x128xf32>
    %8 = vector.broadcast %7 : vector<1x16x128xf32> to vector<2x16x128xf32>
    %9 = arith.addf %6, %8 : vector<2x16x128xf32>
    %cst_11 = arith.constant dense<0xFF800000> : vector<2x16xf32>
    %10 = vector.multi_reduction <maximumf>, %9, %cst_11 [2] : vector<2x16x128xf32> to vector<2x16xf32>
    %11 = vector.shape_cast %10 : vector<2x16xf32> to vector<2x16x1xf32>
    %12 = vector.broadcast %11 : vector<2x16x1xf32> to vector<2x16x128xf32>
    %13 = arith.subf %9, %12 : vector<2x16x128xf32>
    %14 = math.exp %13 : vector<2x16x128xf32>
    %cst_12 = arith.constant dense<0.000000e+00> : vector<2x16xf32>
    %15 = vector.multi_reduction <add>, %14, %cst_12 [2] : vector<2x16x128xf32> to vector<2x16xf32>
    %16 = vector.shape_cast %15 : vector<2x16xf32> to vector<2x16x1xf32>
    %17 = tpu.reciprocal %16 {approx = true} : vector<2x16x1xf32> -> vector<2x16x1xf32>
    %18 = vector.broadcast %17 : vector<2x16x1xf32> to vector<2x16x128xf32>
    %19 = arith.mulf %14, %18 : vector<2x16x128xf32>
    %20 = arith.truncf %19 : vector<2x16x128xf32> to vector<2x16x128xbf16>
    %c0_13 = arith.constant 0 : index
    %c0_14 = arith.constant 0 : index
    %c0_15 = arith.constant 0 : index
    %c0_16 = arith.constant 0 : index
    %21 = vector.load %arg3[%c0_13, %c0_14, %c0_15, %c0_16] : memref<1x2x128x128xbf16, #tpu.memory_space<vmem>>, vector<1x2x128x128xbf16>
    %22 = vector.shape_cast %21 : vector<1x2x128x128xbf16> to vector<2x128x128xbf16>
    "tpu.trace_start"() <{level = 10 : i32, message = "hqk,hkd->hqd"}> : () -> ()
    %cst_17 = arith.constant dense<0.000000e+00> : vector<2x16x128xf32>
    %23 = tpu.matmul %20, %22, %cst_17 {dimension_numbers = #tpu.dot_dimension_numbers<[2], [1], [1], [2], [0, 0, 0, 1, 1, 2], [0], [0]>} : vector<2x16x128xbf16>, vector<2x128x128xbf16>, vector<2x16x128xf32> -> vector<2x16x128xf32>
    "tpu.trace_stop"() : () -> ()
    %24 = arith.truncf %23 : vector<2x16x128xf32> to vector<2x16x128xbf16>
    %c0_18 = arith.constant 0 : index
    %c0_19 = arith.constant 0 : index
    %c0_20 = arith.constant 0 : index
    %c0_21 = arith.constant 0 : index
    %25 = vector.load %arg5[%c0_18, %c0_19, %c0_20, %c0_21] : memref<1x2x16x128xbf16, #tpu.memory_space<vmem>>, vector<1x2x16x128xbf16>
    %26 = vector.shape_cast %25 : vector<1x2x16x128xbf16> to vector<2x16x128xbf16>
    %27 = vector.shape_cast %24 : vector<2x16x128xbf16> to vector<1x2x16x128xbf16>
    tpu.vector_store %arg5[%c0_18, %c0_19, %c0_20, %c0_21], %27 {strides = array<i32>} : memref<1x2x16x128xbf16, #tpu.memory_space<vmem>>, vector<1x2x16x128xbf16>,
    return
  }
  func.func @transform_0(%arg0: i32) -> (i32, i32, i32, i32) {
    %c0_i32 = arith.constant 0 : i32
    %c0_i32_0 = arith.constant 0 : i32
    %c0_i32_1 = arith.constant 0 : i32
    %c0_i32_2 = arith.constant 0 : i32
    return %arg0, %c0_i32, %c0_i32_0, %c0_i32_1 : i32, i32, i32, i32
  }
  func.func @transform_1(%arg0: i32) -> (i32, i32, i32, i32) {
    %c0_i32 = arith.constant 0 : i32
    %c0_i32_0 = arith.constant 0 : i32
    %c0_i32_1 = arith.constant 0 : i32
    %c0_i32_2 = arith.constant 0 : i32
    return %arg0, %c0_i32, %c0_i32_0, %c0_i32_1 : i32, i32, i32, i32
  }
  func.func @transform_2(%arg0: i32) -> (i32, i32, i32, i32) {
    %c0_i32 = arith.constant 0 : i32
    %c0_i32_0 = arith.constant 0 : i32
    %c0_i32_1 = arith.constant 0 : i32
    %c0_i32_2 = arith.constant 0 : i32
    return %arg0, %c0_i32, %c0_i32_0, %c0_i32_1 : i32, i32, i32, i32
  }
  func.func @transform_3(%arg0: i32) -> (i32, i32, i32) {
    %c0_i32 = arith.constant 0 : i32
    %c0_i32_0 = arith.constant 0 : i32
    %c0_i32_1 = arith.constant 0 : i32
    return %arg0, %c0_i32, %c0_i32_0 : i32, i32, i32
  }
  func.func @transform_4(%arg0: i32) -> (i32, i32, i32, i32) {
    %c0_i32 = arith.constant 0 : i32
    %c0_i32_0 = arith.constant 0 : i32
    %c0_i32_1 = arith.constant 0 : i32
    %c0_i32_2 = arith.constant 0 : i32
    return %arg0, %c0_i32, %c0_i32_0, %c0_i32_1 : i32, i32, i32, i32
  }
}

module attributes {stable_mosaic.version = 11 : i64} {
  func.func @_linear_res_kernel(%arg0: i32, %arg1: i32, %arg2: memref<16x256xbf16, #tpu.memory_space<vmem>>, %arg3: memref<256x256xbf16, #tpu.memory_space<vmem>>, %arg4: memref<1x256xf32, #tpu.memory_space<vmem>>, %arg5: memref<16x256xf32, #tpu.memory_space<vmem>>, %arg6: memref<1x1xf32, #tpu.memory_space<smem>>, %arg7: memref<16x256xf32, #tpu.memory_space<vmem>>) attributes {dimension_semantics = [#tpu.dimension_semantics<parallel>, #tpu.dimension_semantics<parallel>], iteration_bounds = array<i64: 2, 1>, scalar_prefetch = 0 : i64, scratch_operands = 0 : i64, tpu.core_type = #tpu.core_type<tc>, window_params = [{transform_indices = @transform_0, window_bounds = array<i64: 16, 256>}, {transform_indices = @transform_1, window_bounds = array<i64: 256, 256>}, {transform_indices = @transform_2, window_bounds = array<i64: 1, 256>}, {transform_indices = @transform_3, window_bounds = array<i64: 16, 256>}, {transform_indices = @transform_4, window_bounds = array<i64: 1, 1>}, {transform_indices = @transform_5, window_bounds = array<i64: 16, 256>}]} {
    %c0 = arith.constant 0 : index
    %c0_0 = arith.constant 0 : index
    %0 = vector.load %arg2[%c0, %c0_0] : memref<16x256xbf16, #tpu.memory_space<vmem>>, vector<16x256xbf16>
    %c0_1 = arith.constant 0 : index
    %c0_2 = arith.constant 0 : index
    %1 = vector.load %arg3[%c0_1, %c0_2] : memref<256x256xbf16, #tpu.memory_space<vmem>>, vector<256x256xbf16>
    %cst = arith.constant dense<0.000000e+00> : vector<16x256xf32>
    %2 = tpu.matmul %0, %1, %cst {dimension_numbers = #tpu.dot_dimension_numbers<[1], [0], [0], [1], [0, 0, 1, 1], [], []>} : vector<16x256xbf16>, vector<256x256xbf16>, vector<16x256xf32> -> vector<16x256xf32>
    %c0_3 = arith.constant 0 : index
    %c0_4 = arith.constant 0 : index
    %3 = vector.load %arg4[%c0_3, %c0_4] : memref<1x256xf32, #tpu.memory_space<vmem>>, vector<1x256xf32>
    %4 = vector.broadcast %3 : vector<1x256xf32> to vector<16x256xf32>
    %5 = arith.addf %2, %4 : vector<16x256xf32>
    %c0_5 = arith.constant 0 : index
    %c0_6 = arith.constant 0 : index
    %6 = vector.load %arg5[%c0_5, %c0_6] : memref<16x256xf32, #tpu.memory_space<vmem>>, vector<16x256xf32>
    %c0_7 = arith.constant 0 : index
    %c0_8 = arith.constant 0 : index
    %7 = memref.load %arg6[%c0_7, %c0_8] : memref<1x1xf32, #tpu.memory_space<smem>>
    %8 = vector.broadcast %7 : f32 to vector<16x256xf32>
    %9 = arith.mulf %8, %5 : vector<16x256xf32>
    %10 = arith.addf %6, %9 : vector<16x256xf32>
    %c0_9 = arith.constant 0 : index
    %c0_10 = arith.constant 0 : index
    %11 = vector.load %arg7[%c0_9, %c0_10] : memref<16x256xf32, #tpu.memory_space<vmem>>, vector<16x256xf32>
    tpu.vector_store %arg7[%c0_9, %c0_10], %10 {strides = array<i32>} : memref<16x256xf32, #tpu.memory_space<vmem>>, vector<16x256xf32>,
    return
  }
  func.func @transform_0(%arg0: i32, %arg1: i32) -> (i32, i32) {
    %c0_i32 = arith.constant 0 : i32
    %c0_i32_0 = arith.constant 0 : i32
    return %arg0, %c0_i32 : i32, i32
  }
  func.func @transform_1(%arg0: i32, %arg1: i32) -> (i32, i32) {
    %c0_i32 = arith.constant 0 : i32
    %c0_i32_0 = arith.constant 0 : i32
    return %c0_i32, %arg1 : i32, i32
  }
  func.func @transform_2(%arg0: i32, %arg1: i32) -> (i32, i32) {
    %c0_i32 = arith.constant 0 : i32
    %c0_i32_0 = arith.constant 0 : i32
    return %c0_i32, %arg1 : i32, i32
  }
  func.func @transform_3(%arg0: i32, %arg1: i32) -> (i32, i32) {
    %c0_i32 = arith.constant 0 : i32
    return %arg0, %arg1 : i32, i32
  }
  func.func @transform_4(%arg0: i32, %arg1: i32) -> (i32, i32) {
    %c0_i32 = arith.constant 0 : i32
    %c0_i32_0 = arith.constant 0 : i32
    %c0_i32_1 = arith.constant 0 : i32
    return %c0_i32, %c0_i32_0 : i32, i32
  }
  func.func @transform_5(%arg0: i32, %arg1: i32) -> (i32, i32) {
    %c0_i32 = arith.constant 0 : i32
    return %arg0, %arg1 : i32, i32
  }
}

module attributes {stable_mosaic.version = 11 : i64} {
  func.func @_linear_kernel(%arg0: i32, %arg1: i32, %arg2: memref<16x256xf32, #tpu.memory_space<vmem>>, %arg3: memref<256x256xbf16, #tpu.memory_space<vmem>>, %arg4: memref<1x256xf32, #tpu.memory_space<vmem>>, %arg5: memref<16x256xbf16, #tpu.memory_space<vmem>>) attributes {dimension_semantics = [#tpu.dimension_semantics<parallel>, #tpu.dimension_semantics<parallel>], iteration_bounds = array<i64: 2, 1>, scalar_prefetch = 0 : i64, scratch_operands = 0 : i64, tpu.core_type = #tpu.core_type<tc>, window_params = [{transform_indices = @transform_0, window_bounds = array<i64: 16, 256>}, {transform_indices = @transform_1, window_bounds = array<i64: 256, 256>}, {transform_indices = @transform_2, window_bounds = array<i64: 1, 256>}, {transform_indices = @transform_3, window_bounds = array<i64: 16, 256>}]} {
    %c0 = arith.constant 0 : index
    %c0_0 = arith.constant 0 : index
    %0 = vector.load %arg2[%c0, %c0_0] : memref<16x256xf32, #tpu.memory_space<vmem>>, vector<16x256xf32>
    %1 = arith.truncf %0 : vector<16x256xf32> to vector<16x256xbf16>
    %c0_1 = arith.constant 0 : index
    %c0_2 = arith.constant 0 : index
    %2 = vector.load %arg3[%c0_1, %c0_2] : memref<256x256xbf16, #tpu.memory_space<vmem>>, vector<256x256xbf16>
    %cst = arith.constant dense<0.000000e+00> : vector<16x256xf32>
    %3 = tpu.matmul %1, %2, %cst {dimension_numbers = #tpu.dot_dimension_numbers<[1], [0], [0], [1], [0, 0, 1, 1], [], []>} : vector<16x256xbf16>, vector<256x256xbf16>, vector<16x256xf32> -> vector<16x256xf32>
    %c0_3 = arith.constant 0 : index
    %c0_4 = arith.constant 0 : index
    %4 = vector.load %arg4[%c0_3, %c0_4] : memref<1x256xf32, #tpu.memory_space<vmem>>, vector<1x256xf32>
    %5 = vector.broadcast %4 : vector<1x256xf32> to vector<16x256xf32>
    %6 = arith.addf %3, %5 : vector<16x256xf32>
    %7 = arith.truncf %6 : vector<16x256xf32> to vector<16x256xbf16>
    %c0_5 = arith.constant 0 : index
    %c0_6 = arith.constant 0 : index
    %8 = vector.load %arg5[%c0_5, %c0_6] : memref<16x256xbf16, #tpu.memory_space<vmem>>, vector<16x256xbf16>
    tpu.vector_store %arg5[%c0_5, %c0_6], %7 {strides = array<i32>} : memref<16x256xbf16, #tpu.memory_space<vmem>>, vector<16x256xbf16>,
    return
  }
  func.func @transform_0(%arg0: i32, %arg1: i32) -> (i32, i32) {
    %c0_i32 = arith.constant 0 : i32
    %c0_i32_0 = arith.constant 0 : i32
    return %arg0, %c0_i32 : i32, i32
  }
  func.func @transform_1(%arg0: i32, %arg1: i32) -> (i32, i32) {
    %c0_i32 = arith.constant 0 : i32
    %c0_i32_0 = arith.constant 0 : i32
    return %c0_i32, %arg1 : i32, i32
  }
  func.func @transform_2(%arg0: i32, %arg1: i32) -> (i32, i32) {
    %c0_i32 = arith.constant 0 : i32
    %c0_i32_0 = arith.constant 0 : i32
    return %c0_i32, %arg1 : i32, i32
  }
  func.func @transform_3(%arg0: i32, %arg1: i32) -> (i32, i32) {
    %c0_i32 = arith.constant 0 : i32
    return %arg0, %arg1 : i32, i32
  }
}

module attributes {stable_mosaic.version = 11 : i64} {
  func.func @_linear_kernel(%arg0: i32, %arg1: i32, %arg2: memref<16x256xf32, #tpu.memory_space<vmem>>, %arg3: memref<256x256xbf16, #tpu.memory_space<vmem>>, %arg4: memref<1x256xf32, #tpu.memory_space<vmem>>, %arg5: memref<16x256xbf16, #tpu.memory_space<vmem>>) attributes {dimension_semantics = [#tpu.dimension_semantics<parallel>, #tpu.dimension_semantics<parallel>], iteration_bounds = array<i64: 3, 2>, scalar_prefetch = 0 : i64, scratch_operands = 0 : i64, tpu.core_type = #tpu.core_type<tc>, window_params = [{transform_indices = @transform_0, window_bounds = array<i64: 16, 256>}, {transform_indices = @transform_1, window_bounds = array<i64: 256, 256>}, {transform_indices = @transform_2, window_bounds = array<i64: 1, 256>}, {transform_indices = @transform_3, window_bounds = array<i64: 16, 256>}]} {
    %c0 = arith.constant 0 : index
    %c0_0 = arith.constant 0 : index
    %0 = vector.load %arg2[%c0, %c0_0] : memref<16x256xf32, #tpu.memory_space<vmem>>, vector<16x256xf32>
    %1 = arith.truncf %0 : vector<16x256xf32> to vector<16x256xbf16>
    %c0_1 = arith.constant 0 : index
    %c0_2 = arith.constant 0 : index
    %2 = vector.load %arg3[%c0_1, %c0_2] : memref<256x256xbf16, #tpu.memory_space<vmem>>, vector<256x256xbf16>
    %cst = arith.constant dense<0.000000e+00> : vector<16x256xf32>
    %3 = tpu.matmul %1, %2, %cst {dimension_numbers = #tpu.dot_dimension_numbers<[1], [0], [0], [1], [0, 0, 1, 1], [], []>} : vector<16x256xbf16>, vector<256x256xbf16>, vector<16x256xf32> -> vector<16x256xf32>
    %c0_3 = arith.constant 0 : index
    %c0_4 = arith.constant 0 : index
    %4 = vector.load %arg4[%c0_3, %c0_4] : memref<1x256xf32, #tpu.memory_space<vmem>>, vector<1x256xf32>
    %5 = vector.broadcast %4 : vector<1x256xf32> to vector<16x256xf32>
    %6 = arith.addf %3, %5 : vector<16x256xf32>
    %7 = arith.truncf %6 : vector<16x256xf32> to vector<16x256xbf16>
    %c0_5 = arith.constant 0 : index
    %c0_6 = arith.constant 0 : index
    %8 = vector.load %arg5[%c0_5, %c0_6] : memref<16x256xbf16, #tpu.memory_space<vmem>>, vector<16x256xbf16>
    tpu.vector_store %arg5[%c0_5, %c0_6], %7 {strides = array<i32>} : memref<16x256xbf16, #tpu.memory_space<vmem>>, vector<16x256xbf16>,
    return
  }
  func.func @transform_0(%arg0: i32, %arg1: i32) -> (i32, i32) {
    %c0_i32 = arith.constant 0 : i32
    %c0_i32_0 = arith.constant 0 : i32
    return %arg0, %c0_i32 : i32, i32
  }
  func.func @transform_1(%arg0: i32, %arg1: i32) -> (i32, i32) {
    %c0_i32 = arith.constant 0 : i32
    %c0_i32_0 = arith.constant 0 : i32
    return %c0_i32, %arg1 : i32, i32
  }
  func.func @transform_2(%arg0: i32, %arg1: i32) -> (i32, i32) {
    %c0_i32 = arith.constant 0 : i32
    %c0_i32_0 = arith.constant 0 : i32
    return %c0_i32, %arg1 : i32, i32
  }
  func.func @transform_3(%arg0: i32, %arg1: i32) -> (i32, i32) {
    %c0_i32 = arith.constant 0 : i32
    return %arg0, %arg1 : i32, i32
  }
}

module attributes {stable_mosaic.version = 11 : i64} {
  func.func @kernel(%arg0: i32, %arg1: memref<1x2x16x128xbf16, #tpu.memory_space<vmem>>, %arg2: memref<1x2x128x128xbf16, #tpu.memory_space<vmem>>, %arg3: memref<1x2x128x128xbf16, #tpu.memory_space<vmem>>, %arg4: memref<1x16x128xf32, #tpu.memory_space<vmem>>, %arg5: memref<1x2x16x128xbf16, #tpu.memory_space<vmem>>, %arg6: memref<1x16x128xf32, #tpu.memory_space<vmem>>) attributes {dimension_semantics = [#tpu.dimension_semantics<parallel>], iteration_bounds = array<i64: 2>, scalar_prefetch = 0 : i64, scratch_operands = 0 : i64, tpu.core_type = #tpu.core_type<tc>, window_params = [{transform_indices = @transform_0, window_bounds = array<i64: 1, 2, 16, 128>}, {transform_indices = @transform_1, window_bounds = array<i64: 1, 2, 128, 128>}, {transform_indices = @transform_2, window_bounds = array<i64: 1, 2, 128, 128>}, {transform_indices = @transform_3, window_bounds = array<i64: 1, 16, 128>}, {transform_indices = @transform_4, window_bounds = array<i64: 1, 2, 16, 128>}, {transform_indices = @transform_5, window_bounds = array<i64: 1, 16, 128>}]} {
    %c0 = arith.constant 0 : index
    %c0_0 = arith.constant 0 : index
    %c0_1 = arith.constant 0 : index
    %c0_2 = arith.constant 0 : index
    %0 = vector.load %arg1[%c0, %c0_0, %c0_1, %c0_2] : memref<1x2x16x128xbf16, #tpu.memory_space<vmem>>, vector<1x2x16x128xbf16>
    %1 = vector.shape_cast %0 : vector<1x2x16x128xbf16> to vector<2x16x128xbf16>
    %c0_3 = arith.constant 0 : index
    %c0_4 = arith.constant 0 : index
    %c0_5 = arith.constant 0 : index
    %c0_6 = arith.constant 0 : index
    %2 = vector.load %arg2[%c0_3, %c0_4, %c0_5, %c0_6] : memref<1x2x128x128xbf16, #tpu.memory_space<vmem>>, vector<1x2x128x128xbf16>
    %3 = vector.shape_cast %2 : vector<1x2x128x128xbf16> to vector<2x128x128xbf16>
    "tpu.trace_start"() <{level = 10 : i32, message = "hqd,hdk->hqk"}> : () -> ()
    %cst = arith.constant dense<0.000000e+00> : vector<2x16x128xf32>
    %4 = tpu.matmul %1, %3, %cst {dimension_numbers = #tpu.dot_dimension_numbers<[2], [1], [1], [2], [0, 0, 0, 1, 1, 2], [0], [0]>} : vector<2x16x128xbf16>, vector<2x128x128xbf16>, vector<2x16x128xf32> -> vector<2x16x128xf32>
    "tpu.trace_stop"() : () -> ()
    %cst_7 = arith.constant 0.0883883461 : f32
    %5 = vector.broadcast %cst_7 : f32 to vector<2x16x128xf32>
    %6 = arith.mulf %4, %5 : vector<2x16x128xf32>
    %c0_8 = arith.constant 0 : index
    %c0_9 = arith.constant 0 : index
    %c0_10 = arith.constant 0 : index
    %7 = vector.load %arg4[%c0_8, %c0_9, %c0_10] : memref<1x16x128xf32, #tpu.memory_space<vmem>>, vector<1x16x128xf32>
    %8 = vector.broadcast %7 : vector<1x16x128xf32> to vector<2x16x128xf32>
    %9 = arith.addf %6, %8 : vector<2x16x128xf32>
    %cst_11 = arith.constant dense<0xFF800000> : vector<2x16xf32>
    %10 = vector.multi_reduction <maximumf>, %9, %cst_11 [2] : vector<2x16x128xf32> to vector<2x16xf32>
    %11 = vector.shape_cast %10 : vector<2x16xf32> to vector<2x16x1xf32>
    %12 = vector.broadcast %11 : vector<2x16x1xf32> to vector<2x16x128xf32>
    %13 = arith.subf %9, %12 : vector<2x16x128xf32>
    %14 = math.exp %13 : vector<2x16x128xf32>
    %cst_12 = arith.constant dense<0.000000e+00> : vector<2x16xf32>
    %15 = vector.multi_reduction <add>, %14, %cst_12 [2] : vector<2x16x128xf32> to vector<2x16xf32>
    %16 = vector.shape_cast %15 : vector<2x16xf32> to vector<2x16x1xf32>
    %17 = tpu.reciprocal %16 {approx = true} : vector<2x16x1xf32> -> vector<2x16x1xf32>
    %18 = vector.broadcast %17 : vector<2x16x1xf32> to vector<2x16x128xf32>
    %19 = arith.mulf %14, %18 : vector<2x16x128xf32>
    %20 = arith.truncf %19 : vector<2x16x128xf32> to vector<2x16x128xbf16>
    %c0_13 = arith.constant 0 : index
    %c0_14 = arith.constant 0 : index
    %c0_15 = arith.constant 0 : index
    %c0_16 = arith.constant 0 : index
    %21 = vector.load %arg3[%c0_13, %c0_14, %c0_15, %c0_16] : memref<1x2x128x128xbf16, #tpu.memory_space<vmem>>, vector<1x2x128x128xbf16>
    %22 = vector.shape_cast %21 : vector<1x2x128x128xbf16> to vector<2x128x128xbf16>
    "tpu.trace_start"() <{level = 10 : i32, message = "hqk,hkd->hqd"}> : () -> ()
    %cst_17 = arith.constant dense<0.000000e+00> : vector<2x16x128xf32>
    %23 = tpu.matmul %20, %22, %cst_17 {dimension_numbers = #tpu.dot_dimension_numbers<[2], [1], [1], [2], [0, 0, 0, 1, 1, 2], [0], [0]>} : vector<2x16x128xbf16>, vector<2x128x128xbf16>, vector<2x16x128xf32> -> vector<2x16x128xf32>
    "tpu.trace_stop"() : () -> ()
    %24 = arith.truncf %23 : vector<2x16x128xf32> to vector<2x16x128xbf16>
    %c0_18 = arith.constant 0 : index
    %c0_19 = arith.constant 0 : index
    %c0_20 = arith.constant 0 : index
    %c0_21 = arith.constant 0 : index
    %25 = vector.load %arg5[%c0_18, %c0_19, %c0_20, %c0_21] : memref<1x2x16x128xbf16, #tpu.memory_space<vmem>>, vector<1x2x16x128xbf16>
    %26 = vector.shape_cast %25 : vector<1x2x16x128xbf16> to vector<2x16x128xbf16>
    %27 = vector.shape_cast %24 : vector<2x16x128xbf16> to vector<1x2x16x128xbf16>
    tpu.vector_store %arg5[%c0_18, %c0_19, %c0_20, %c0_21], %27 {strides = array<i32>} : memref<1x2x16x128xbf16, #tpu.memory_space<vmem>>, vector<1x2x16x128xbf16>,
    %cst_22 = arith.constant dense<0.000000e+00> : vector<16x128xf32>
    %28 = vector.multi_reduction <add>, %19, %cst_22 [0] : vector<2x16x128xf32> to vector<16x128xf32>
    %cst_23 = arith.constant 2.000000e+00 : f32
    %29 = vector.broadcast %cst_23 : f32 to vector<16x128xf32>
    %30 = arith.divf %28, %29 : vector<16x128xf32>
    %c0_24 = arith.constant 0 : index
    %c0_25 = arith.constant 0 : index
    %c0_26 = arith.constant 0 : index
    %31 = vector.load %arg6[%c0_24, %c0_25, %c0_26] : memref<1x16x128xf32, #tpu.memory_space<vmem>>, vector<1x16x128xf32>
    %32 = vector.shape_cast %31 : vector<1x16x128xf32> to vector<16x128xf32>
    %33 = vector.shape_cast %30 : vector<16x128xf32> to vector<1x16x128xf32>
    tpu.vector_store %arg6[%c0_24, %c0_25, %c0_26], %33 {strides = array<i32>} : memref<1x16x128xf32, #tpu.memory_space<vmem>>, vector<1x16x128xf32>,
    return
  }
  func.func @transform_0(%arg0: i32) -> (i32, i32, i32, i32) {
    %c0_i32 = arith.constant 0 : i32
    %c0_i32_0 = arith.constant 0 : i32
    %c0_i32_1 = arith.constant 0 : i32
    %c0_i32_2 = arith.constant 0 : i32
    return %arg0, %c0_i32, %c0_i32_0, %c0_i32_1 : i32, i32, i32, i32
  }
  func.func @transform_1(%arg0: i32) -> (i32, i32, i32, i32) {
    %c0_i32 = arith.constant 0 : i32
    %c0_i32_0 = arith.constant 0 : i32
    %c0_i32_1 = arith.constant 0 : i32
    %c0_i32_2 = arith.constant 0 : i32
    return %arg0, %c0_i32, %c0_i32_0, %c0_i32_1 : i32, i32, i32, i32
  }
  func.func @transform_2(%arg0: i32) -> (i32, i32, i32, i32) {
    %c0_i32 = arith.constant 0 : i32
    %c0_i32_0 = arith.constant 0 : i32
    %c0_i32_1 = arith.constant 0 : i32
    %c0_i32_2 = arith.constant 0 : i32
    return %arg0, %c0_i32, %c0_i32_0, %c0_i32_1 : i32, i32, i32, i32
  }
  func.func @transform_3(%arg0: i32) -> (i32, i32, i32) {
    %c0_i32 = arith.constant 0 : i32
    %c0_i32_0 = arith.constant 0 : i32
    %c0_i32_1 = arith.constant 0 : i32
    return %arg0, %c0_i32, %c0_i32_0 : i32, i32, i32
  }
  func.func @transform_4(%arg0: i32) -> (i32, i32, i32, i32) {
    %c0_i32 = arith.constant 0 : i32
    %c0_i32_0 = arith.constant 0 : i32
    %c0_i32_1 = arith.constant 0 : i32
    %c0_i32_2 = arith.constant 0 : i32
    return %arg0, %c0_i32, %c0_i32_0, %c0_i32_1 : i32, i32, i32, i32
  }
  func.func @transform_5(%arg0: i32) -> (i32, i32, i32) {
    %c0_i32 = arith.constant 0 : i32
    %c0_i32_0 = arith.constant 0 : i32
    %c0_i32_1 = arith.constant 0 : i32
    return %arg0, %c0_i32, %c0_i32_0 : i32, i32, i32
  }
}

module attributes {stable_mosaic.version = 11 : i64} {
  func.func @kernel(%arg0: i32, %arg1: i32, %arg2: memref<16x256xf32, #tpu.memory_space<vmem>>, %arg3: memref<256x512xbf16, #tpu.memory_space<vmem>>, %arg4: memref<1x512xf32, #tpu.memory_space<vmem>>, %arg5: memref<512x256xbf16, #tpu.memory_space<vmem>>, %arg6: memref<1x256xf32, #tpu.memory_space<vmem>>, %arg7: memref<1x1xf32, #tpu.memory_space<smem>>, %arg8: memref<16x256xf32, #tpu.memory_space<vmem>>, %arg9: memref<16x256xf32, #tpu.memory_space<vmem>>) attributes {dimension_semantics = [#tpu.dimension_semantics<parallel>, #tpu.dimension_semantics<arbitrary>], iteration_bounds = array<i64: 2, 1>, scalar_prefetch = 0 : i64, scratch_operands = 1 : i64, tpu.core_type = #tpu.core_type<tc>, window_params = [{transform_indices = @transform_0, window_bounds = array<i64: 16, 256>}, {transform_indices = @transform_1, window_bounds = array<i64: 256, 512>}, {transform_indices = @transform_2, window_bounds = array<i64: 1, 512>}, {transform_indices = @transform_3, window_bounds = array<i64: 512, 256>}, {pipeline_mode = #tpu.pipeline_mode<synchronous>, transform_indices = @transform_4, window_bounds = array<i64: 1, 256>}, {transform_indices = @transform_5, window_bounds = array<i64: 1, 1>}, {transform_indices = @transform_6, window_bounds = array<i64: 16, 256>}]} {
    %c0_i32 = arith.constant 0 : i32
    %0 = arith.cmpi eq, %arg1, %c0_i32 : i32
    %1 = arith.extui %0 : i1 to i32
    %c0_i32_0 = arith.constant 0 : i32
    %2 = arith.cmpi ne, %1, %c0_i32_0 : i32
    scf.if %2 {
      %cst_16 = arith.constant 0.000000e+00 : f32
      %21 = vector.broadcast %cst_16 : f32 to vector<16x256xf32>
      %c0_17 = arith.constant 0 : index
      %c0_18 = arith.constant 0 : index
      %22 = vector.load %arg9[%c0_17, %c0_18] : memref<16x256xf32, #tpu.memory_space<vmem>>, vector<16x256xf32>
      tpu.vector_store %arg9[%c0_17, %c0_18], %21 {strides = array<i32>} : memref<16x256xf32, #tpu.memory_space<vmem>>, vector<16x256xf32>,
    } else {
    }
    %c0 = arith.constant 0 : index
    %c0_1 = arith.constant 0 : index
    %3 = vector.load %arg2[%c0, %c0_1] : memref<16x256xf32, #tpu.memory_space<vmem>>, vector<16x256xf32>
    %4 = arith.truncf %3 : vector<16x256xf32> to vector<16x256xbf16>
    %c0_2 = arith.constant 0 : index
    %c0_3 = arith.constant 0 : index
    %5 = vector.load %arg3[%c0_2, %c0_3] : memref<256x512xbf16, #tpu.memory_space<vmem>>, vector<256x512xbf16>
    %cst = arith.constant dense<0.000000e+00> : vector<16x512xf32>
    %6 = tpu.matmul %4, %5, %cst {dimension_numbers = #tpu.dot_dimension_numbers<[1], [0], [0], [1], [0, 0, 1, 1], [], []>} : vector<16x256xbf16>, vector<256x512xbf16>, vector<16x512xf32> -> vector<16x512xf32>
    %c0_4 = arith.constant 0 : index
    %c0_5 = arith.constant 0 : index
    %7 = vector.load %arg4[%c0_4, %c0_5] : memref<1x512xf32, #tpu.memory_space<vmem>>, vector<1x512xf32>
    %8 = vector.broadcast %7 : vector<1x512xf32> to vector<16x512xf32>
    %9 = arith.addf %6, %8 : vector<16x512xf32>
    %cst_6 = arith.constant 0.000000e+00 : f32
    %10 = vector.broadcast %cst_6 : f32 to vector<16x512xf32>
    %11 = arith.maximumf %9, %10 : vector<16x512xf32>
    %c0_7 = arith.constant 0 : index
    %c0_8 = arith.constant 0 : index
    %12 = vector.load %arg9[%c0_7, %c0_8] : memref<16x256xf32, #tpu.memory_space<vmem>>, vector<16x256xf32>
    %13 = arith.truncf %11 : vector<16x512xf32> to vector<16x512xbf16>
    %c0_9 = arith.constant 0 : index
    %c0_10 = arith.constant 0 : index
    %14 = vector.load %arg5[%c0_9, %c0_10] : memref<512x256xbf16, #tpu.memory_space<vmem>>, vector<512x256xbf16>
    %cst_11 = arith.constant dense<0.000000e+00> : vector<16x256xf32>
    %15 = tpu.matmul %13, %14, %cst_11 {dimension_numbers = #tpu.dot_dimension_numbers<[1], [0], [0], [1], [0, 0, 1, 1], [], []>} : vector<16x512xbf16>, vector<512x256xbf16>, vector<16x256xf32> -> vector<16x256xf32>
    %16 = arith.addf %12, %15 : vector<16x256xf32>
    %c0_12 = arith.constant 0 : index
    %c0_13 = arith.constant 0 : index
    %17 = vector.load %arg9[%c0_12, %c0_13] : memref<16x256xf32, #tpu.memory_space<vmem>>, vector<16x256xf32>
    tpu.vector_store %arg9[%c0_12, %c0_13], %16 {strides = array<i32>} : memref<16x256xf32, #tpu.memory_space<vmem>>, vector<16x256xf32>,
    %c0_i32_14 = arith.constant 0 : i32
    %18 = arith.cmpi eq, %arg1, %c0_i32_14 : i32
    %19 = arith.extui %18 : i1 to i32
    %c0_i32_15 = arith.constant 0 : i32
    %20 = arith.cmpi ne, %19, %c0_i32_15 : i32
    scf.if %20 {
      %c0_16 = arith.constant 0 : index
      %c0_17 = arith.constant 0 : index
      %21 = vector.load %arg2[%c0_16, %c0_17] : memref<16x256xf32, #tpu.memory_space<vmem>>, vector<16x256xf32>
      %c0_18 = arith.constant 0 : index
      %c0_19 = arith.constant 0 : index
      %22 = memref.load %arg7[%c0_18, %c0_19] : memref<1x1xf32, #tpu.memory_space<smem>>
      %c0_20 = arith.constant 0 : index
      %c0_21 = arith.constant 0 : index
      %23 = vector.load %arg9[%c0_20, %c0_21] : memref<16x256xf32, #tpu.memory_space<vmem>>, vector<16x256xf32>
      %c0_22 = arith.constant 0 : index
      %c0_23 = arith.constant 0 : index
      %24 = vector.load %arg6[%c0_22, %c0_23] : memref<1x256xf32, #tpu.memory_space<vmem>>, vector<1x256xf32>
      %25 = vector.broadcast %24 : vector<1x256xf32> to vector<16x256xf32>
      %26 = arith.addf %23, %25 : vector<16x256xf32>
      %27 = vector.broadcast %22 : f32 to vector<16x256xf32>
      %28 = arith.mulf %27, %26 : vector<16x256xf32>
      %29 = arith.addf %21, %28 : vector<16x256xf32>
      %c0_24 = arith.constant 0 : index
      %c0_25 = arith.constant 0 : index
      %30 = vector.load %arg8[%c0_24, %c0_25] : memref<16x256xf32, #tpu.memory_space<vmem>>, vector<16x256xf32>
      tpu.vector_store %arg8[%c0_24, %c0_25], %29 {strides = array<i32>} : memref<16x256xf32, #tpu.memory_space<vmem>>, vector<16x256xf32>,
    } else {
    }
    return
  }
  func.func @transform_0(%arg0: i32, %arg1: i32) -> (i32, i32) {
    %c0_i32 = arith.constant 0 : i32
    %c0_i32_0 = arith.constant 0 : i32
    return %arg0, %c0_i32 : i32, i32
  }
  func.func @transform_1(%arg0: i32, %arg1: i32) -> (i32, i32) {
    %c0_i32 = arith.constant 0 : i32
    %c0_i32_0 = arith.constant 0 : i32
    return %c0_i32, %arg1 : i32, i32
  }
  func.func @transform_2(%arg0: i32, %arg1: i32) -> (i32, i32) {
    %c0_i32 = arith.constant 0 : i32
    %c0_i32_0 = arith.constant 0 : i32
    return %c0_i32, %arg1 : i32, i32
  }
  func.func @transform_3(%arg0: i32, %arg1: i32) -> (i32, i32) {
    %c0_i32 = arith.constant 0 : i32
    %c0_i32_0 = arith.constant 0 : i32
    return %arg1, %c0_i32 : i32, i32
  }
  func.func @transform_4(%arg0: i32, %arg1: i32) -> (i32, i32) {
    %c0_i32 = arith.constant 0 : i32
    %c0_i32_0 = arith.constant 0 : i32
    %c0_i32_1 = arith.constant 0 : i32
    return %c0_i32, %c0_i32_0 : i32, i32
  }
  func.func @transform_5(%arg0: i32, %arg1: i32) -> (i32, i32) {
    %c0_i32 = arith.constant 0 : i32
    %c0_i32_0 = arith.constant 0 : i32
    %c0_i32_1 = arith.constant 0 : i32
    return %c0_i32, %c0_i32_0 : i32, i32
  }
  func.func @transform_6(%arg0: i32, %arg1: i32) -> (i32, i32) {
    %c0_i32 = arith.constant 0 : i32
    %c0_i32_0 = arith.constant 0 : i32
    return %arg0, %c0_i32 : i32, i32
  }
}

</mosaic_0001>

<llo_original>
// kernel: mod_rztx_decoder_layer.8
$region0: #{mod_rztx_decoder_layer.8}
  #allocation0 [shape = 'u32[]', space=smem, size = 0x4, offset = 0x4, fixed_abs, tag = 'smem constant byte address 0x4 - core index']
  #allocation1 [shape = 'u32[144,128]{1,0:T(1,128)}', space=vmem, size = 0x12000, scoped, tag = 'internal scratch']
  %s0 = inlined_call_operand.vmem [shape: f32[32,256], index: 0, kind: input, shape index: {}]
  %s1 = inlined_call_operand.hbm [shape: bf16[256,768], index: 1, kind: input, shape index: {}]
  %s2 = inlined_call_operand.vmem [shape: f32[1,768], index: 2, kind: input, shape index: {}]
  %s3 = inlined_call_operand.vmem [shape: bf16[32,768], index: 3, kind: output, shape index: {}]
  %s4 = sld [smem:[#allocation0]]
  $region83: #{mod_rztx_decoder_layer.8} parent=0
    _
  %s6 = ssub.s32 1, %s4
  %s7 = scalar_select 0, %s6, %s4
  $region1: #{mod_rztx_decoder_layer.8} parent=0
    #allocation2 [shape = 'u8[262144]{0}', space=vmem, size = 0x40000, scoped, tag = 'input window, operand 1']
    #allocation3 [shape = 's32[2]{0}', space=sflag, size = 0x8, scoped, tag = 'scoped memory for mod_rztx_decoder_layer.8']
    #allocation4 [shape = 'u8[16384]{0}', space=vmem, size = 0x4000, scoped, tag = 'output window, operand 0']
    %8 = vsyncpa [#allocation3], 0
    %s9 = scalar_lea.sflag [#allocation3], 1
    %10 = vsyncpa %s9, 0
    loop: start=0, step=1, limit=8
    $region2: #{mod_rztx_decoder_layer.8} parent=1 // loop_pre_header
      _
    $region3: #{mod_rztx_decoder_layer.8} parent=1 // loop_header
      %s12 = sphi 0, %s16
      %p13 = scmp.ge.s32.totalorder %s12, 8
      %s19 = sphi 0, %s31
      %s20 = sphi 0, %s27
      %s21 = sphi 0, %s19
      %s22 = sphi 0, %s20
      %s23 = sphi 0, %s21
      %s24 = sphi 0, %s22
      %s34 = sphi 0, %s36
      %s37 = sphi 0, %s34
      %s38 = sphi 0, %s37
      %s54 = sphi 0, %s38
      %s60 = sphi 0, %s62
      %s63 = sphi 0, %s60
      %s64 = sphi 0, %s63
      %s80 = sphi 0, %s64
      %s86 = sphi 0, %s88
      %s89 = sphi 0, %s86
      %s90 = sphi 0, %s89
      %s106 = sphi 0, %s90
      %s114 = sphi 0, %s116
      %s117 = sphi 0, %s114
      %s118 = sphi 0, %s117
      %s134 = sphi 0, %s118
    $region4: #{mod_rztx_decoder_layer.8} parent=1 // loop_header_branch
      %15 = sbr.rel (%p13) target = $region8
    $region5: #{mod_rztx_decoder_layer.8} parent=1 // loop_body
      %s17 = ssub.s32 %s12, 1
      %s18 = ssub.s32 %s12, 2
      %s25 = sadd.s32 1, %s20
      %p26 = scmp.ge.s32.totalorder %s25, 3
      %s27 = scalar_select %p26, 0, %s25
      %s28 = sadd.s32 1, %s19
      %s29 = scalar_select %p26, %s28, %s19
      %p30 = scmp.ge.s32.totalorder %s29, 2
      %s31 = scalar_select %p30, 0, %s29
      %s32 = ssub.s32 %s19, %s31
      %p33 = scmp.eq.s32.totalorder %s32, 0
      %s35 = sadd.s32 %s34, 1
      %s36 = scalar_select %p33, %s34, %s35
      %p39 = pneg %p33
      %p40 = scmp.eq.s32.totalorder %s12, 5
      %p41 = por %p39, %p40
      %p42 = scmp.ne.s32.totalorder %s34, %s37
      %p43 = scmp.eq.s32.totalorder %s12, 0
      %p44 = por %p42, %p43
      %p45 = scmp.ne.s32.totalorder %s34, %s37
      %p46 = scmp.eq.s32.totalorder %s17, 5
      %p47 = por %p45, %p46
      %p48 = scmp.ne.s32.totalorder %s37, %s38
      %p49 = scmp.eq.s32.totalorder %s17, 0
      %p50 = por %p48, %p49
      %p51 = scmp.ne.s32.totalorder %s37, %s38
      %p52 = scmp.eq.s32.totalorder %s18, 5
      %p53 = por %p51, %p52
      %p55 = scmp.ne.s32.totalorder %s38, %s54
      %p56 = scmp.eq.s32.totalorder %s18, 0
      %p57 = por %p55, %p56
      %s58 = ssub.s32 %s20, %s27
      %p59 = scmp.eq.s32.totalorder %s58, 0
      %s61 = sadd.s32 %s60, 1
      %s62 = scalar_select %p59, %s60, %s61
      %p65 = pneg %p59
      %p66 = scmp.eq.s32.totalorder %s12, 5
      %p67 = por %p65, %p66
      %p68 = scmp.ne.s32.totalorder %s60, %s63
      %p69 = scmp.eq.s32.totalorder %s12, 0
      %p70 = por %p68, %p69
      %p71 = scmp.ne.s32.totalorder %s60, %s63
      %p72 = scmp.eq.s32.totalorder %s17, 5
      %p73 = por %p71, %p72
      %p74 = scmp.ne.s32.totalorder %s63, %s64
      %p75 = scmp.eq.s32.totalorder %s17, 0
      %p76 = por %p74, %p75
      %p77 = scmp.ne.s32.totalorder %s63, %s64
      %p78 = scmp.eq.s32.totalorder %s18, 5
      %p79 = por %p77, %p78
      %p81 = scmp.ne.s32.totalorder %s64, %s80
      %p82 = scmp.eq.s32.totalorder %s18, 0
      %p83 = por %p81, %p82
      %s84 = ssub.s32 %s20, %s27
      %p85 = scmp.eq.s32.totalorder %s84, 0
      %s87 = sadd.s32 %s86, 1
      %s88 = scalar_select %p85, %s86, %s87
      %p91 = pneg %p85
      %p92 = scmp.eq.s32.totalorder %s12, 5
      %p93 = por %p91, %p92
      %p94 = scmp.ne.s32.totalorder %s86, %s89
      %p95 = scmp.eq.s32.totalorder %s12, 0
      %p96 = por %p94, %p95
      %p97 = scmp.ne.s32.totalorder %s86, %s89
      %p98 = scmp.eq.s32.totalorder %s17, 5
      %p99 = por %p97, %p98
      %p100 = scmp.ne.s32.totalorder %s89, %s90
      %p101 = scmp.eq.s32.totalorder %s17, 0
      %p102 = por %p100, %p101
      %p103 = scmp.ne.s32.totalorder %s89, %s90
      %p104 = scmp.eq.s32.totalorder %s18, 5
      %p105 = por %p103, %p104
      %p107 = scmp.ne.s32.totalorder %s90, %s106
      %p108 = scmp.eq.s32.totalorder %s18, 0
      %p109 = por %p107, %p108
      %s110 = ssub.s32 %s19, %s31
      %s111 = ssub.s32 %s20, %s27
      %s112 = sor.u32 %s110, %s111
      %p113 = scmp.eq.s32.totalorder %s112, 0
      %s115 = sadd.s32 %s114, 1
      %s116 = scalar_select %p113, %s114, %s115
      %p119 = pneg %p113
      %p120 = scmp.eq.s32.totalorder %s12, 5
      %p121 = por %p119, %p120
      %p122 = scmp.ne.s32.totalorder %s114, %s117
      %p123 = scmp.eq.s32.totalorder %s12, 0
      %p124 = por %p122, %p123
      %p125 = scmp.ne.s32.totalorder %s114, %s117
      %p126 = scmp.eq.s32.totalorder %s17, 5
      %p127 = por %p125, %p126
      %p128 = scmp.ne.s32.totalorder %s117, %s118
      %p129 = scmp.eq.s32.totalorder %s17, 0
      %p130 = por %p128, %p129
      %p131 = scmp.ne.s32.totalorder %s117, %s118
      %p132 = scmp.eq.s32.totalorder %s18, 5
      %p133 = por %p131, %p132
      %p135 = scmp.ne.s32.totalorder %s118, %s134
      %p136 = scmp.eq.s32.totalorder %s18, 0
      %p137 = por %p135, %p136
      %p138 = scmp.le.s32.totalorder 1, %s12
      %p139 = scmp.lt.s32.totalorder %s12, 7
      %p140 = pnand %p138, %p139
      %p141 = pneg %p140
      // Predicated region
      $region9: #{mod_rztx_decoder_layer.8} parent=5 // pred_check
        _
      $region10: #{mod_rztx_decoder_layer.8} parent=5 // pred_check_branch
        %143 = sbr.rel (%p140) target = $region12
      $region11: #{mod_rztx_decoder_layer.8} parent=5 // pred_region
        %s144 = ssub.s32 %s12, 1
      $region12: #{mod_rztx_decoder_layer.8} parent=5 // pred_fallthru
        _
      %p145 = scmp.lt.s32.totalorder %s12, 6
      // Predicated region
      $region13: #{mod_rztx_decoder_layer.8} parent=5 // pred_check
        %p146 = pneg %p145
      $region14: #{mod_rztx_decoder_layer.8} parent=5 // pred_check_branch
        %148 = sbr.rel (%p146) target = $region16
      $region15: #{mod_rztx_decoder_layer.8} parent=5 // pred_region
        // Predicated region
        $region17: #{mod_rztx_decoder_layer.8} parent=15 // pred_check
          %p149 = pneg %p44
        $region18: #{mod_rztx_decoder_layer.8} parent=15 // pred_check_branch
          %151 = sbr.rel (%p149) target = $region20
        $region19: #{mod_rztx_decoder_layer.8} parent=15 // pred_region
          %s152 = smul.u32 2, %s19
          %p153 = scmp.lt.s32.totalorder %s152, 3
          %s154 = scalar_select %p153, %s152, 3
          %s155 = smul.addr %s154, 2
          %s156 = smul.addr %s155, 8
          %s157 = scalar_lea.vmem %s0, %s156
          %s158 = smul.u32 2, %s19
        $region20: #{mod_rztx_decoder_layer.8} parent=15 // pred_fallthru
          _
        // Predicated region
        $region21: #{mod_rztx_decoder_layer.8} parent=15 // pred_check
          %p159 = pneg %p70
        $region22: #{mod_rztx_decoder_layer.8} parent=15 // pred_check_branch
          %161 = sbr.rel (%p159) target = $region24
        $region23: #{mod_rztx_decoder_layer.8} parent=15 // pred_region
          %s162 = sand.u32 %s60, 1
          %s163 = scalar_lea.sflag [#allocation3], %s162
          %s164 = sand.u32 %s60, 1
          %s165 = smul.addr %s164, 256
          %s166 = scalar_lea.vmem [#allocation2], %s165
          %s167 = smul.u32 2, %s20
          %s169 = ssub.s32 4096, 4096
          %170 = vsyncadd %s163, %s169
          %s171 = smul.addr %s167, 64
          %s172 = scalar_lea.hbm %s1, %s171
          %s173 = sshll.u32 %s166, 4
          %s174 = int_to_ptr.vmem [resolvable:$true] %s173
          %179 = dma.hbm_to_vmem [thread:$0]  %s172, 4096, %s174, %s163, 384, 128, 8
        $region24: #{mod_rztx_decoder_layer.8} parent=15 // pred_fallthru
          _
        // Predicated region
        $region25: #{mod_rztx_decoder_layer.8} parent=15 // pred_check
          %p180 = pneg %p96
        $region26: #{mod_rztx_decoder_layer.8} parent=15 // pred_check_branch
          %182 = sbr.rel (%p180) target = $region28
        $region27: #{mod_rztx_decoder_layer.8} parent=15 // pred_region
          %s183 = smul.u32 2, %s20
          %p184 = scmp.lt.s32.totalorder %s183, 5
          %s185 = scalar_select %p184, %s183, 5
          %s186 = scalar_lea.vmem %s2, %s185
          %s187 = smul.u32 2, %s20
        $region28: #{mod_rztx_decoder_layer.8} parent=15 // pred_fallthru
          _
      $region16: #{mod_rztx_decoder_layer.8} parent=5 // pred_fallthru
        _
      %p188 = scmp.le.s32.totalorder 1, %s12
      %p189 = scmp.lt.s32.totalorder %s12, 7
      %p190 = pnand %p188, %p189
      %p191 = pneg %p190
      // Predicated region
      $region29: #{mod_rztx_decoder_layer.8} parent=5 // pred_check
        _
      $region30: #{mod_rztx_decoder_layer.8} parent=5 // pred_check_branch
        %193 = sbr.rel (%p190) target = $region32
      $region31: #{mod_rztx_decoder_layer.8} parent=5 // pred_region
        %s194 = ssub.s32 %s12, 1
        %s195 = sand.u32 %s63, 1
        %s196 = scalar_lea.sflag [#allocation3], %s195
        %s197 = sand.u32 %s63, 1
        %s198 = smul.addr %s197, 256
        %s199 = scalar_lea.vmem [#allocation2], %s198
        // Predicated region
        $region33: #{mod_rztx_decoder_layer.8} parent=31 // pred_check
          %p200 = pneg %p76
        $region34: #{mod_rztx_decoder_layer.8} parent=31 // pred_check_branch
          %202 = sbr.rel (%p200) target = $region36
        $region35: #{mod_rztx_decoder_layer.8} parent=31 // pred_region
          %203 = dma.done %s196, 4096
        $region36: #{mod_rztx_decoder_layer.8} parent=31 // pred_fallthru
          _
        %s204 = smul.u32 2, %s21
        %p205 = scmp.lt.s32.totalorder %s204, 3
        %s206 = scalar_select %p205, %s204, 3
        %s207 = smul.addr %s206, 2
        %s208 = smul.addr %s207, 8
        %s209 = scalar_lea.vmem %s0, %s208
        %p210 = pneg %p50
        %p211 = pneg %p47
        %s212 = sand.u32 %s63, 1
        %s213 = scalar_lea.sflag [#allocation3], %s212
        %s214 = sand.u32 %s63, 1
        %s215 = smul.addr %s214, 256
        %s216 = scalar_lea.vmem [#allocation2], %s215
        %p217 = pneg %p76
        %p218 = pneg %p73
        %s219 = smul.u32 2, %s22
        %p220 = scmp.lt.s32.totalorder %s219, 5
        %s221 = scalar_select %p220, %s219, 5
        %s222 = scalar_lea.vmem %s2, %s221
        %p223 = pneg %p102
        %p224 = pneg %p99
        %p225 = pneg %p130
        %p226 = pneg %p127
        %s227 = sand.u32 %s117, 1
        %s228 = sand.u32 %s117, 1
        %s229 = smul.addr %s228, 16
        %s230 = scalar_lea.vmem [#allocation4], %s229
        %s231 = smul.u32 2, %s21
        %p232 = scmp.lt.s32.totalorder %s231, 3
        %s233 = scalar_select %p232, %s231, 3
        %s234 = smul.addr %s233, 2
        %s235 = smul.addr %s234, 8
        %s236 = scalar_lea.vmem %s0, %s235
        %s237 = smul.u32 2, %s21
        %s238 = smul.u32 2, %s22
        %s239 = smul.u32 2, %s22
        %p240 = scmp.lt.s32.totalorder %s239, 5
        %s241 = scalar_select %p240, %s239, 5
        %s242 = scalar_lea.vmem %s2, %s241
        %s243 = smul.u32 2, %s22
        %s244 = smul.u32 2, %s21
        %s245 = smul.u32 2, %s22
        %v246 = vld [vmem:[%s236] sm:$0xff]
        %v247 = vld [vmem:[%s236 + $0x8] sm:$0xff]
        %v248 = vld [vmem:[%s236 + $0x10] sm:$0xff]
        %v249 = vld [vmem:[%s236 + $0x18] sm:$0xff]
        %v250 = vpack.c.bf16 %v248, %v246
        %v251 = vpack.c.bf16 %v249, %v247
        %v252 = vld [vmem:[%s199] sm:$0xff]
        %v253 = vld [vmem:[%s199 + $0x8] sm:$0xff]
        %v254 = vld [vmem:[%s199 + $0x10] sm:$0xff]
        %v255 = vld [vmem:[%s199 + $0x18] sm:$0xff]
        %v256 = vld [vmem:[%s199 + $0x20] sm:$0xff]
        %v257 = vld [vmem:[%s199 + $0x28] sm:$0xff]
        %v258 = vld [vmem:[%s199 + $0x30] sm:$0xff]
        %v259 = vld [vmem:[%s199 + $0x38] sm:$0xff]
        %v260 = vld [vmem:[%s199 + $0x40] sm:$0xff]
        %v261 = vld [vmem:[%s199 + $0x48] sm:$0xff]
        %v262 = vld [vmem:[%s199 + $0x50] sm:$0xff]
        %v263 = vld [vmem:[%s199 + $0x58] sm:$0xff]
        %v264 = vld [vmem:[%s199 + $0x60] sm:$0xff]
        %v265 = vld [vmem:[%s199 + $0x68] sm:$0xff]
        %v266 = vld [vmem:[%s199 + $0x70] sm:$0xff]
        %v267 = vld [vmem:[%s199 + $0x78] sm:$0xff]
        %v268 = vld [vmem:[%s199 + $0x80] sm:$0xff]
        %v269 = vld [vmem:[%s199 + $0x88] sm:$0xff]
        %v270 = vld [vmem:[%s199 + $0x90] sm:$0xff]
        %v271 = vld [vmem:[%s199 + $0x98] sm:$0xff]
        %v272 = vld [vmem:[%s199 + $0xa0] sm:$0xff]
        %v273 = vld [vmem:[%s199 + $0xa8] sm:$0xff]
        %v274 = vld [vmem:[%s199 + $0xb0] sm:$0xff]
        %v275 = vld [vmem:[%s199 + $0xb8] sm:$0xff]
        %v276 = vld [vmem:[%s199 + $0xc0] sm:$0xff]
        %v277 = vld [vmem:[%s199 + $0xc8] sm:$0xff]
        %v278 = vld [vmem:[%s199 + $0xd0] sm:$0xff]
        %v279 = vld [vmem:[%s199 + $0xd8] sm:$0xff]
        %v280 = vld [vmem:[%s199 + $0xe0] sm:$0xff]
        %v281 = vld [vmem:[%s199 + $0xe8] sm:$0xff]
        %v282 = vld [vmem:[%s199 + $0xf0] sm:$0xff]
        %v283 = vld [vmem:[%s199 + $0xf8] sm:$0xff]
        %v284 = vld [vmem:[%s242] sm:$0x3]
        %v286 = vlaneseq
        %v287 = vshrl.u32 %v286, 7
        %v288 = vsub.s32 0, %v287
        %v289 = vrot.slane %v284, %v288
        %v290 = vlaneseq
        %v291 = vshrl.u32 %v290, 7
        %v292 = vsub.s32 1, %v291
        %v293 = vrot.slane %v284, %v292
        %v328 = vunpack.c.l.b16 %v252
        %v329 = vunpack.c.h.b16 %v252
        %v330 = vunpack.c.l.b16 %v253
        %v331 = vunpack.c.h.b16 %v253
        %v332 = vunpack.c.l.b16 %v254
        %v333 = vunpack.c.h.b16 %v254
        %v334 = vunpack.c.l.b16 %v255
        %v335 = vunpack.c.h.b16 %v255
        %v336 = vunpack.c.l.b16 %v256
        %v337 = vunpack.c.h.b16 %v256
        %v338 = vunpack.c.l.b16 %v257
        %v339 = vunpack.c.h.b16 %v257
        %v340 = vunpack.c.l.b16 %v258
        %v341 = vunpack.c.h.b16 %v258
        %v342 = vunpack.c.l.b16 %v259
        %v343 = vunpack.c.h.b16 %v259
        %v344 = vunpack.c.l.b16 %v260
        %v345 = vunpack.c.h.b16 %v260
        %v346 = vunpack.c.l.b16 %v261
        %v347 = vunpack.c.h.b16 %v261
        %v348 = vunpack.c.l.b16 %v262
        %v349 = vunpack.c.h.b16 %v262
        %v350 = vunpack.c.l.b16 %v263
        %v351 = vunpack.c.h.b16 %v263
        %v352 = vunpack.c.l.b16 %v264
        %v353 = vunpack.c.h.b16 %v264
        %v354 = vunpack.c.l.b16 %v265
        %v355 = vunpack.c.h.b16 %v265
        %v356 = vunpack.c.l.b16 %v266
        %v357 = vunpack.c.h.b16 %v266
        %v358 = vunpack.c.l.b16 %v267
        %v359 = vunpack.c.h.b16 %v267
        %v360 = vunpack.c.l.b16 %v268
        %v361 = vunpack.c.h.b16 %v268
        %v362 = vunpack.c.l.b16 %v269
        %v363 = vunpack.c.h.b16 %v269
        %v364 = vunpack.c.l.b16 %v270
        %v365 = vunpack.c.h.b16 %v270
        %v366 = vunpack.c.l.b16 %v271
        %v367 = vunpack.c.h.b16 %v271
        %v368 = vunpack.c.l.b16 %v272
        %v369 = vunpack.c.h.b16 %v272
        %v370 = vunpack.c.l.b16 %v273
        %v371 = vunpack.c.h.b16 %v273
        %v372 = vunpack.c.l.b16 %v274
        %v373 = vunpack.c.h.b16 %v274
        %v374 = vunpack.c.l.b16 %v275
        %v375 = vunpack.c.h.b16 %v275
        %v376 = vunpack.c.l.b16 %v276
        %v377 = vunpack.c.h.b16 %v276
        %v378 = vunpack.c.l.b16 %v277
        %v379 = vunpack.c.h.b16 %v277
        %v380 = vunpack.c.l.b16 %v278
        %v381 = vunpack.c.h.b16 %v278
        %v382 = vunpack.c.l.b16 %v279
        %v383 = vunpack.c.h.b16 %v279
        %v384 = vunpack.c.l.b16 %v280
        %v385 = vunpack.c.h.b16 %v280
        %v386 = vunpack.c.l.b16 %v281
        %v387 = vunpack.c.h.b16 %v281
        %v388 = vunpack.c.l.b16 %v282
        %v389 = vunpack.c.h.b16 %v282
        %v390 = vunpack.c.l.b16 %v283
        %v391 = vunpack.c.h.b16 %v283
        %v392 = vpack.c.b16 %v330, %v328
        %v393 = vpack.c.b16 %v331, %v329
        %v394 = vpack.c.b16 %v334, %v332
        %v395 = vpack.c.b16 %v335, %v333
        %v396 = vpack.c.b16 %v338, %v336
        %v397 = vpack.c.b16 %v339, %v337
        %v398 = vpack.c.b16 %v342, %v340
        %v399 = vpack.c.b16 %v343, %v341
        %v400 = vpack.c.b16 %v346, %v344
        %v401 = vpack.c.b16 %v347, %v345
        %v402 = vpack.c.b16 %v350, %v348
        %v403 = vpack.c.b16 %v351, %v349
        %v404 = vpack.c.b16 %v354, %v352
        %v405 = vpack.c.b16 %v355, %v353
        %v406 = vpack.c.b16 %v358, %v356
        %v407 = vpack.c.b16 %v359, %v357
        %v408 = vpack.c.b16 %v362, %v360
        %v409 = vpack.c.b16 %v363, %v361
        %v410 = vpack.c.b16 %v366, %v364
        %v411 = vpack.c.b16 %v367, %v365
        %v412 = vpack.c.b16 %v370, %v368
        %v413 = vpack.c.b16 %v371, %v369
        %v414 = vpack.c.b16 %v374, %v372
        %v415 = vpack.c.b16 %v375, %v373
        %v416 = vpack.c.b16 %v378, %v376
        %v417 = vpack.c.b16 %v379, %v377
        %v418 = vpack.c.b16 %v382, %v380
        %v419 = vpack.c.b16 %v383, %v381
        %v420 = vpack.c.b16 %v386, %v384
        %v421 = vpack.c.b16 %v387, %v385
        %v422 = vpack.c.b16 %v390, %v388
        %v423 = vpack.c.b16 %v391, %v389
        %456 = vmatprep.subr.bf16.mxu0 %v393
        %457 = vmatpush1.bf16.msra.mxu0 %v392
        %458 = vmatprep.subr.bf16.mxu0 %v395
        %459 = vmatpush1.bf16.msra.mxu0 %v394
        %460 = vmatprep.subr.bf16.mxu0 %v397
        %461 = vmatpush1.bf16.msra.mxu0 %v396
        %462 = vmatprep.subr.bf16.mxu0 %v399
        %463 = vmatpush1.bf16.msra.mxu0 %v398
        %464 = vmatprep.subr.bf16.mxu0 %v401
        %465 = vmatpush1.bf16.msra.mxu0 %v400
        %466 = vmatprep.subr.bf16.mxu0 %v403
        %467 = vmatpush1.bf16.msra.mxu0 %v402
        %468 = vmatprep.subr.bf16.mxu0 %v405
        %469 = vmatpush1.bf16.msra.mxu0 %v404
        %470 = vmatprep.subr.bf16.mxu0 %v407
        %471 = vmatpush1.bf16.msra.mxu0 %v406
        %472 = vmatprep.subr.bf16.mxu0 %v409
        %473 = vmatpush1.bf16.msra.mxu0 %v408
        %474 = vmatprep.subr.bf16.mxu0 %v411
        %475 = vmatpush1.bf16.msra.mxu0 %v410
        %476 = vmatprep.subr.bf16.mxu0 %v413
        %477 = vmatpush1.bf16.msra.mxu0 %v412
        %478 = vmatprep.subr.bf16.mxu0 %v415
        %479 = vmatpush1.bf16.msra.mxu0 %v414
        %480 = vmatprep.subr.bf16.mxu0 %v417
        %481 = vmatpush1.bf16.msra.mxu0 %v416
        %482 = vmatprep.subr.bf16.mxu0 %v419
        %483 = vmatpush1.bf16.msra.mxu0 %v418
        %484 = vmatprep.subr.bf16.mxu0 %v421
        %485 = vmatpush1.bf16.msra.mxu0 %v420
        %486 = vmatprep.subr.bf16.mxu0 %v423
        %487 = vmatpush1.bf16.msra.mxu0 %v422
        %488 = vmatprep.mubr.bf16.mxu0 %v251
        %489 = vmatmul.mubr.bf16.gmra.mrb[0].mxu0 %v250
        %v490 = vpop.f32.mrb[0].mxu0
        %v491 = vadd.f32 %v289, %v490
        %v492 = vpop.f32.mrb[0].mxu0
        %v493 = vadd.f32 %v293, %v492
        %v494 = vpop.f32.mrb[0].mxu0
        %v495 = vadd.f32 %v289, %v494
        %v496 = vpop.f32.mrb[0].mxu0
        %v497 = vadd.f32 %v293, %v496
        %498 = vdwg.mxu0
        %v499 = vpack.c.bf16 %v495, %v491
        %v500 = vpack.c.bf16 %v497, %v493
        %v503 = vunpack.c.l.b16 %v499
        %v504 = vunpack.c.l.b16 %v500
        %v505 = vunpack.c.h.b16 %v499
        %v506 = vunpack.c.h.b16 %v500
        %v507 = vpack.c.b16 %v504, %v503
        %v508 = vpack.c.b16 %v506, %v505
        %511 = vst [vmem:[%s230] sm:$0xff] %v507
        %512 = vst [vmem:[%s230 + $0x8] sm:$0xff] %v508
        %s513 = sand.u32 %s117, 1
        %s514 = sand.u32 %s117, 1
        %s515 = smul.addr %s514, 16
        %s516 = scalar_lea.vmem [#allocation4], %s515
        // Predicated region
        $region37: #{mod_rztx_decoder_layer.8} parent=31 // pred_check
          %p517 = pneg %p127
        $region38: #{mod_rztx_decoder_layer.8} parent=31 // pred_check_branch
          %519 = sbr.rel (%p517) target = $region40
        $region39: #{mod_rztx_decoder_layer.8} parent=31 // pred_region
          %s520 = smul.u32 2, %s21
          %s521 = smul.u32 2, %s22
          %s522 = smul.addr %s520, 6
          %s523 = sadd.s32 %s521, %s522
          %s524 = smul.addr %s523, 4
          %s525 = scalar_lea.vmem %s3, %s524
          // Predicated region
          $region41: #{mod_rztx_decoder_layer.8} parent=39 // pred_check
            _
          $region42: #{mod_rztx_decoder_layer.8} parent=39 // pred_check_branch
            %527 = sbr.rel (0) target = $region44
          $region43: #{mod_rztx_decoder_layer.8} parent=39 // pred_region
            // Predicated region
            $region45: #{mod_rztx_decoder_layer.8} parent=43 // pred_check
              _
            $region46: #{mod_rztx_decoder_layer.8} parent=43 // pred_check_branch
              %529 = sbr.rel (0) target = $region48
            $region47: #{mod_rztx_decoder_layer.8} parent=43 // pred_region
              // Predicated region
              $region60: #{mod_rztx_decoder_layer.8} parent=47 // pred_check
                _
              $region61: #{mod_rztx_decoder_layer.8} parent=47 // pred_check_branch
                %546 = sbr.rel (0) target = $region63
              $region62: #{mod_rztx_decoder_layer.8} parent=47 // pred_region
                loop: start=0, step=1, limit=1
                $region64: #{mod_rztx_decoder_layer.8} parent=62 // loop_pre_header
                  _
                $region65: #{mod_rztx_decoder_layer.8} parent=62 // loop_header
                  %s548 = sphi 0, %s552
                  %p549 = scmp.ge.s32.totalorder %s548, 1
                  %s553 = sphi %s516, %s516
                  %s554 = sphi %s525, %s525
                $region66: #{mod_rztx_decoder_layer.8} parent=62 // loop_header_branch
                  %551 = sbr.rel (%p549) target = $region70
                $region67: #{mod_rztx_decoder_layer.8} parent=62 // loop_body
                  %v555 = vld [vmem:[%s553] sm:$0xff]
                  %556 = vst [vmem:[%s554] sm:$0xff] %v555
                  %v557 = vld [vmem:[%s553 + $0x8] sm:$0xff]
                  %558 = vst [vmem:[%s554 + $0x18] sm:$0xff] %v557
                $region68: #{mod_rztx_decoder_layer.8} parent=62 // loop_footer
                  %s552 = sadd.s32 1, %s548
                $region69: #{mod_rztx_decoder_layer.8} parent=62 // loop_footer_branch
                  %547 = sbr.rel target = $region65
                $region70: #{mod_rztx_decoder_layer.8} parent=62 // loop_exit
                  _
              $region63: #{mod_rztx_decoder_layer.8} parent=47 // pred_fallthru
                _
              // Predicated region
              $region71: #{mod_rztx_decoder_layer.8} parent=47 // pred_check
                _
              $region72: #{mod_rztx_decoder_layer.8} parent=47 // pred_check_branch
                %560 = sbr.rel target = $region74
              $region73: #{mod_rztx_decoder_layer.8} parent=47 // pred_region
                _
              $region74: #{mod_rztx_decoder_layer.8} parent=47 // pred_fallthru
                _
            $region48: #{mod_rztx_decoder_layer.8} parent=43 // pred_fallthru
              _
            // Predicated region
            $region49: #{mod_rztx_decoder_layer.8} parent=43 // pred_check
              _
            $region50: #{mod_rztx_decoder_layer.8} parent=43 // pred_check_branch
              %531 = sbr.rel target = $region52
            $region51: #{mod_rztx_decoder_layer.8} parent=43 // pred_region
              loop: start=0, step=1, limit=1
              $region53: #{mod_rztx_decoder_layer.8} parent=51 // loop_pre_header
                _
              $region54: #{mod_rztx_decoder_layer.8} parent=51 // loop_header
                %s534 = sphi 0, %s538
                %p535 = scmp.ge.s32.totalorder %s534, 1
                %s539 = sphi %s516, %s516
                %s540 = sphi %s525, %s525
              $region55: #{mod_rztx_decoder_layer.8} parent=51 // loop_header_branch
                %537 = sbr.rel (%p535) target = $region59
              $region56: #{mod_rztx_decoder_layer.8} parent=51 // loop_body
                %v541 = vld [vmem:[%s539] sm:$0xff]
                %542 = vst [vmem:[%s540] sm:$0xff] %v541
                %v543 = vld [vmem:[%s539 + $0x8] sm:$0xff]
                %544 = vst [vmem:[%s540 + $0x18] sm:$0xff] %v543
              $region57: #{mod_rztx_decoder_layer.8} parent=51 // loop_footer
                %s538 = sadd.s32 1, %s534
              $region58: #{mod_rztx_decoder_layer.8} parent=51 // loop_footer_branch
                %533 = sbr.rel target = $region54
              $region59: #{mod_rztx_decoder_layer.8} parent=51 // loop_exit
                _
            $region52: #{mod_rztx_decoder_layer.8} parent=43 // pred_fallthru
              _
          $region44: #{mod_rztx_decoder_layer.8} parent=39 // pred_fallthru
            _
          %561 = vnop
        $region40: #{mod_rztx_decoder_layer.8} parent=31 // pred_fallthru
          _
      $region32: #{mod_rztx_decoder_layer.8} parent=5 // pred_fallthru
        _
      %p562 = scmp.le.s32.totalorder 2, %s12
      // Predicated region
      $region75: #{mod_rztx_decoder_layer.8} parent=5 // pred_check
        %p563 = pneg %p562
      $region76: #{mod_rztx_decoder_layer.8} parent=5 // pred_check_branch
        %565 = sbr.rel (%p563) target = $region78
      $region77: #{mod_rztx_decoder_layer.8} parent=5 // pred_region
        %s566 = ssub.s32 %s12, 2
        // Predicated region
        $region79: #{mod_rztx_decoder_layer.8} parent=77 // pred_check
          %p567 = pneg %p133
        $region80: #{mod_rztx_decoder_layer.8} parent=77 // pred_check_branch
          %569 = sbr.rel (%p567) target = $region82
        $region81: #{mod_rztx_decoder_layer.8} parent=77 // pred_region
          %s570 = sand.u32 %s118, 1
          %s571 = sand.u32 %s118, 1
          %s572 = smul.addr %s571, 16
          %s573 = scalar_lea.vmem [#allocation4], %s572
        $region82: #{mod_rztx_decoder_layer.8} parent=77 // pred_fallthru
          _
      $region78: #{mod_rztx_decoder_layer.8} parent=5 // pred_fallthru
        _
    $region6: #{mod_rztx_decoder_layer.8} parent=1 // loop_footer
      %s16 = sadd.s32 1, %s12
    $region7: #{mod_rztx_decoder_layer.8} parent=1 // loop_footer_branch
      %11 = sbr.rel target = $region3
    $region8: #{mod_rztx_decoder_layer.8} parent=1 // loop_exit
      _
    %574 = vsyncpa [#allocation3], 1
    %s575 = scalar_lea.sflag [#allocation3], 1
    %576 = vsyncpa %s575, 1

// kernel: mod_rztx_decoder_layer.10
$region0: #{mod_rztx_decoder_layer.10}
  #allocation0 [shape = 'u32[]', space=smem, size = 0x4, offset = 0x4, fixed_abs, tag = 'smem constant byte address 0x4 - core index']
  #allocation1 [shape = 'u32[144,128]{1,0:T(1,128)}', space=vmem, size = 0x12000, scoped, tag = 'internal scratch']
  #allocation2 [shape = 'f32[1,1]{1,0:T(1,128)S(6)}', space=smem, size = 0x200, scoped, tag = 'scoped memory for mod_rztx_decoder_layer.10']
  %s0 = inlined_call_operand.vmem [shape: bf16[32,256], index: 0, kind: input, shape index: {}]
  %s1 = inlined_call_operand.vmem [shape: bf16[256,256], index: 1, kind: input, shape index: {}]
  %s2 = inlined_call_operand.vmem [shape: f32[1,256], index: 2, kind: input, shape index: {}]
  %s3 = inlined_call_operand.vmem [shape: f32[32,256], index: 3, kind: input, shape index: {}]
  %s4 = inlined_call_operand.<no memory space> [shape: f32[1,1], index: 4, kind: input, shape index: {}]
  %s5 = inlined_call_operand.vmem [shape: f32[32,256], index: 5, kind: output, shape index: {}]
  %s6 = sld [smem:[#allocation0]]
  $region53: #{mod_rztx_decoder_layer.10} parent=0
    _
  %s8 = ssub.s32 1, %s6
  %s9 = scalar_select 0, %s8, %s6
  %10 = sst [smem:[#allocation2]] %s4
  loop: start=0, step=1, limit=4
  $region2: #{mod_rztx_decoder_layer.10} parent=0 // loop_pre_header
    _
  $region3: #{mod_rztx_decoder_layer.10} parent=0 // loop_header
    %s12 = sphi 0, %s16
    %p13 = scmp.ge.s32.totalorder %s12, 4
    %s19 = sphi 0, %s31
    %s20 = sphi 0, %s27
    %s21 = sphi 0, %s19
    %s22 = sphi 0, %s20
    %s23 = sphi 0, %s21
    %s24 = sphi 0, %s22
    %s34 = sphi 0, %s36
    %s37 = sphi 0, %s34
    %s38 = sphi 0, %s37
    %s54 = sphi 0, %s38
    %s60 = sphi 0, %s62
    %s63 = sphi 0, %s60
    %s64 = sphi 0, %s63
    %s80 = sphi 0, %s64
    %s86 = sphi 0, %s88
    %s89 = sphi 0, %s86
    %s90 = sphi 0, %s89
    %s106 = sphi 0, %s90
    %s114 = sphi 0, %s116
    %s117 = sphi 0, %s114
    %s118 = sphi 0, %s117
    %s134 = sphi 0, %s118
    %s138 = sphi 0, %s138
    %s140 = sphi 0, %s138
    %s141 = sphi 0, %s140
    %s155 = sphi 0, %s141
    %s163 = sphi 0, %s165
    %s166 = sphi 0, %s163
    %s167 = sphi 0, %s166
    %s183 = sphi 0, %s167
  $region4: #{mod_rztx_decoder_layer.10} parent=0 // loop_header_branch
    %15 = sbr.rel (%p13) target = $region8
  $region5: #{mod_rztx_decoder_layer.10} parent=0 // loop_body
    %s17 = ssub.s32 %s12, 1
    %s18 = ssub.s32 %s12, 2
    %s25 = sadd.s32 1, %s20
    %p26 = scmp.ge.s32.totalorder %s25, 1
    %s27 = scalar_select %p26, 0, %s25
    %s28 = sadd.s32 1, %s19
    %s29 = scalar_select %p26, %s28, %s19
    %p30 = scmp.ge.s32.totalorder %s29, 2
    %s31 = scalar_select %p30, 0, %s29
    %s32 = ssub.s32 %s19, %s31
    %p33 = scmp.eq.s32.totalorder %s32, 0
    %s35 = sadd.s32 %s34, 1
    %s36 = scalar_select %p33, %s34, %s35
    %p39 = pneg %p33
    %p40 = scmp.eq.s32.totalorder %s12, 1
    %p41 = por %p39, %p40
    %p42 = scmp.ne.s32.totalorder %s34, %s37
    %p43 = scmp.eq.s32.totalorder %s12, 0
    %p44 = por %p42, %p43
    %p45 = scmp.ne.s32.totalorder %s34, %s37
    %p46 = scmp.eq.s32.totalorder %s17, 1
    %p47 = por %p45, %p46
    %p48 = scmp.ne.s32.totalorder %s37, %s38
    %p49 = scmp.eq.s32.totalorder %s17, 0
    %p50 = por %p48, %p49
    %p51 = scmp.ne.s32.totalorder %s37, %s38
    %p52 = scmp.eq.s32.totalorder %s18, 1
    %p53 = por %p51, %p52
    %p55 = scmp.ne.s32.totalorder %s38, %s54
    %p56 = scmp.eq.s32.totalorder %s18, 0
    %p57 = por %p55, %p56
    %s58 = ssub.s32 %s20, %s27
    %p59 = scmp.eq.s32.totalorder %s58, 0
    %s61 = sadd.s32 %s60, 1
    %s62 = scalar_select %p59, %s60, %s61
    %p65 = pneg %p59
    %p66 = scmp.eq.s32.totalorder %s12, 1
    %p67 = por %p65, %p66
    %p68 = scmp.ne.s32.totalorder %s60, %s63
    %p69 = scmp.eq.s32.totalorder %s12, 0
    %p70 = por %p68, %p69
    %p71 = scmp.ne.s32.totalorder %s60, %s63
    %p72 = scmp.eq.s32.totalorder %s17, 1
    %p73 = por %p71, %p72
    %p74 = scmp.ne.s32.totalorder %s63, %s64
    %p75 = scmp.eq.s32.totalorder %s17, 0
    %p76 = por %p74, %p75
    %p77 = scmp.ne.s32.totalorder %s63, %s64
    %p78 = scmp.eq.s32.totalorder %s18, 1
    %p79 = por %p77, %p78
    %p81 = scmp.ne.s32.totalorder %s64, %s80
    %p82 = scmp.eq.s32.totalorder %s18, 0
    %p83 = por %p81, %p82
    %s84 = ssub.s32 %s20, %s27
    %p85 = scmp.eq.s32.totalorder %s84, 0
    %s87 = sadd.s32 %s86, 1
    %s88 = scalar_select %p85, %s86, %s87
    %p91 = pneg %p85
    %p92 = scmp.eq.s32.totalorder %s12, 1
    %p93 = por %p91, %p92
    %p94 = scmp.ne.s32.totalorder %s86, %s89
    %p95 = scmp.eq.s32.totalorder %s12, 0
    %p96 = por %p94, %p95
    %p97 = scmp.ne.s32.totalorder %s86, %s89
    %p98 = scmp.eq.s32.totalorder %s17, 1
    %p99 = por %p97, %p98
    %p100 = scmp.ne.s32.totalorder %s89, %s90
    %p101 = scmp.eq.s32.totalorder %s17, 0
    %p102 = por %p100, %p101
    %p103 = scmp.ne.s32.totalorder %s89, %s90
    %p104 = scmp.eq.s32.totalorder %s18, 1
    %p105 = por %p103, %p104
    %p107 = scmp.ne.s32.totalorder %s90, %s106
    %p108 = scmp.eq.s32.totalorder %s18, 0
    %p109 = por %p107, %p108
    %s110 = ssub.s32 %s19, %s31
    %s111 = ssub.s32 %s20, %s27
    %s112 = sor.u32 %s110, %s111
    %p113 = scmp.eq.s32.totalorder %s112, 0
    %s115 = sadd.s32 %s114, 1
    %s116 = scalar_select %p113, %s114, %s115
    %p119 = pneg %p113
    %p120 = scmp.eq.s32.totalorder %s12, 1
    %p121 = por %p119, %p120
    %p122 = scmp.ne.s32.totalorder %s114, %s117
    %p123 = scmp.eq.s32.totalorder %s12, 0
    %p124 = por %p122, %p123
    %p125 = scmp.ne.s32.totalorder %s114, %s117
    %p126 = scmp.eq.s32.totalorder %s17, 1
    %p127 = por %p125, %p126
    %p128 = scmp.ne.s32.totalorder %s117, %s118
    %p129 = scmp.eq.s32.totalorder %s17, 0
    %p130 = por %p128, %p129
    %p131 = scmp.ne.s32.totalorder %s117, %s118
    %p132 = scmp.eq.s32.totalorder %s18, 1
    %p133 = por %p131, %p132
    %p135 = scmp.ne.s32.totalorder %s118, %s134
    %p136 = scmp.eq.s32.totalorder %s18, 0
    %p137 = por %p135, %p136
    %s139 = sadd.s32 %s138, 1
    %p142 = scmp.eq.s32.totalorder %s12, 1
    %p143 = scmp.ne.s32.totalorder %s138, %s140
    %p144 = scmp.eq.s32.totalorder %s12, 0
    %p145 = por %p143, %p144
    %p146 = scmp.ne.s32.totalorder %s138, %s140
    %p147 = scmp.eq.s32.totalorder %s17, 1
    %p148 = por %p146, %p147
    %p149 = scmp.ne.s32.totalorder %s140, %s141
    %p150 = scmp.eq.s32.totalorder %s17, 0
    %p151 = por %p149, %p150
    %p152 = scmp.ne.s32.totalorder %s140, %s141
    %p153 = scmp.eq.s32.totalorder %s18, 1
    %p154 = por %p152, %p153
    %p156 = scmp.ne.s32.totalorder %s141, %s155
    %p157 = scmp.eq.s32.totalorder %s18, 0
    %p158 = por %p156, %p157
    %s159 = ssub.s32 %s19, %s31
    %s160 = ssub.s32 %s20, %s27
    %s161 = sor.u32 %s159, %s160
    %p162 = scmp.eq.s32.totalorder %s161, 0
    %s164 = sadd.s32 %s163, 1
    %s165 = scalar_select %p162, %s163, %s164
    %p168 = pneg %p162
    %p169 = scmp.eq.s32.totalorder %s12, 1
    %p170 = por %p168, %p169
    %p171 = scmp.ne.s32.totalorder %s163, %s166
    %p172 = scmp.eq.s32.totalorder %s12, 0
    %p173 = por %p171, %p172
    %p174 = scmp.ne.s32.totalorder %s163, %s166
    %p175 = scmp.eq.s32.totalorder %s17, 1
    %p176 = por %p174, %p175
    %p177 = scmp.ne.s32.totalorder %s166, %s167
    %p178 = scmp.eq.s32.totalorder %s17, 0
    %p179 = por %p177, %p178
    %p180 = scmp.ne.s32.totalorder %s166, %s167
    %p181 = scmp.eq.s32.totalorder %s18, 1
    %p182 = por %p180, %p181
    %p184 = scmp.ne.s32.totalorder %s167, %s183
    %p185 = scmp.eq.s32.totalorder %s18, 0
    %p186 = por %p184, %p185
    %p187 = scmp.le.s32.totalorder 1, %s12
    %p188 = scmp.lt.s32.totalorder %s12, 3
    %p189 = pnand %p187, %p188
    %p190 = pneg %p189
    // Predicated region
    $region9: #{mod_rztx_decoder_layer.10} parent=5 // pred_check
      _
    $region10: #{mod_rztx_decoder_layer.10} parent=5 // pred_check_branch
      %192 = sbr.rel (%p189) target = $region12
    $region11: #{mod_rztx_decoder_layer.10} parent=5 // pred_region
      %s193 = ssub.s32 %s12, 1
      // Predicated region
      $region13: #{mod_rztx_decoder_layer.10} parent=11 // pred_check
        %p194 = pneg %p76
      $region14: #{mod_rztx_decoder_layer.10} parent=11 // pred_check_branch
        %196 = sbr.rel (%p194) target = $region16
      $region15: #{mod_rztx_decoder_layer.10} parent=11 // pred_region
        %s197 = smul.u32 2, %s22
        %p198 = scmp.lt.s32.totalorder %s197, 1
        %s199 = scalar_select %p198, %s197, 1
        %s200 = smul.addr %s199, 4
        %s201 = scalar_lea.vmem %s1, %s200
        %s202 = smul.u32 2, %s22
      $region16: #{mod_rztx_decoder_layer.10} parent=11 // pred_fallthru
        _
      // Predicated region
      $region17: #{mod_rztx_decoder_layer.10} parent=11 // pred_check
        %p203 = pneg %p102
      $region18: #{mod_rztx_decoder_layer.10} parent=11 // pred_check_branch
        %205 = sbr.rel (%p203) target = $region20
      $region19: #{mod_rztx_decoder_layer.10} parent=11 // pred_region
        %s206 = smul.u32 2, %s22
        %p207 = scmp.lt.s32.totalorder %s206, 1
        %s208 = scalar_select %p207, %s206, 1
        %s209 = scalar_lea.vmem %s2, %s208
        %s210 = smul.u32 2, %s22
      $region20: #{mod_rztx_decoder_layer.10} parent=11 // pred_fallthru
        _
      // Predicated region
      $region21: #{mod_rztx_decoder_layer.10} parent=11 // pred_check
        %p211 = pneg %p151
      $region22: #{mod_rztx_decoder_layer.10} parent=11 // pred_check_branch
        %213 = sbr.rel (%p211) target = $region24
      $region23: #{mod_rztx_decoder_layer.10} parent=11 // pred_region
        _
      $region24: #{mod_rztx_decoder_layer.10} parent=11 // pred_fallthru
        _
    $region12: #{mod_rztx_decoder_layer.10} parent=5 // pred_fallthru
      _
    %p214 = scmp.lt.s32.totalorder %s12, 2
    // Predicated region
    $region25: #{mod_rztx_decoder_layer.10} parent=5 // pred_check
      %p215 = pneg %p214
    $region26: #{mod_rztx_decoder_layer.10} parent=5 // pred_check_branch
      %217 = sbr.rel (%p215) target = $region28
    $region27: #{mod_rztx_decoder_layer.10} parent=5 // pred_region
      // Predicated region
      $region29: #{mod_rztx_decoder_layer.10} parent=27 // pred_check
        %p218 = pneg %p44
      $region30: #{mod_rztx_decoder_layer.10} parent=27 // pred_check_branch
        %220 = sbr.rel (%p218) target = $region32
      $region31: #{mod_rztx_decoder_layer.10} parent=27 // pred_region
        %s221 = smul.u32 2, %s19
        %p222 = scmp.lt.s32.totalorder %s221, 3
        %s223 = scalar_select %p222, %s221, 3
        %s224 = smul.addr %s223, 2
        %s225 = smul.addr %s224, 4
        %s226 = scalar_lea.vmem %s0, %s225
        %s227 = smul.u32 2, %s19
      $region32: #{mod_rztx_decoder_layer.10} parent=27 // pred_fallthru
        _
      // Predicated region
      $region33: #{mod_rztx_decoder_layer.10} parent=27 // pred_check
        %p228 = pneg %p124
      $region34: #{mod_rztx_decoder_layer.10} parent=27 // pred_check_branch
        %230 = sbr.rel (%p228) target = $region36
      $region35: #{mod_rztx_decoder_layer.10} parent=27 // pred_region
        %s231 = smul.u32 2, %s19
        %s232 = smul.u32 2, %s20
        %p233 = scmp.lt.s32.totalorder %s231, 3
        %s234 = scalar_select %p233, %s231, 3
        %p235 = scmp.lt.s32.totalorder %s232, 1
        %s236 = scalar_select %p235, %s232, 1
        %s237 = smul.addr %s234, 2
        %s238 = sadd.s32 %s236, %s237
        %s239 = smul.addr %s238, 8
        %s240 = scalar_lea.vmem %s3, %s239
        %s241 = smul.u32 2, %s19
        %s242 = smul.u32 2, %s20
      $region36: #{mod_rztx_decoder_layer.10} parent=27 // pred_fallthru
        _
    $region28: #{mod_rztx_decoder_layer.10} parent=5 // pred_fallthru
      _
    %p243 = scmp.le.s32.totalorder 1, %s12
    %p244 = scmp.lt.s32.totalorder %s12, 3
    %p245 = pnand %p243, %p244
    %p246 = pneg %p245
    // Predicated region
    $region37: #{mod_rztx_decoder_layer.10} parent=5 // pred_check
      _
    $region38: #{mod_rztx_decoder_layer.10} parent=5 // pred_check_branch
      %248 = sbr.rel (%p245) target = $region40
    $region39: #{mod_rztx_decoder_layer.10} parent=5 // pred_region
      %s249 = ssub.s32 %s12, 1
      %s250 = smul.u32 2, %s21
      %p251 = scmp.lt.s32.totalorder %s250, 3
      %s252 = scalar_select %p251, %s250, 3
      %s253 = smul.addr %s252, 2
      %s254 = smul.addr %s253, 4
      %s255 = scalar_lea.vmem %s0, %s254
      %p256 = pneg %p50
      %p257 = pneg %p47
      %s258 = smul.u32 2, %s22
      %p259 = scmp.lt.s32.totalorder %s258, 1
      %s260 = scalar_select %p259, %s258, 1
      %s261 = smul.addr %s260, 4
      %s262 = scalar_lea.vmem %s1, %s261
      %p263 = pneg %p76
      %p264 = pneg %p73
      %s265 = smul.u32 2, %s22
      %p266 = scmp.lt.s32.totalorder %s265, 1
      %s267 = scalar_select %p266, %s265, 1
      %s268 = scalar_lea.vmem %s2, %s267
      %p269 = pneg %p102
      %p270 = pneg %p99
      %s271 = smul.u32 2, %s21
      %s272 = smul.u32 2, %s22
      %p273 = scmp.lt.s32.totalorder %s271, 3
      %s274 = scalar_select %p273, %s271, 3
      %p275 = scmp.lt.s32.totalorder %s272, 1
      %s276 = scalar_select %p275, %s272, 1
      %s277 = smul.addr %s274, 2
      %s278 = sadd.s32 %s276, %s277
      %s279 = smul.addr %s278, 8
      %s280 = scalar_lea.vmem %s3, %s279
      %p281 = pneg %p130
      %p282 = pneg %p127
      %p283 = pneg %p151
      %p284 = pneg %p148
      %p285 = pneg %p179
      %p286 = pneg %p176
      %s287 = smul.u32 2, %s21
      %s288 = smul.u32 2, %s22
      %p289 = scmp.lt.s32.totalorder %s287, 3
      %s290 = scalar_select %p289, %s287, 3
      %p291 = scmp.lt.s32.totalorder %s288, 1
      %s292 = scalar_select %p291, %s288, 1
      %s293 = smul.addr %s290, 2
      %s294 = sadd.s32 %s292, %s293
      %s295 = smul.addr %s294, 8
      %s296 = scalar_lea.vmem %s5, %s295
      %s297 = smul.u32 2, %s21
      %p298 = scmp.lt.s32.totalorder %s297, 3
      %s299 = scalar_select %p298, %s297, 3
      %s300 = smul.addr %s299, 2
      %s301 = smul.addr %s300, 4
      %s302 = scalar_lea.vmem %s0, %s301
      %s303 = smul.u32 2, %s21
      %s304 = smul.u32 2, %s22
      %p305 = scmp.lt.s32.totalorder %s304, 1
      %s306 = scalar_select %p305, %s304, 1
      %s307 = smul.addr %s306, 4
      %s308 = scalar_lea.vmem %s1, %s307
      %s309 = smul.u32 2, %s22
      %s310 = smul.u32 2, %s22
      %p311 = scmp.lt.s32.totalorder %s310, 1
      %s312 = scalar_select %p311, %s310, 1
      %s313 = scalar_lea.vmem %s2, %s312
      %s314 = smul.u32 2, %s22
      %s315 = smul.u32 2, %s21
      %s316 = smul.u32 2, %s22
      %p317 = scmp.lt.s32.totalorder %s315, 3
      %s318 = scalar_select %p317, %s315, 3
      %p319 = scmp.lt.s32.totalorder %s316, 1
      %s320 = scalar_select %p319, %s316, 1
      %s321 = smul.addr %s318, 2
      %s322 = sadd.s32 %s320, %s321
      %s323 = smul.addr %s322, 8
      %s324 = scalar_lea.vmem %s3, %s323
      %s325 = smul.u32 2, %s21
      %s326 = smul.u32 2, %s22
      %s327 = smul.u32 2, %s21
      %s328 = smul.u32 2, %s22
      %p329 = scmp.lt.s32.totalorder %s327, 3
      %s330 = scalar_select %p329, %s327, 3
      %p331 = scmp.lt.s32.totalorder %s328, 1
      %s332 = scalar_select %p331, %s328, 1
      %s333 = smul.addr %s330, 2
      %s334 = sadd.s32 %s332, %s333
      %s335 = smul.addr %s334, 8
      %s336 = scalar_lea.vmem %s5, %s335
      %s337 = smul.u32 2, %s21
      %s338 = smul.u32 2, %s22
      %v339 = vld [vmem:[%s302] sm:$0xff]
      %v340 = vld [vmem:[%s302 + $0x8] sm:$0xff]
      %v341 = vld [vmem:[%s308] sm:$0xff]
      %v342 = vld [vmem:[%s308 + $0x8] sm:$0xff]
      %v343 = vld [vmem:[%s308 + $0x10] sm:$0xff]
      %v344 = vld [vmem:[%s308 + $0x18] sm:$0xff]
      %v345 = vld [vmem:[%s308 + $0x20] sm:$0xff]
      %v346 = vld [vmem:[%s308 + $0x28] sm:$0xff]
      %v347 = vld [vmem:[%s308 + $0x30] sm:$0xff]
      %v348 = vld [vmem:[%s308 + $0x38] sm:$0xff]
      %v349 = vld [vmem:[%s308 + $0x40] sm:$0xff]
      %v350 = vld [vmem:[%s308 + $0x48] sm:$0xff]
      %v351 = vld [vmem:[%s308 + $0x50] sm:$0xff]
      %v352 = vld [vmem:[%s308 + $0x58] sm:$0xff]
      %v353 = vld [vmem:[%s308 + $0x60] sm:$0xff]
      %v354 = vld [vmem:[%s308 + $0x68] sm:$0xff]
      %v355 = vld [vmem:[%s308 + $0x70] sm:$0xff]
      %v356 = vld [vmem:[%s308 + $0x78] sm:$0xff]
      %v357 = vld [vmem:[%s308 + $0x80] sm:$0xff]
      %v358 = vld [vmem:[%s308 + $0x88] sm:$0xff]
      %v359 = vld [vmem:[%s308 + $0x90] sm:$0xff]
      %v360 = vld [vmem:[%s308 + $0x98] sm:$0xff]
      %v361 = vld [vmem:[%s308 + $0xa0] sm:$0xff]
      %v362 = vld [vmem:[%s308 + $0xa8] sm:$0xff]
      %v363 = vld [vmem:[%s308 + $0xb0] sm:$0xff]
      %v364 = vld [vmem:[%s308 + $0xb8] sm:$0xff]
      %v365 = vld [vmem:[%s308 + $0xc0] sm:$0xff]
      %v366 = vld [vmem:[%s308 + $0xc8] sm:$0xff]
      %v367 = vld [vmem:[%s308 + $0xd0] sm:$0xff]
      %v368 = vld [vmem:[%s308 + $0xd8] sm:$0xff]
      %v369 = vld [vmem:[%s308 + $0xe0] sm:$0xff]
      %v370 = vld [vmem:[%s308 + $0xe8] sm:$0xff]
      %v371 = vld [vmem:[%s308 + $0xf0] sm:$0xff]
      %v372 = vld [vmem:[%s308 + $0xf8] sm:$0xff]
      %v373 = vld [vmem:[%s313] sm:$0x3]
      %v375 = vlaneseq
      %v376 = vshrl.u32 %v375, 7
      %v377 = vsub.s32 0, %v376
      %v378 = vrot.slane %v373, %v377
      %v379 = vlaneseq
      %v380 = vshrl.u32 %v379, 7
      %v381 = vsub.s32 1, %v380
      %v382 = vrot.slane %v373, %v381
      %v387 = vunpack.c.l.b16 %v339
      %v388 = vunpack.c.h.b16 %v339
      %v389 = vunpack.c.l.b16 %v340
      %v390 = vunpack.c.h.b16 %v340
      %v391 = vpack.c.b16 %v389, %v387
      %v392 = vpack.c.b16 %v390, %v388
      %v427 = vunpack.c.l.b16 %v341
      %v428 = vunpack.c.h.b16 %v341
      %v429 = vunpack.c.l.b16 %v342
      %v430 = vunpack.c.h.b16 %v342
      %v431 = vunpack.c.l.b16 %v343
      %v432 = vunpack.c.h.b16 %v343
      %v433 = vunpack.c.l.b16 %v344
      %v434 = vunpack.c.h.b16 %v344
      %v435 = vunpack.c.l.b16 %v345
      %v436 = vunpack.c.h.b16 %v345
      %v437 = vunpack.c.l.b16 %v346
      %v438 = vunpack.c.h.b16 %v346
      %v439 = vunpack.c.l.b16 %v347
      %v440 = vunpack.c.h.b16 %v347
      %v441 = vunpack.c.l.b16 %v348
      %v442 = vunpack.c.h.b16 %v348
      %v443 = vunpack.c.l.b16 %v349
      %v444 = vunpack.c.h.b16 %v349
      %v445 = vunpack.c.l.b16 %v350
      %v446 = vunpack.c.h.b16 %v350
      %v447 = vunpack.c.l.b16 %v351
      %v448 = vunpack.c.h.b16 %v351
      %v449 = vunpack.c.l.b16 %v352
      %v450 = vunpack.c.h.b16 %v352
      %v451 = vunpack.c.l.b16 %v353
      %v452 = vunpack.c.h.b16 %v353
      %v453 = vunpack.c.l.b16 %v354
      %v454 = vunpack.c.h.b16 %v354
      %v455 = vunpack.c.l.b16 %v355
      %v456 = vunpack.c.h.b16 %v355
      %v457 = vunpack.c.l.b16 %v356
      %v458 = vunpack.c.h.b16 %v356
      %v459 = vunpack.c.l.b16 %v357
      %v460 = vunpack.c.h.b16 %v357
      %v461 = vunpack.c.l.b16 %v358
      %v462 = vunpack.c.h.b16 %v358
      %v463 = vunpack.c.l.b16 %v359
      %v464 = vunpack.c.h.b16 %v359
      %v465 = vunpack.c.l.b16 %v360
      %v466 = vunpack.c.h.b16 %v360
      %v467 = vunpack.c.l.b16 %v361
      %v468 = vunpack.c.h.b16 %v361
      %v469 = vunpack.c.l.b16 %v362
      %v470 = vunpack.c.h.b16 %v362
      %v471 = vunpack.c.l.b16 %v363
      %v472 = vunpack.c.h.b16 %v363
      %v473 = vunpack.c.l.b16 %v364
      %v474 = vunpack.c.h.b16 %v364
      %v475 = vunpack.c.l.b16 %v365
      %v476 = vunpack.c.h.b16 %v365
      %v477 = vunpack.c.l.b16 %v366
      %v478 = vunpack.c.h.b16 %v366
      %v479 = vunpack.c.l.b16 %v367
      %v480 = vunpack.c.h.b16 %v367
      %v481 = vunpack.c.l.b16 %v368
      %v482 = vunpack.c.h.b16 %v368
      %v483 = vunpack.c.l.b16 %v369
      %v484 = vunpack.c.h.b16 %v369
      %v485 = vunpack.c.l.b16 %v370
      %v486 = vunpack.c.h.b16 %v370
      %v487 = vunpack.c.l.b16 %v371
      %v488 = vunpack.c.h.b16 %v371
      %v489 = vunpack.c.l.b16 %v372
      %v490 = vunpack.c.h.b16 %v372
      %v491 = vpack.c.b16 %v429, %v427
      %v492 = vpack.c.b16 %v430, %v428
      %v493 = vpack.c.b16 %v433, %v431
      %v494 = vpack.c.b16 %v434, %v432
      %v495 = vpack.c.b16 %v437, %v435
      %v496 = vpack.c.b16 %v438, %v436
      %v497 = vpack.c.b16 %v441, %v439
      %v498 = vpack.c.b16 %v442, %v440
      %v499 = vpack.c.b16 %v445, %v443
      %v500 = vpack.c.b16 %v446, %v444
      %v501 = vpack.c.b16 %v449, %v447
      %v502 = vpack.c.b16 %v450, %v448
      %v503 = vpack.c.b16 %v453, %v451
      %v504 = vpack.c.b16 %v454, %v452
      %v505 = vpack.c.b16 %v457, %v455
      %v506 = vpack.c.b16 %v458, %v456
      %v507 = vpack.c.b16 %v461, %v459
      %v508 = vpack.c.b16 %v462, %v460
      %v509 = vpack.c.b16 %v465, %v463
      %v510 = vpack.c.b16 %v466, %v464
      %v511 = vpack.c.b16 %v469, %v467
      %v512 = vpack.c.b16 %v470, %v468
      %v513 = vpack.c.b16 %v473, %v471
      %v514 = vpack.c.b16 %v474, %v472
      %v515 = vpack.c.b16 %v477, %v475
      %v516 = vpack.c.b16 %v478, %v476
      %v517 = vpack.c.b16 %v481, %v479
      %v518 = vpack.c.b16 %v482, %v480
      %v519 = vpack.c.b16 %v485, %v483
      %v520 = vpack.c.b16 %v486, %v484
      %v521 = vpack.c.b16 %v489, %v487
      %v522 = vpack.c.b16 %v490, %v488
      %555 = vmatprep.subr.bf16.mxu0 %v492
      %556 = vmatpush1.bf16.msra.mxu0 %v491
      %557 = vmatprep.subr.bf16.mxu0 %v494
      %558 = vmatpush1.bf16.msra.mxu0 %v493
      %559 = vmatprep.subr.bf16.mxu0 %v496
      %560 = vmatpush1.bf16.msra.mxu0 %v495
      %561 = vmatprep.subr.bf16.mxu0 %v498
      %562 = vmatpush1.bf16.msra.mxu0 %v497
      %563 = vmatprep.subr.bf16.mxu0 %v500
      %564 = vmatpush1.bf16.msra.mxu0 %v499
      %565 = vmatprep.subr.bf16.mxu0 %v502
      %566 = vmatpush1.bf16.msra.mxu0 %v501
      %567 = vmatprep.subr.bf16.mxu0 %v504
      %568 = vmatpush1.bf16.msra.mxu0 %v503
      %569 = vmatprep.subr.bf16.mxu0 %v506
      %570 = vmatpush1.bf16.msra.mxu0 %v505
      %571 = vmatprep.subr.bf16.mxu0 %v508
      %572 = vmatpush1.bf16.msra.mxu0 %v507
      %573 = vmatprep.subr.bf16.mxu0 %v510
      %574 = vmatpush1.bf16.msra.mxu0 %v509
      %575 = vmatprep.subr.bf16.mxu0 %v512
      %576 = vmatpush1.bf16.msra.mxu0 %v511
      %577 = vmatprep.subr.bf16.mxu0 %v514
      %578 = vmatpush1.bf16.msra.mxu0 %v513
      %579 = vmatprep.subr.bf16.mxu0 %v516
      %580 = vmatpush1.bf16.msra.mxu0 %v515
      %581 = vmatprep.subr.bf16.mxu0 %v518
      %582 = vmatpush1.bf16.msra.mxu0 %v517
      %583 = vmatprep.subr.bf16.mxu0 %v520
      %584 = vmatpush1.bf16.msra.mxu0 %v519
      %585 = vmatprep.subr.bf16.mxu0 %v522
      %586 = vmatpush1.bf16.msra.mxu0 %v521
      %587 = vmatprep.mubr.bf16.mxu0 %v392
      %588 = vmatmul.mubr.bf16.gmra.mrb[0].mxu0 %v391
      %v589 = vpop.f32.mrb[0].mxu0
      %v590 = vadd.f32 %v378, %v589
      %v591 = vpop.f32.mrb[0].mxu0
      %v592 = vadd.f32 %v382, %v591
      %v593 = vpop.f32.mrb[0].mxu0
      %v594 = vadd.f32 %v378, %v593
      %v595 = vpop.f32.mrb[0].mxu0
      %v596 = vadd.f32 %v382, %v595
      %597 = vdwg.mxu0
      %v598 = vld [vmem:[%s324] sm:$0xff]
      %v599 = vld [vmem:[%s324 + $0x8] sm:$0xff]
      %v600 = vld [vmem:[%s324 + $0x10] sm:$0xff]
      %v601 = vld [vmem:[%s324 + $0x18] sm:$0xff]
      %s602 = sld [smem:[#allocation2]]
      %v603 = vstv %s602
      %v604 = vmul.f32 %v603, %v590
      %v605 = vmul.f32 %v603, %v592
      %v606 = vmul.f32 %v603, %v594
      %v607 = vmul.f32 %v603, %v596
      %v608 = vadd.f32 %v598, %v604
      %v609 = vadd.f32 %v599, %v605
      %v610 = vadd.f32 %v600, %v606
      %v611 = vadd.f32 %v601, %v607
      %612 = vst [vmem:[%s336] sm:$0xff] %v608
      %613 = vst [vmem:[%s336 + $0x8] sm:$0xff] %v609
      %614 = vst [vmem:[%s336 + $0x10] sm:$0xff] %v610
      %615 = vst [vmem:[%s336 + $0x18] sm:$0xff] %v611
      %s616 = smul.u32 2, %s21
      %s617 = smul.u32 2, %s22
      %p618 = scmp.lt.s32.totalorder %s616, 3
      %s619 = scalar_select %p618, %s616, 3
      %p620 = scmp.lt.s32.totalorder %s617, 1
      %s621 = scalar_select %p620, %s617, 1
      %s622 = smul.addr %s619, 2
      %s623 = sadd.s32 %s621, %s622
      %s624 = smul.addr %s623, 8
      %s625 = scalar_lea.vmem %s5, %s624
      // Predicated region
      $region41: #{mod_rztx_decoder_layer.10} parent=39 // pred_check
        %p626 = pneg %p176
      $region42: #{mod_rztx_decoder_layer.10} parent=39 // pred_check_branch
        %628 = sbr.rel (%p626) target = $region44
      $region43: #{mod_rztx_decoder_layer.10} parent=39 // pred_region
        %s629 = smul.u32 2, %s21
        %s630 = smul.u32 2, %s22
      $region44: #{mod_rztx_decoder_layer.10} parent=39 // pred_fallthru
        _
    $region40: #{mod_rztx_decoder_layer.10} parent=5 // pred_fallthru
      _
    %p631 = scmp.le.s32.totalorder 2, %s12
    // Predicated region
    $region45: #{mod_rztx_decoder_layer.10} parent=5 // pred_check
      %p632 = pneg %p631
    $region46: #{mod_rztx_decoder_layer.10} parent=5 // pred_check_branch
      %634 = sbr.rel (%p632) target = $region48
    $region47: #{mod_rztx_decoder_layer.10} parent=5 // pred_region
      %s635 = ssub.s32 %s12, 2
      // Predicated region
      $region49: #{mod_rztx_decoder_layer.10} parent=47 // pred_check
        %p636 = pneg %p182
      $region50: #{mod_rztx_decoder_layer.10} parent=47 // pred_check_branch
        %638 = sbr.rel (%p636) target = $region52
      $region51: #{mod_rztx_decoder_layer.10} parent=47 // pred_region
        %s639 = smul.u32 2, %s23
        %s640 = smul.u32 2, %s24
        %p641 = scmp.lt.s32.totalorder %s639, 3
        %s642 = scalar_select %p641, %s639, 3
        %p643 = scmp.lt.s32.totalorder %s640, 1
        %s644 = scalar_select %p643, %s640, 1
        %s645 = smul.addr %s642, 2
        %s646 = sadd.s32 %s644, %s645
        %s647 = smul.addr %s646, 8
        %s648 = scalar_lea.vmem %s5, %s647
      $region52: #{mod_rztx_decoder_layer.10} parent=47 // pred_fallthru
        _
    $region48: #{mod_rztx_decoder_layer.10} parent=5 // pred_fallthru
      _
  $region6: #{mod_rztx_decoder_layer.10} parent=0 // loop_footer
    %s16 = sadd.s32 1, %s12
  $region7: #{mod_rztx_decoder_layer.10} parent=0 // loop_footer_branch
    %11 = sbr.rel target = $region3
  $region8: #{mod_rztx_decoder_layer.10} parent=0 // loop_exit
    _

// kernel: mod_rztx_decoder_layer.11
$region0: #{mod_rztx_decoder_layer.11}
  #allocation0 [shape = 'u32[]', space=smem, size = 0x4, offset = 0x4, fixed_abs, tag = 'smem constant byte address 0x4 - core index']
  #allocation1 [shape = 'u32[144,128]{1,0:T(1,128)}', space=vmem, size = 0x12000, scoped, tag = 'internal scratch']
  %s0 = inlined_call_operand.vmem [shape: f32[32,256], index: 0, kind: input, shape index: {}]
  %s1 = inlined_call_operand.vmem [shape: bf16[256,256], index: 1, kind: input, shape index: {}]
  %s2 = inlined_call_operand.vmem [shape: f32[1,256], index: 2, kind: input, shape index: {}]
  %s3 = inlined_call_operand.vmem [shape: bf16[32,256], index: 3, kind: output, shape index: {}]
  %s4 = sld [smem:[#allocation0]]
  $region45: #{mod_rztx_decoder_layer.11} parent=0
    _
  %s6 = ssub.s32 1, %s4
  %s7 = scalar_select 0, %s6, %s4
  loop: start=0, step=1, limit=4
  $region2: #{mod_rztx_decoder_layer.11} parent=0 // loop_pre_header
    _
  $region3: #{mod_rztx_decoder_layer.11} parent=0 // loop_header
    %s9 = sphi 0, %s13
    %p10 = scmp.ge.s32.totalorder %s9, 4
    %s16 = sphi 0, %s28
    %s17 = sphi 0, %s24
    %s18 = sphi 0, %s16
    %s19 = sphi 0, %s17
    %s20 = sphi 0, %s18
    %s21 = sphi 0, %s19
    %s31 = sphi 0, %s33
    %s34 = sphi 0, %s31
    %s35 = sphi 0, %s34
    %s51 = sphi 0, %s35
    %s57 = sphi 0, %s59
    %s60 = sphi 0, %s57
    %s61 = sphi 0, %s60
    %s77 = sphi 0, %s61
    %s83 = sphi 0, %s85
    %s86 = sphi 0, %s83
    %s87 = sphi 0, %s86
    %s103 = sphi 0, %s87
    %s111 = sphi 0, %s113
    %s114 = sphi 0, %s111
    %s115 = sphi 0, %s114
    %s131 = sphi 0, %s115
  $region4: #{mod_rztx_decoder_layer.11} parent=0 // loop_header_branch
    %12 = sbr.rel (%p10) target = $region8
  $region5: #{mod_rztx_decoder_layer.11} parent=0 // loop_body
    %s14 = ssub.s32 %s9, 1
    %s15 = ssub.s32 %s9, 2
    %s22 = sadd.s32 1, %s17
    %p23 = scmp.ge.s32.totalorder %s22, 1
    %s24 = scalar_select %p23, 0, %s22
    %s25 = sadd.s32 1, %s16
    %s26 = scalar_select %p23, %s25, %s16
    %p27 = scmp.ge.s32.totalorder %s26, 2
    %s28 = scalar_select %p27, 0, %s26
    %s29 = ssub.s32 %s16, %s28
    %p30 = scmp.eq.s32.totalorder %s29, 0
    %s32 = sadd.s32 %s31, 1
    %s33 = scalar_select %p30, %s31, %s32
    %p36 = pneg %p30
    %p37 = scmp.eq.s32.totalorder %s9, 1
    %p38 = por %p36, %p37
    %p39 = scmp.ne.s32.totalorder %s31, %s34
    %p40 = scmp.eq.s32.totalorder %s9, 0
    %p41 = por %p39, %p40
    %p42 = scmp.ne.s32.totalorder %s31, %s34
    %p43 = scmp.eq.s32.totalorder %s14, 1
    %p44 = por %p42, %p43
    %p45 = scmp.ne.s32.totalorder %s34, %s35
    %p46 = scmp.eq.s32.totalorder %s14, 0
    %p47 = por %p45, %p46
    %p48 = scmp.ne.s32.totalorder %s34, %s35
    %p49 = scmp.eq.s32.totalorder %s15, 1
    %p50 = por %p48, %p49
    %p52 = scmp.ne.s32.totalorder %s35, %s51
    %p53 = scmp.eq.s32.totalorder %s15, 0
    %p54 = por %p52, %p53
    %s55 = ssub.s32 %s17, %s24
    %p56 = scmp.eq.s32.totalorder %s55, 0
    %s58 = sadd.s32 %s57, 1
    %s59 = scalar_select %p56, %s57, %s58
    %p62 = pneg %p56
    %p63 = scmp.eq.s32.totalorder %s9, 1
    %p64 = por %p62, %p63
    %p65 = scmp.ne.s32.totalorder %s57, %s60
    %p66 = scmp.eq.s32.totalorder %s9, 0
    %p67 = por %p65, %p66
    %p68 = scmp.ne.s32.totalorder %s57, %s60
    %p69 = scmp.eq.s32.totalorder %s14, 1
    %p70 = por %p68, %p69
    %p71 = scmp.ne.s32.totalorder %s60, %s61
    %p72 = scmp.eq.s32.totalorder %s14, 0
    %p73 = por %p71, %p72
    %p74 = scmp.ne.s32.totalorder %s60, %s61
    %p75 = scmp.eq.s32.totalorder %s15, 1
    %p76 = por %p74, %p75
    %p78 = scmp.ne.s32.totalorder %s61, %s77
    %p79 = scmp.eq.s32.totalorder %s15, 0
    %p80 = por %p78, %p79
    %s81 = ssub.s32 %s17, %s24
    %p82 = scmp.eq.s32.totalorder %s81, 0
    %s84 = sadd.s32 %s83, 1
    %s85 = scalar_select %p82, %s83, %s84
    %p88 = pneg %p82
    %p89 = scmp.eq.s32.totalorder %s9, 1
    %p90 = por %p88, %p89
    %p91 = scmp.ne.s32.totalorder %s83, %s86
    %p92 = scmp.eq.s32.totalorder %s9, 0
    %p93 = por %p91, %p92
    %p94 = scmp.ne.s32.totalorder %s83, %s86
    %p95 = scmp.eq.s32.totalorder %s14, 1
    %p96 = por %p94, %p95
    %p97 = scmp.ne.s32.totalorder %s86, %s87
    %p98 = scmp.eq.s32.totalorder %s14, 0
    %p99 = por %p97, %p98
    %p100 = scmp.ne.s32.totalorder %s86, %s87
    %p101 = scmp.eq.s32.totalorder %s15, 1
    %p102 = por %p100, %p101
    %p104 = scmp.ne.s32.totalorder %s87, %s103
    %p105 = scmp.eq.s32.totalorder %s15, 0
    %p106 = por %p104, %p105
    %s107 = ssub.s32 %s16, %s28
    %s108 = ssub.s32 %s17, %s24
    %s109 = sor.u32 %s107, %s108
    %p110 = scmp.eq.s32.totalorder %s109, 0
    %s112 = sadd.s32 %s111, 1
    %s113 = scalar_select %p110, %s111, %s112
    %p116 = pneg %p110
    %p117 = scmp.eq.s32.totalorder %s9, 1
    %p118 = por %p116, %p117
    %p119 = scmp.ne.s32.totalorder %s111, %s114
    %p120 = scmp.eq.s32.totalorder %s9, 0
    %p121 = por %p119, %p120
    %p122 = scmp.ne.s32.totalorder %s111, %s114
    %p123 = scmp.eq.s32.totalorder %s14, 1
    %p124 = por %p122, %p123
    %p125 = scmp.ne.s32.totalorder %s114, %s115
    %p126 = scmp.eq.s32.totalorder %s14, 0
    %p127 = por %p125, %p126
    %p128 = scmp.ne.s32.totalorder %s114, %s115
    %p129 = scmp.eq.s32.totalorder %s15, 1
    %p130 = por %p128, %p129
    %p132 = scmp.ne.s32.totalorder %s115, %s131
    %p133 = scmp.eq.s32.totalorder %s15, 0
    %p134 = por %p132, %p133
    %p135 = scmp.le.s32.totalorder 1, %s9
    %p136 = scmp.lt.s32.totalorder %s9, 3
    %p137 = pnand %p135, %p136
    %p138 = pneg %p137
    // Predicated region
    $region9: #{mod_rztx_decoder_layer.11} parent=5 // pred_check
      _
    $region10: #{mod_rztx_decoder_layer.11} parent=5 // pred_check_branch
      %140 = sbr.rel (%p137) target = $region12
    $region11: #{mod_rztx_decoder_layer.11} parent=5 // pred_region
      %s141 = ssub.s32 %s9, 1
      // Predicated region
      $region13: #{mod_rztx_decoder_layer.11} parent=11 // pred_check
        %p142 = pneg %p73
      $region14: #{mod_rztx_decoder_layer.11} parent=11 // pred_check_branch
        %144 = sbr.rel (%p142) target = $region16
      $region15: #{mod_rztx_decoder_layer.11} parent=11 // pred_region
        %s145 = smul.u32 2, %s19
        %p146 = scmp.lt.s32.totalorder %s145, 1
        %s147 = scalar_select %p146, %s145, 1
        %s148 = smul.addr %s147, 4
        %s149 = scalar_lea.vmem %s1, %s148
        %s150 = smul.u32 2, %s19
      $region16: #{mod_rztx_decoder_layer.11} parent=11 // pred_fallthru
        _
      // Predicated region
      $region17: #{mod_rztx_decoder_layer.11} parent=11 // pred_check
        %p151 = pneg %p99
      $region18: #{mod_rztx_decoder_layer.11} parent=11 // pred_check_branch
        %153 = sbr.rel (%p151) target = $region20
      $region19: #{mod_rztx_decoder_layer.11} parent=11 // pred_region
        %s154 = smul.u32 2, %s19
        %p155 = scmp.lt.s32.totalorder %s154, 1
        %s156 = scalar_select %p155, %s154, 1
        %s157 = scalar_lea.vmem %s2, %s156
        %s158 = smul.u32 2, %s19
      $region20: #{mod_rztx_decoder_layer.11} parent=11 // pred_fallthru
        _
    $region12: #{mod_rztx_decoder_layer.11} parent=5 // pred_fallthru
      _
    %p159 = scmp.lt.s32.totalorder %s9, 2
    // Predicated region
    $region21: #{mod_rztx_decoder_layer.11} parent=5 // pred_check
      %p160 = pneg %p159
    $region22: #{mod_rztx_decoder_layer.11} parent=5 // pred_check_branch
      %162 = sbr.rel (%p160) target = $region24
    $region23: #{mod_rztx_decoder_layer.11} parent=5 // pred_region
      // Predicated region
      $region25: #{mod_rztx_decoder_layer.11} parent=23 // pred_check
        %p163 = pneg %p41
      $region26: #{mod_rztx_decoder_layer.11} parent=23 // pred_check_branch
        %165 = sbr.rel (%p163) target = $region28
      $region27: #{mod_rztx_decoder_layer.11} parent=23 // pred_region
        %s166 = smul.u32 2, %s16
        %p167 = scmp.lt.s32.totalorder %s166, 3
        %s168 = scalar_select %p167, %s166, 3
        %s169 = smul.addr %s168, 2
        %s170 = smul.addr %s169, 8
        %s171 = scalar_lea.vmem %s0, %s170
        %s172 = smul.u32 2, %s16
      $region28: #{mod_rztx_decoder_layer.11} parent=23 // pred_fallthru
        _
    $region24: #{mod_rztx_decoder_layer.11} parent=5 // pred_fallthru
      _
    %p173 = scmp.le.s32.totalorder 1, %s9
    %p174 = scmp.lt.s32.totalorder %s9, 3
    %p175 = pnand %p173, %p174
    %p176 = pneg %p175
    // Predicated region
    $region29: #{mod_rztx_decoder_layer.11} parent=5 // pred_check
      _
    $region30: #{mod_rztx_decoder_layer.11} parent=5 // pred_check_branch
      %178 = sbr.rel (%p175) target = $region32
    $region31: #{mod_rztx_decoder_layer.11} parent=5 // pred_region
      %s179 = ssub.s32 %s9, 1
      %s180 = smul.u32 2, %s18
      %p181 = scmp.lt.s32.totalorder %s180, 3
      %s182 = scalar_select %p181, %s180, 3
      %s183 = smul.addr %s182, 2
      %s184 = smul.addr %s183, 8
      %s185 = scalar_lea.vmem %s0, %s184
      %p186 = pneg %p47
      %p187 = pneg %p44
      %s188 = smul.u32 2, %s19
      %p189 = scmp.lt.s32.totalorder %s188, 1
      %s190 = scalar_select %p189, %s188, 1
      %s191 = smul.addr %s190, 4
      %s192 = scalar_lea.vmem %s1, %s191
      %p193 = pneg %p73
      %p194 = pneg %p70
      %s195 = smul.u32 2, %s19
      %p196 = scmp.lt.s32.totalorder %s195, 1
      %s197 = scalar_select %p196, %s195, 1
      %s198 = scalar_lea.vmem %s2, %s197
      %p199 = pneg %p99
      %p200 = pneg %p96
      %p201 = pneg %p127
      %p202 = pneg %p124
      %s203 = smul.u32 2, %s18
      %s204 = smul.u32 2, %s19
      %p205 = scmp.lt.s32.totalorder %s203, 3
      %s206 = scalar_select %p205, %s203, 3
      %p207 = scmp.lt.s32.totalorder %s204, 1
      %s208 = scalar_select %p207, %s204, 1
      %s209 = smul.addr %s206, 2
      %s210 = sadd.s32 %s208, %s209
      %s211 = smul.addr %s210, 4
      %s212 = scalar_lea.vmem %s3, %s211
      %s213 = smul.u32 2, %s18
      %p214 = scmp.lt.s32.totalorder %s213, 3
      %s215 = scalar_select %p214, %s213, 3
      %s216 = smul.addr %s215, 2
      %s217 = smul.addr %s216, 8
      %s218 = scalar_lea.vmem %s0, %s217
      %s219 = smul.u32 2, %s18
      %s220 = smul.u32 2, %s19
      %p221 = scmp.lt.s32.totalorder %s220, 1
      %s222 = scalar_select %p221, %s220, 1
      %s223 = smul.addr %s222, 4
      %s224 = scalar_lea.vmem %s1, %s223
      %s225 = smul.u32 2, %s19
      %s226 = smul.u32 2, %s19
      %p227 = scmp.lt.s32.totalorder %s226, 1
      %s228 = scalar_select %p227, %s226, 1
      %s229 = scalar_lea.vmem %s2, %s228
      %s230 = smul.u32 2, %s19
      %s231 = smul.u32 2, %s18
      %s232 = smul.u32 2, %s19
      %p233 = scmp.lt.s32.totalorder %s231, 3
      %s234 = scalar_select %p233, %s231, 3
      %p235 = scmp.lt.s32.totalorder %s232, 1
      %s236 = scalar_select %p235, %s232, 1
      %s237 = smul.addr %s234, 2
      %s238 = sadd.s32 %s236, %s237
      %s239 = smul.addr %s238, 4
      %s240 = scalar_lea.vmem %s3, %s239
      %s241 = smul.u32 2, %s18
      %s242 = smul.u32 2, %s19
      %v243 = vld [vmem:[%s218] sm:$0xff]
      %v244 = vld [vmem:[%s218 + $0x8] sm:$0xff]
      %v245 = vld [vmem:[%s218 + $0x10] sm:$0xff]
      %v246 = vld [vmem:[%s218 + $0x18] sm:$0xff]
      %v247 = vpack.c.bf16 %v245, %v243
      %v248 = vpack.c.bf16 %v246, %v244
      %v249 = vld [vmem:[%s224] sm:$0xff]
      %v250 = vld [vmem:[%s224 + $0x8] sm:$0xff]
      %v251 = vld [vmem:[%s224 + $0x10] sm:$0xff]
      %v252 = vld [vmem:[%s224 + $0x18] sm:$0xff]
      %v253 = vld [vmem:[%s224 + $0x20] sm:$0xff]
      %v254 = vld [vmem:[%s224 + $0x28] sm:$0xff]
      %v255 = vld [vmem:[%s224 + $0x30] sm:$0xff]
      %v256 = vld [vmem:[%s224 + $0x38] sm:$0xff]
      %v257 = vld [vmem:[%s224 + $0x40] sm:$0xff]
      %v258 = vld [vmem:[%s224 + $0x48] sm:$0xff]
      %v259 = vld [vmem:[%s224 + $0x50] sm:$0xff]
      %v260 = vld [vmem:[%s224 + $0x58] sm:$0xff]
      %v261 = vld [vmem:[%s224 + $0x60] sm:$0xff]
      %v262 = vld [vmem:[%s224 + $0x68] sm:$0xff]
      %v263 = vld [vmem:[%s224 + $0x70] sm:$0xff]
      %v264 = vld [vmem:[%s224 + $0x78] sm:$0xff]
      %v265 = vld [vmem:[%s224 + $0x80] sm:$0xff]
      %v266 = vld [vmem:[%s224 + $0x88] sm:$0xff]
      %v267 = vld [vmem:[%s224 + $0x90] sm:$0xff]
      %v268 = vld [vmem:[%s224 + $0x98] sm:$0xff]
      %v269 = vld [vmem:[%s224 + $0xa0] sm:$0xff]
      %v270 = vld [vmem:[%s224 + $0xa8] sm:$0xff]
      %v271 = vld [vmem:[%s224 + $0xb0] sm:$0xff]
      %v272 = vld [vmem:[%s224 + $0xb8] sm:$0xff]
      %v273 = vld [vmem:[%s224 + $0xc0] sm:$0xff]
      %v274 = vld [vmem:[%s224 + $0xc8] sm:$0xff]
      %v275 = vld [vmem:[%s224 + $0xd0] sm:$0xff]
      %v276 = vld [vmem:[%s224 + $0xd8] sm:$0xff]
      %v277 = vld [vmem:[%s224 + $0xe0] sm:$0xff]
      %v278 = vld [vmem:[%s224 + $0xe8] sm:$0xff]
      %v279 = vld [vmem:[%s224 + $0xf0] sm:$0xff]
      %v280 = vld [vmem:[%s224 + $0xf8] sm:$0xff]
      %v281 = vld [vmem:[%s229] sm:$0x3]
      %v283 = vlaneseq
      %v284 = vshrl.u32 %v283, 7
      %v285 = vsub.s32 0, %v284
      %v286 = vrot.slane %v281, %v285
      %v287 = vlaneseq
      %v288 = vshrl.u32 %v287, 7
      %v289 = vsub.s32 1, %v288
      %v290 = vrot.slane %v281, %v289
      %v325 = vunpack.c.l.b16 %v249
      %v326 = vunpack.c.h.b16 %v249
      %v327 = vunpack.c.l.b16 %v250
      %v328 = vunpack.c.h.b16 %v250
      %v329 = vunpack.c.l.b16 %v251
      %v330 = vunpack.c.h.b16 %v251
      %v331 = vunpack.c.l.b16 %v252
      %v332 = vunpack.c.h.b16 %v252
      %v333 = vunpack.c.l.b16 %v253
      %v334 = vunpack.c.h.b16 %v253
      %v335 = vunpack.c.l.b16 %v254
      %v336 = vunpack.c.h.b16 %v254
      %v337 = vunpack.c.l.b16 %v255
      %v338 = vunpack.c.h.b16 %v255
      %v339 = vunpack.c.l.b16 %v256
      %v340 = vunpack.c.h.b16 %v256
      %v341 = vunpack.c.l.b16 %v257
      %v342 = vunpack.c.h.b16 %v257
      %v343 = vunpack.c.l.b16 %v258
      %v344 = vunpack.c.h.b16 %v258
      %v345 = vunpack.c.l.b16 %v259
      %v346 = vunpack.c.h.b16 %v259
      %v347 = vunpack.c.l.b16 %v260
      %v348 = vunpack.c.h.b16 %v260
      %v349 = vunpack.c.l.b16 %v261
      %v350 = vunpack.c.h.b16 %v261
      %v351 = vunpack.c.l.b16 %v262
      %v352 = vunpack.c.h.b16 %v262
      %v353 = vunpack.c.l.b16 %v263
      %v354 = vunpack.c.h.b16 %v263
      %v355 = vunpack.c.l.b16 %v264
      %v356 = vunpack.c.h.b16 %v264
      %v357 = vunpack.c.l.b16 %v265
      %v358 = vunpack.c.h.b16 %v265
      %v359 = vunpack.c.l.b16 %v266
      %v360 = vunpack.c.h.b16 %v266
      %v361 = vunpack.c.l.b16 %v267
      %v362 = vunpack.c.h.b16 %v267
      %v363 = vunpack.c.l.b16 %v268
      %v364 = vunpack.c.h.b16 %v268
      %v365 = vunpack.c.l.b16 %v269
      %v366 = vunpack.c.h.b16 %v269
      %v367 = vunpack.c.l.b16 %v270
      %v368 = vunpack.c.h.b16 %v270
      %v369 = vunpack.c.l.b16 %v271
      %v370 = vunpack.c.h.b16 %v271
      %v371 = vunpack.c.l.b16 %v272
      %v372 = vunpack.c.h.b16 %v272
      %v373 = vunpack.c.l.b16 %v273
      %v374 = vunpack.c.h.b16 %v273
      %v375 = vunpack.c.l.b16 %v274
      %v376 = vunpack.c.h.b16 %v274
      %v377 = vunpack.c.l.b16 %v275
      %v378 = vunpack.c.h.b16 %v275
      %v379 = vunpack.c.l.b16 %v276
      %v380 = vunpack.c.h.b16 %v276
      %v381 = vunpack.c.l.b16 %v277
      %v382 = vunpack.c.h.b16 %v277
      %v383 = vunpack.c.l.b16 %v278
      %v384 = vunpack.c.h.b16 %v278
      %v385 = vunpack.c.l.b16 %v279
      %v386 = vunpack.c.h.b16 %v279
      %v387 = vunpack.c.l.b16 %v280
      %v388 = vunpack.c.h.b16 %v280
      %v389 = vpack.c.b16 %v327, %v325
      %v390 = vpack.c.b16 %v328, %v326
      %v391 = vpack.c.b16 %v331, %v329
      %v392 = vpack.c.b16 %v332, %v330
      %v393 = vpack.c.b16 %v335, %v333
      %v394 = vpack.c.b16 %v336, %v334
      %v395 = vpack.c.b16 %v339, %v337
      %v396 = vpack.c.b16 %v340, %v338
      %v397 = vpack.c.b16 %v343, %v341
      %v398 = vpack.c.b16 %v344, %v342
      %v399 = vpack.c.b16 %v347, %v345
      %v400 = vpack.c.b16 %v348, %v346
      %v401 = vpack.c.b16 %v351, %v349
      %v402 = vpack.c.b16 %v352, %v350
      %v403 = vpack.c.b16 %v355, %v353
      %v404 = vpack.c.b16 %v356, %v354
      %v405 = vpack.c.b16 %v359, %v357
      %v406 = vpack.c.b16 %v360, %v358
      %v407 = vpack.c.b16 %v363, %v361
      %v408 = vpack.c.b16 %v364, %v362
      %v409 = vpack.c.b16 %v367, %v365
      %v410 = vpack.c.b16 %v368, %v366
      %v411 = vpack.c.b16 %v371, %v369
      %v412 = vpack.c.b16 %v372, %v370
      %v413 = vpack.c.b16 %v375, %v373
      %v414 = vpack.c.b16 %v376, %v374
      %v415 = vpack.c.b16 %v379, %v377
      %v416 = vpack.c.b16 %v380, %v378
      %v417 = vpack.c.b16 %v383, %v381
      %v418 = vpack.c.b16 %v384, %v382
      %v419 = vpack.c.b16 %v387, %v385
      %v420 = vpack.c.b16 %v388, %v386
      %453 = vmatprep.subr.bf16.mxu0 %v390
      %454 = vmatpush1.bf16.msra.mxu0 %v389
      %455 = vmatprep.subr.bf16.mxu0 %v392
      %456 = vmatpush1.bf16.msra.mxu0 %v391
      %457 = vmatprep.subr.bf16.mxu0 %v394
      %458 = vmatpush1.bf16.msra.mxu0 %v393
      %459 = vmatprep.subr.bf16.mxu0 %v396
      %460 = vmatpush1.bf16.msra.mxu0 %v395
      %461 = vmatprep.subr.bf16.mxu0 %v398
      %462 = vmatpush1.bf16.msra.mxu0 %v397
      %463 = vmatprep.subr.bf16.mxu0 %v400
      %464 = vmatpush1.bf16.msra.mxu0 %v399
      %465 = vmatprep.subr.bf16.mxu0 %v402
      %466 = vmatpush1.bf16.msra.mxu0 %v401
      %467 = vmatprep.subr.bf16.mxu0 %v404
      %468 = vmatpush1.bf16.msra.mxu0 %v403
      %469 = vmatprep.subr.bf16.mxu0 %v406
      %470 = vmatpush1.bf16.msra.mxu0 %v405
      %471 = vmatprep.subr.bf16.mxu0 %v408
      %472 = vmatpush1.bf16.msra.mxu0 %v407
      %473 = vmatprep.subr.bf16.mxu0 %v410
      %474 = vmatpush1.bf16.msra.mxu0 %v409
      %475 = vmatprep.subr.bf16.mxu0 %v412
      %476 = vmatpush1.bf16.msra.mxu0 %v411
      %477 = vmatprep.subr.bf16.mxu0 %v414
      %478 = vmatpush1.bf16.msra.mxu0 %v413
      %479 = vmatprep.subr.bf16.mxu0 %v416
      %480 = vmatpush1.bf16.msra.mxu0 %v415
      %481 = vmatprep.subr.bf16.mxu0 %v418
      %482 = vmatpush1.bf16.msra.mxu0 %v417
      %483 = vmatprep.subr.bf16.mxu0 %v420
      %484 = vmatpush1.bf16.msra.mxu0 %v419
      %485 = vmatprep.mubr.bf16.mxu0 %v248
      %486 = vmatmul.mubr.bf16.gmra.mrb[0].mxu0 %v247
      %v487 = vpop.f32.mrb[0].mxu0
      %v488 = vadd.f32 %v286, %v487
      %v489 = vpop.f32.mrb[0].mxu0
      %v490 = vadd.f32 %v290, %v489
      %v491 = vpop.f32.mrb[0].mxu0
      %v492 = vadd.f32 %v286, %v491
      %v493 = vpop.f32.mrb[0].mxu0
      %v494 = vadd.f32 %v290, %v493
      %495 = vdwg.mxu0
      %v496 = vpack.c.bf16 %v492, %v488
      %v497 = vpack.c.bf16 %v494, %v490
      %v500 = vunpack.c.l.b16 %v496
      %v501 = vunpack.c.l.b16 %v497
      %v502 = vunpack.c.h.b16 %v496
      %v503 = vunpack.c.h.b16 %v497
      %v504 = vpack.c.b16 %v501, %v500
      %v505 = vpack.c.b16 %v503, %v502
      %508 = vst [vmem:[%s240] sm:$0xff] %v504
      %509 = vst [vmem:[%s240 + $0x8] sm:$0xff] %v505
      %s510 = smul.u32 2, %s18
      %s511 = smul.u32 2, %s19
      %p512 = scmp.lt.s32.totalorder %s510, 3
      %s513 = scalar_select %p512, %s510, 3
      %p514 = scmp.lt.s32.totalorder %s511, 1
      %s515 = scalar_select %p514, %s511, 1
      %s516 = smul.addr %s513, 2
      %s517 = sadd.s32 %s515, %s516
      %s518 = smul.addr %s517, 4
      %s519 = scalar_lea.vmem %s3, %s518
      // Predicated region
      $region33: #{mod_rztx_decoder_layer.11} parent=31 // pred_check
        %p520 = pneg %p124
      $region34: #{mod_rztx_decoder_layer.11} parent=31 // pred_check_branch
        %522 = sbr.rel (%p520) target = $region36
      $region35: #{mod_rztx_decoder_layer.11} parent=31 // pred_region
        %s523 = smul.u32 2, %s18
        %s524 = smul.u32 2, %s19
      $region36: #{mod_rztx_decoder_layer.11} parent=31 // pred_fallthru
        _
    $region32: #{mod_rztx_decoder_layer.11} parent=5 // pred_fallthru
      _
    %p525 = scmp.le.s32.totalorder 2, %s9
    // Predicated region
    $region37: #{mod_rztx_decoder_layer.11} parent=5 // pred_check
      %p526 = pneg %p525
    $region38: #{mod_rztx_decoder_layer.11} parent=5 // pred_check_branch
      %528 = sbr.rel (%p526) target = $region40
    $region39: #{mod_rztx_decoder_layer.11} parent=5 // pred_region
      %s529 = ssub.s32 %s9, 2
      // Predicated region
      $region41: #{mod_rztx_decoder_layer.11} parent=39 // pred_check
        %p530 = pneg %p130
      $region42: #{mod_rztx_decoder_layer.11} parent=39 // pred_check_branch
        %532 = sbr.rel (%p530) target = $region44
      $region43: #{mod_rztx_decoder_layer.11} parent=39 // pred_region
        %s533 = smul.u32 2, %s20
        %s534 = smul.u32 2, %s21
        %p535 = scmp.lt.s32.totalorder %s533, 3
        %s536 = scalar_select %p535, %s533, 3
        %p537 = scmp.lt.s32.totalorder %s534, 1
        %s538 = scalar_select %p537, %s534, 1
        %s539 = smul.addr %s536, 2
        %s540 = sadd.s32 %s538, %s539
        %s541 = smul.addr %s540, 4
        %s542 = scalar_lea.vmem %s3, %s541
      $region44: #{mod_rztx_decoder_layer.11} parent=39 // pred_fallthru
        _
    $region40: #{mod_rztx_decoder_layer.11} parent=5 // pred_fallthru
      _
  $region6: #{mod_rztx_decoder_layer.11} parent=0 // loop_footer
    %s13 = sadd.s32 1, %s9
  $region7: #{mod_rztx_decoder_layer.11} parent=0 // loop_footer_branch
    %8 = sbr.rel target = $region3
  $region8: #{mod_rztx_decoder_layer.11} parent=0 // loop_exit
    _

// kernel: mod_rztx_decoder_layer.9
$region0: #{mod_rztx_decoder_layer.9}
  #allocation0 [shape = 'u32[]', space=smem, size = 0x4, offset = 0x4, fixed_abs, tag = 'smem constant byte address 0x4 - core index']
  #allocation1 [shape = 'u32[144,128]{1,0:T(1,128)}', space=vmem, size = 0x12000, scoped, tag = 'internal scratch']
  %s0 = inlined_call_operand.vmem [shape: bf16[2,2,16,128], index: 0, kind: input, shape index: {}]
  %s1 = inlined_call_operand.vmem [shape: bf16[2,2,128,128], index: 1, kind: input, shape index: {}]
  %s2 = inlined_call_operand.vmem [shape: bf16[2,2,128,128], index: 2, kind: input, shape index: {}]
  %s3 = inlined_call_operand.vmem [shape: f32[2,16,128], index: 3, kind: input, shape index: {}]
  %s4 = inlined_call_operand.vmem [shape: bf16[2,2,16,128], index: 4, kind: output, shape index: {}]
  %s5 = sld [smem:[#allocation0]]
  $region49: #{mod_rztx_decoder_layer.9} parent=0
    _
  %s7 = ssub.s32 1, %s5
  %s8 = scalar_select 0, %s7, %s5
  loop: start=0, step=1, limit=4
  $region2: #{mod_rztx_decoder_layer.9} parent=0 // loop_pre_header
    _
  $region3: #{mod_rztx_decoder_layer.9} parent=0 // loop_header
    %s10 = sphi 0, %s14
    %p11 = scmp.ge.s32.totalorder %s10, 4
    %s20 = sphi 0, %s22
    %s23 = sphi 0, %s20
    %s24 = sphi 0, %s23
    %s40 = sphi 0, %s24
    %s46 = sphi 0, %s48
    %s49 = sphi 0, %s46
    %s50 = sphi 0, %s49
    %s66 = sphi 0, %s50
    %s72 = sphi 0, %s74
    %s75 = sphi 0, %s72
    %s76 = sphi 0, %s75
    %s92 = sphi 0, %s76
    %s98 = sphi 0, %s100
    %s101 = sphi 0, %s98
    %s102 = sphi 0, %s101
    %s118 = sphi 0, %s102
    %s124 = sphi 0, %s126
    %s127 = sphi 0, %s124
    %s128 = sphi 0, %s127
    %s144 = sphi 0, %s128
  $region4: #{mod_rztx_decoder_layer.9} parent=0 // loop_header_branch
    %13 = sbr.rel (%p11) target = $region8
  $region5: #{mod_rztx_decoder_layer.9} parent=0 // loop_body
    %s15 = ssub.s32 %s10, 1
    %s16 = ssub.s32 %s10, 2
    %s17 = sadd.s32 %s10, 1
    %s18 = ssub.s32 %s10, %s17
    %p19 = scmp.eq.s32.totalorder %s18, 0
    %s21 = sadd.s32 %s20, 1
    %s22 = scalar_select %p19, %s20, %s21
    %p25 = pneg %p19
    %p26 = scmp.eq.s32.totalorder %s10, 1
    %p27 = por %p25, %p26
    %p28 = scmp.ne.s32.totalorder %s20, %s23
    %p29 = scmp.eq.s32.totalorder %s10, 0
    %p30 = por %p28, %p29
    %p31 = scmp.ne.s32.totalorder %s20, %s23
    %p32 = scmp.eq.s32.totalorder %s15, 1
    %p33 = por %p31, %p32
    %p34 = scmp.ne.s32.totalorder %s23, %s24
    %p35 = scmp.eq.s32.totalorder %s15, 0
    %p36 = por %p34, %p35
    %p37 = scmp.ne.s32.totalorder %s23, %s24
    %p38 = scmp.eq.s32.totalorder %s16, 1
    %p39 = por %p37, %p38
    %p41 = scmp.ne.s32.totalorder %s24, %s40
    %p42 = scmp.eq.s32.totalorder %s16, 0
    %p43 = por %p41, %p42
    %s44 = ssub.s32 %s10, %s17
    %p45 = scmp.eq.s32.totalorder %s44, 0
    %s47 = sadd.s32 %s46, 1
    %s48 = scalar_select %p45, %s46, %s47
    %p51 = pneg %p45
    %p52 = scmp.eq.s32.totalorder %s10, 1
    %p53 = por %p51, %p52
    %p54 = scmp.ne.s32.totalorder %s46, %s49
    %p55 = scmp.eq.s32.totalorder %s10, 0
    %p56 = por %p54, %p55
    %p57 = scmp.ne.s32.totalorder %s46, %s49
    %p58 = scmp.eq.s32.totalorder %s15, 1
    %p59 = por %p57, %p58
    %p60 = scmp.ne.s32.totalorder %s49, %s50
    %p61 = scmp.eq.s32.totalorder %s15, 0
    %p62 = por %p60, %p61
    %p63 = scmp.ne.s32.totalorder %s49, %s50
    %p64 = scmp.eq.s32.totalorder %s16, 1
    %p65 = por %p63, %p64
    %p67 = scmp.ne.s32.totalorder %s50, %s66
    %p68 = scmp.eq.s32.totalorder %s16, 0
    %p69 = por %p67, %p68
    %s70 = ssub.s32 %s10, %s17
    %p71 = scmp.eq.s32.totalorder %s70, 0
    %s73 = sadd.s32 %s72, 1
    %s74 = scalar_select %p71, %s72, %s73
    %p77 = pneg %p71
    %p78 = scmp.eq.s32.totalorder %s10, 1
    %p79 = por %p77, %p78
    %p80 = scmp.ne.s32.totalorder %s72, %s75
    %p81 = scmp.eq.s32.totalorder %s10, 0
    %p82 = por %p80, %p81
    %p83 = scmp.ne.s32.totalorder %s72, %s75
    %p84 = scmp.eq.s32.totalorder %s15, 1
    %p85 = por %p83, %p84
    %p86 = scmp.ne.s32.totalorder %s75, %s76
    %p87 = scmp.eq.s32.totalorder %s15, 0
    %p88 = por %p86, %p87
    %p89 = scmp.ne.s32.totalorder %s75, %s76
    %p90 = scmp.eq.s32.totalorder %s16, 1
    %p91 = por %p89, %p90
    %p93 = scmp.ne.s32.totalorder %s76, %s92
    %p94 = scmp.eq.s32.totalorder %s16, 0
    %p95 = por %p93, %p94
    %s96 = ssub.s32 %s10, %s17
    %p97 = scmp.eq.s32.totalorder %s96, 0
    %s99 = sadd.s32 %s98, 1
    %s100 = scalar_select %p97, %s98, %s99
    %p103 = pneg %p97
    %p104 = scmp.eq.s32.totalorder %s10, 1
    %p105 = por %p103, %p104
    %p106 = scmp.ne.s32.totalorder %s98, %s101
    %p107 = scmp.eq.s32.totalorder %s10, 0
    %p108 = por %p106, %p107
    %p109 = scmp.ne.s32.totalorder %s98, %s101
    %p110 = scmp.eq.s32.totalorder %s15, 1
    %p111 = por %p109, %p110
    %p112 = scmp.ne.s32.totalorder %s101, %s102
    %p113 = scmp.eq.s32.totalorder %s15, 0
    %p114 = por %p112, %p113
    %p115 = scmp.ne.s32.totalorder %s101, %s102
    %p116 = scmp.eq.s32.totalorder %s16, 1
    %p117 = por %p115, %p116
    %p119 = scmp.ne.s32.totalorder %s102, %s118
    %p120 = scmp.eq.s32.totalorder %s16, 0
    %p121 = por %p119, %p120
    %s122 = ssub.s32 %s10, %s17
    %p123 = scmp.eq.s32.totalorder %s122, 0
    %s125 = sadd.s32 %s124, 1
    %s126 = scalar_select %p123, %s124, %s125
    %p129 = pneg %p123
    %p130 = scmp.eq.s32.totalorder %s10, 1
    %p131 = por %p129, %p130
    %p132 = scmp.ne.s32.totalorder %s124, %s127
    %p133 = scmp.eq.s32.totalorder %s10, 0
    %p134 = por %p132, %p133
    %p135 = scmp.ne.s32.totalorder %s124, %s127
    %p136 = scmp.eq.s32.totalorder %s15, 1
    %p137 = por %p135, %p136
    %p138 = scmp.ne.s32.totalorder %s127, %s128
    %p139 = scmp.eq.s32.totalorder %s15, 0
    %p140 = por %p138, %p139
    %p141 = scmp.ne.s32.totalorder %s127, %s128
    %p142 = scmp.eq.s32.totalorder %s16, 1
    %p143 = por %p141, %p142
    %p145 = scmp.ne.s32.totalorder %s128, %s144
    %p146 = scmp.eq.s32.totalorder %s16, 0
    %p147 = por %p145, %p146
    %p148 = scmp.le.s32.totalorder 1, %s10
    %p149 = scmp.lt.s32.totalorder %s10, 3
    %p150 = pnand %p148, %p149
    %p151 = pneg %p150
    // Predicated region
    $region9: #{mod_rztx_decoder_layer.9} parent=5 // pred_check
      _
    $region10: #{mod_rztx_decoder_layer.9} parent=5 // pred_check_branch
      %153 = sbr.rel (%p150) target = $region12
    $region11: #{mod_rztx_decoder_layer.9} parent=5 // pred_region
      %s154 = ssub.s32 %s10, 1
    $region12: #{mod_rztx_decoder_layer.9} parent=5 // pred_fallthru
      _
    %p155 = scmp.lt.s32.totalorder %s10, 2
    // Predicated region
    $region13: #{mod_rztx_decoder_layer.9} parent=5 // pred_check
      %p156 = pneg %p155
    $region14: #{mod_rztx_decoder_layer.9} parent=5 // pred_check_branch
      %158 = sbr.rel (%p156) target = $region16
    $region15: #{mod_rztx_decoder_layer.9} parent=5 // pred_region
      // Predicated region
      $region17: #{mod_rztx_decoder_layer.9} parent=15 // pred_check
        %p159 = pneg %p30
      $region18: #{mod_rztx_decoder_layer.9} parent=15 // pred_check_branch
        %161 = sbr.rel (%p159) target = $region20
      $region19: #{mod_rztx_decoder_layer.9} parent=15 // pred_region
        %p162 = scmp.lt.s32.totalorder %s10, 1
        %s163 = scalar_select %p162, %s10, 1
        %s164 = smul.addr %s163, 4
        %s165 = smul.addr %s164, 4
        %s166 = scalar_lea.vmem %s0, %s165
      $region20: #{mod_rztx_decoder_layer.9} parent=15 // pred_fallthru
        _
      // Predicated region
      $region21: #{mod_rztx_decoder_layer.9} parent=15 // pred_check
        %p167 = pneg %p56
      $region22: #{mod_rztx_decoder_layer.9} parent=15 // pred_check_branch
        %169 = sbr.rel (%p167) target = $region24
      $region23: #{mod_rztx_decoder_layer.9} parent=15 // pred_region
        %p170 = scmp.lt.s32.totalorder %s10, 1
        %s171 = scalar_select %p170, %s10, 1
        %s172 = smul.addr %s171, 32
        %s173 = smul.addr %s172, 4
        %s174 = scalar_lea.vmem %s1, %s173
      $region24: #{mod_rztx_decoder_layer.9} parent=15 // pred_fallthru
        _
      // Predicated region
      $region25: #{mod_rztx_decoder_layer.9} parent=15 // pred_check
        %p175 = pneg %p82
      $region26: #{mod_rztx_decoder_layer.9} parent=15 // pred_check_branch
        %177 = sbr.rel (%p175) target = $region28
      $region27: #{mod_rztx_decoder_layer.9} parent=15 // pred_region
        %p178 = scmp.lt.s32.totalorder %s10, 1
        %s179 = scalar_select %p178, %s10, 1
        %s180 = smul.addr %s179, 32
        %s181 = smul.addr %s180, 4
        %s182 = scalar_lea.vmem %s2, %s181
      $region28: #{mod_rztx_decoder_layer.9} parent=15 // pred_fallthru
        _
      // Predicated region
      $region29: #{mod_rztx_decoder_layer.9} parent=15 // pred_check
        %p183 = pneg %p108
      $region30: #{mod_rztx_decoder_layer.9} parent=15 // pred_check_branch
        %185 = sbr.rel (%p183) target = $region32
      $region31: #{mod_rztx_decoder_layer.9} parent=15 // pred_region
        %p186 = scmp.lt.s32.totalorder %s10, 1
        %s187 = scalar_select %p186, %s10, 1
        %s188 = smul.addr %s187, 2
        %s189 = smul.addr %s188, 8
        %s190 = scalar_lea.vmem %s3, %s189
      $region32: #{mod_rztx_decoder_layer.9} parent=15 // pred_fallthru
        _
    $region16: #{mod_rztx_decoder_layer.9} parent=5 // pred_fallthru
      _
    %p191 = scmp.le.s32.totalorder 1, %s10
    %p192 = scmp.lt.s32.totalorder %s10, 3
    %p193 = pnand %p191, %p192
    %p194 = pneg %p193
    // Predicated region
    $region33: #{mod_rztx_decoder_layer.9} parent=5 // pred_check
      _
    $region34: #{mod_rztx_decoder_layer.9} parent=5 // pred_check_branch
      %196 = sbr.rel (%p193) target = $region36
    $region35: #{mod_rztx_decoder_layer.9} parent=5 // pred_region
      %s197 = ssub.s32 %s10, 1
      %p198 = scmp.lt.s32.totalorder %s15, 1
      %s199 = scalar_select %p198, %s15, 1
      %s200 = smul.addr %s199, 4
      %s201 = smul.addr %s200, 4
      %s202 = scalar_lea.vmem %s0, %s201
      %p203 = pneg %p36
      %p204 = pneg %p33
      %p205 = scmp.lt.s32.totalorder %s15, 1
      %s206 = scalar_select %p205, %s15, 1
      %s207 = smul.addr %s206, 32
      %s208 = smul.addr %s207, 4
      %s209 = scalar_lea.vmem %s1, %s208
      %p210 = pneg %p62
      %p211 = pneg %p59
      %p212 = scmp.lt.s32.totalorder %s15, 1
      %s213 = scalar_select %p212, %s15, 1
      %s214 = smul.addr %s213, 32
      %s215 = smul.addr %s214, 4
      %s216 = scalar_lea.vmem %s2, %s215
      %p217 = pneg %p88
      %p218 = pneg %p85
      %p219 = scmp.lt.s32.totalorder %s15, 1
      %s220 = scalar_select %p219, %s15, 1
      %s221 = smul.addr %s220, 2
      %s222 = smul.addr %s221, 8
      %s223 = scalar_lea.vmem %s3, %s222
      %p224 = pneg %p114
      %p225 = pneg %p111
      %p226 = pneg %p140
      %p227 = pneg %p137
      %p228 = scmp.lt.s32.totalorder %s15, 1
      %s229 = scalar_select %p228, %s15, 1
      %s230 = smul.addr %s229, 4
      %s231 = smul.addr %s230, 4
      %s232 = scalar_lea.vmem %s4, %s231
      %p233 = scmp.lt.s32.totalorder %s15, 1
      %s234 = scalar_select %p233, %s15, 1
      %s235 = smul.addr %s234, 4
      %s236 = smul.addr %s235, 4
      %s237 = scalar_lea.vmem %s0, %s236
      %p238 = scmp.lt.s32.totalorder %s15, 1
      %s239 = scalar_select %p238, %s15, 1
      %s240 = smul.addr %s239, 32
      %s241 = smul.addr %s240, 4
      %s242 = scalar_lea.vmem %s1, %s241
      %p243 = scmp.lt.s32.totalorder %s15, 1
      %s244 = scalar_select %p243, %s15, 1
      %s245 = smul.addr %s244, 32
      %s246 = smul.addr %s245, 4
      %s247 = scalar_lea.vmem %s2, %s246
      %p248 = scmp.lt.s32.totalorder %s15, 1
      %s249 = scalar_select %p248, %s15, 1
      %s250 = smul.addr %s249, 2
      %s251 = smul.addr %s250, 8
      %s252 = scalar_lea.vmem %s3, %s251
      %p253 = scmp.lt.s32.totalorder %s15, 1
      %s254 = scalar_select %p253, %s15, 1
      %s255 = smul.addr %s254, 4
      %s256 = smul.addr %s255, 4
      %s257 = scalar_lea.vmem %s4, %s256
      %v259 = vld [vmem:[%s237] sm:$0xf]
      %v260 = vld [vmem:[%s237 + $0x4] sm:$0xf]
      %v261 = vld [vmem:[%s237 + $0x8] sm:$0xf]
      %v262 = vld [vmem:[%s237 + $0xc] sm:$0xf]
      %v263 = vld [vmem:[%s242] sm:$0xf]
      %v264 = vld [vmem:[%s242 + $0x4] sm:$0xf]
      %v265 = vld [vmem:[%s242 + $0x8] sm:$0xf]
      %v266 = vld [vmem:[%s242 + $0xc] sm:$0xf]
      %v267 = vld [vmem:[%s242 + $0x10] sm:$0xf]
      %v268 = vld [vmem:[%s242 + $0x14] sm:$0xf]
      %v269 = vld [vmem:[%s242 + $0x18] sm:$0xf]
      %v270 = vld [vmem:[%s242 + $0x1c] sm:$0xf]
      %v271 = vld [vmem:[%s242 + $0x20] sm:$0xf]
      %v272 = vld [vmem:[%s242 + $0x24] sm:$0xf]
      %v273 = vld [vmem:[%s242 + $0x28] sm:$0xf]
      %v274 = vld [vmem:[%s242 + $0x2c] sm:$0xf]
      %v275 = vld [vmem:[%s242 + $0x30] sm:$0xf]
      %v276 = vld [vmem:[%s242 + $0x34] sm:$0xf]
      %v277 = vld [vmem:[%s242 + $0x38] sm:$0xf]
      %v278 = vld [vmem:[%s242 + $0x3c] sm:$0xf]
      %v279 = vld [vmem:[%s242 + $0x40] sm:$0xf]
      %v280 = vld [vmem:[%s242 + $0x44] sm:$0xf]
      %v281 = vld [vmem:[%s242 + $0x48] sm:$0xf]
      %v282 = vld [vmem:[%s242 + $0x4c] sm:$0xf]
      %v283 = vld [vmem:[%s242 + $0x50] sm:$0xf]
      %v284 = vld [vmem:[%s242 + $0x54] sm:$0xf]
      %v285 = vld [vmem:[%s242 + $0x58] sm:$0xf]
      %v286 = vld [vmem:[%s242 + $0x5c] sm:$0xf]
      %v287 = vld [vmem:[%s242 + $0x60] sm:$0xf]
      %v288 = vld [vmem:[%s242 + $0x64] sm:$0xf]
      %v289 = vld [vmem:[%s242 + $0x68] sm:$0xf]
      %v290 = vld [vmem:[%s242 + $0x6c] sm:$0xf]
      %v291 = vld [vmem:[%s242 + $0x70] sm:$0xf]
      %v292 = vld [vmem:[%s242 + $0x74] sm:$0xf]
      %v293 = vld [vmem:[%s242 + $0x78] sm:$0xf]
      %v294 = vld [vmem:[%s242 + $0x7c] sm:$0xf]
      %v297 = vunpack.c.l.b16 %v259
      %v298 = vunpack.c.l.b16 %v260
      %v299 = vpack.c.b16 %v298, %v297
      %v317 = vunpack.c.l.b16 %v263
      %v318 = vunpack.c.l.b16 %v264
      %v319 = vunpack.c.l.b16 %v265
      %v320 = vunpack.c.l.b16 %v266
      %v321 = vunpack.c.l.b16 %v267
      %v322 = vunpack.c.l.b16 %v268
      %v323 = vunpack.c.l.b16 %v269
      %v324 = vunpack.c.l.b16 %v270
      %v325 = vunpack.c.l.b16 %v271
      %v326 = vunpack.c.l.b16 %v272
      %v327 = vunpack.c.l.b16 %v273
      %v328 = vunpack.c.l.b16 %v274
      %v329 = vunpack.c.l.b16 %v275
      %v330 = vunpack.c.l.b16 %v276
      %v331 = vunpack.c.l.b16 %v277
      %v332 = vunpack.c.l.b16 %v278
      %v333 = vpack.c.b16 %v318, %v317
      %v334 = vpack.c.b16 %v320, %v319
      %v335 = vpack.c.b16 %v322, %v321
      %v336 = vpack.c.b16 %v324, %v323
      %v337 = vpack.c.b16 %v326, %v325
      %v338 = vpack.c.b16 %v328, %v327
      %v339 = vpack.c.b16 %v330, %v329
      %v340 = vpack.c.b16 %v332, %v331
      %349 = vmatprep.subr.bf16.mxu0 0
      %350 = vmatpush1.bf16.msra.mxu0 %v333
      %351 = vmatprep.subr.bf16.mxu0 0
      %352 = vmatpush1.bf16.msra.mxu0 %v334
      %353 = vmatprep.subr.bf16.mxu0 0
      %354 = vmatpush1.bf16.msra.mxu0 %v335
      %355 = vmatprep.subr.bf16.mxu0 0
      %356 = vmatpush1.bf16.msra.mxu0 %v336
      %357 = vmatprep.subr.bf16.mxu0 0
      %358 = vmatpush1.bf16.msra.mxu0 %v337
      %359 = vmatprep.subr.bf16.mxu0 0
      %360 = vmatpush1.bf16.msra.mxu0 %v338
      %361 = vmatprep.subr.bf16.mxu0 0
      %362 = vmatpush1.bf16.msra.mxu0 %v339
      %363 = vmatprep.subr.bf16.mxu0 0
      %364 = vmatpush1.bf16.msra.mxu0 %v340
      %365 = vmatprep.subr.bf16.mxu0 0
      %366 = vmatpush1.bf16.msra.mxu0 0
      %367 = vmatprep.subr.bf16.mxu0 0
      %368 = vmatpush1.bf16.msra.mxu0 0
      %369 = vmatprep.subr.bf16.mxu0 0
      %370 = vmatpush1.bf16.msra.mxu0 0
      %371 = vmatprep.subr.bf16.mxu0 0
      %372 = vmatpush1.bf16.msra.mxu0 0
      %373 = vmatprep.subr.bf16.mxu0 0
      %374 = vmatpush1.bf16.msra.mxu0 0
      %375 = vmatprep.subr.bf16.mxu0 0
      %376 = vmatpush1.bf16.msra.mxu0 0
      %377 = vmatprep.subr.bf16.mxu0 0
      %378 = vmatpush1.bf16.msra.mxu0 0
      %379 = vmatprep.subr.bf16.mxu0 0
      %380 = vmatpush1.bf16.msra.mxu0 0
      %381 = vmatprep.mubr.bf16.mxu0 0
      %382 = vmatmul.mubr.bf16.gmra.mrb[0].mxu0 %v299
      %v383 = vpop.f32.mrb[0].mxu0
      %v384 = vadd.f32 0.0, %v383
      %v385 = vpop.f32.mrb[0].mxu0
      %v386 = vpop.f32.mrb[0].mxu0
      %v387 = vadd.f32 0.0, %v386
      %v388 = vpop.f32.mrb[0].mxu0
      %389 = vdwg.mxu0
      %v392 = vunpack.c.l.b16 %v261
      %v393 = vunpack.c.l.b16 %v262
      %v394 = vpack.c.b16 %v393, %v392
      %v412 = vunpack.c.l.b16 %v279
      %v413 = vunpack.c.l.b16 %v280
      %v414 = vunpack.c.l.b16 %v281
      %v415 = vunpack.c.l.b16 %v282
      %v416 = vunpack.c.l.b16 %v283
      %v417 = vunpack.c.l.b16 %v284
      %v418 = vunpack.c.l.b16 %v285
      %v419 = vunpack.c.l.b16 %v286
      %v420 = vunpack.c.l.b16 %v287
      %v421 = vunpack.c.l.b16 %v288
      %v422 = vunpack.c.l.b16 %v289
      %v423 = vunpack.c.l.b16 %v290
      %v424 = vunpack.c.l.b16 %v291
      %v425 = vunpack.c.l.b16 %v292
      %v426 = vunpack.c.l.b16 %v293
      %v427 = vunpack.c.l.b16 %v294
      %v428 = vpack.c.b16 %v413, %v412
      %v429 = vpack.c.b16 %v415, %v414
      %v430 = vpack.c.b16 %v417, %v416
      %v431 = vpack.c.b16 %v419, %v418
      %v432 = vpack.c.b16 %v421, %v420
      %v433 = vpack.c.b16 %v423, %v422
      %v434 = vpack.c.b16 %v425, %v424
      %v435 = vpack.c.b16 %v427, %v426
      %444 = vmatprep.subr.bf16.mxu0 0
      %445 = vmatpush1.bf16.msra.mxu0 %v428
      %446 = vmatprep.subr.bf16.mxu0 0
      %447 = vmatpush1.bf16.msra.mxu0 %v429
      %448 = vmatprep.subr.bf16.mxu0 0
      %449 = vmatpush1.bf16.msra.mxu0 %v430
      %450 = vmatprep.subr.bf16.mxu0 0
      %451 = vmatpush1.bf16.msra.mxu0 %v431
      %452 = vmatprep.subr.bf16.mxu0 0
      %453 = vmatpush1.bf16.msra.mxu0 %v432
      %454 = vmatprep.subr.bf16.mxu0 0
      %455 = vmatpush1.bf16.msra.mxu0 %v433
      %456 = vmatprep.subr.bf16.mxu0 0
      %457 = vmatpush1.bf16.msra.mxu0 %v434
      %458 = vmatprep.subr.bf16.mxu0 0
      %459 = vmatpush1.bf16.msra.mxu0 %v435
      %460 = vmatprep.subr.bf16.mxu0 0
      %461 = vmatpush1.bf16.msra.mxu0 0
      %462 = vmatprep.subr.bf16.mxu0 0
      %463 = vmatpush1.bf16.msra.mxu0 0
      %464 = vmatprep.subr.bf16.mxu0 0
      %465 = vmatpush1.bf16.msra.mxu0 0
      %466 = vmatprep.subr.bf16.mxu0 0
      %467 = vmatpush1.bf16.msra.mxu0 0
      %468 = vmatprep.subr.bf16.mxu0 0
      %469 = vmatpush1.bf16.msra.mxu0 0
      %470 = vmatprep.subr.bf16.mxu0 0
      %471 = vmatpush1.bf16.msra.mxu0 0
      %472 = vmatprep.subr.bf16.mxu0 0
      %473 = vmatpush1.bf16.msra.mxu0 0
      %474 = vmatprep.subr.bf16.mxu0 0
      %475 = vmatpush1.bf16.msra.mxu0 0
      %476 = vmatprep.mubr.bf16.mxu0 0
      %477 = vmatmul.mubr.bf16.gmra.mrb[0].mxu0 %v394
      %v478 = vpop.f32.mrb[0].mxu0
      %v479 = vadd.f32 0.0, %v478
      %v480 = vpop.f32.mrb[0].mxu0
      %v481 = vpop.f32.mrb[0].mxu0
      %v482 = vadd.f32 0.0, %v481
      %v483 = vpop.f32.mrb[0].mxu0
      %484 = vdwg.mxu0
      %v485 = vmul.f32 %v384, 0.088388346
      %v486 = vmul.f32 %v387, 0.088388346
      %v487 = vmul.f32 %v479, 0.088388346
      %v488 = vmul.f32 %v482, 0.088388346
      %v489 = vld [vmem:[%s252] sm:$0xff]
      %v490 = vld [vmem:[%s252 + $0x8] sm:$0xff]
      %v491 = vadd.f32 %v485, %v489
      %v492 = vadd.f32 %v486, %v490
      %v493 = vadd.f32 %v487, %v489
      %v494 = vadd.f32 %v488, %v490
      %495 = vmax.xlane.f32.xlu0 %v491
      %v496 = vpop.xlane.xlu0 %495
      %497 = vmax.xlane.f32.xlu0 %v492
      %v498 = vpop.xlane.xlu0 %497
      %499 = vmax.xlane.f32.xlu0 %v493
      %v500 = vpop.xlane.xlu0 %499
      %501 = vmax.xlane.f32.xlu0 %v494
      %v502 = vpop.xlane.xlu0 %501
      %v503 = vsub.f32 %v491, %v496
      %v504 = vsub.f32 %v492, %v498
      %v505 = vsub.f32 %v493, %v500
      %v506 = vsub.f32 %v494, %v502
      %v507 = vmul.f32 %v503, 1.442695
      %v508 = vpow.pop %v507
      %v509 = vmul.f32 %v504, 1.442695
      %v510 = vpow.pop %v509
      %v511 = vmul.f32 %v505, 1.442695
      %v512 = vpow.pop %v511
      %v513 = vmul.f32 %v506, 1.442695
      %v514 = vpow.pop %v513
      %515 = vadd.xlane.f32.xlu0 %v508
      %v516 = vpop.xlane.xlu0 %515
      %517 = vadd.xlane.f32.xlu0 %v510
      %v518 = vpop.xlane.xlu0 %517
      %519 = vadd.xlane.f32.xlu0 %v512
      %v520 = vpop.xlane.xlu0 %519
      %521 = vadd.xlane.f32.xlu0 %v514
      %v522 = vpop.xlane.xlu0 %521
      %v523 = vrcp.pop %v516
      %v524 = vrcp.pop %v518
      %v525 = vrcp.pop %v520
      %v526 = vrcp.pop %v522
      %v527 = vmul.f32 %v508, %v523
      %v528 = vmul.f32 %v510, %v524
      %v529 = vmul.f32 %v512, %v525
      %v530 = vmul.f32 %v514, %v526
      %v531 = vpack.c.bf16 %v528, %v527
      %v532 = vpack.c.bf16 %v530, %v529
      %v533 = vld [vmem:[%s247] sm:$0xf]
      %v534 = vld [vmem:[%s247 + $0x4] sm:$0xf]
      %v535 = vld [vmem:[%s247 + $0x8] sm:$0xf]
      %v536 = vld [vmem:[%s247 + $0xc] sm:$0xf]
      %v537 = vld [vmem:[%s247 + $0x10] sm:$0xf]
      %v538 = vld [vmem:[%s247 + $0x14] sm:$0xf]
      %v539 = vld [vmem:[%s247 + $0x18] sm:$0xf]
      %v540 = vld [vmem:[%s247 + $0x1c] sm:$0xf]
      %v541 = vld [vmem:[%s247 + $0x20] sm:$0xf]
      %v542 = vld [vmem:[%s247 + $0x24] sm:$0xf]
      %v543 = vld [vmem:[%s247 + $0x28] sm:$0xf]
      %v544 = vld [vmem:[%s247 + $0x2c] sm:$0xf]
      %v545 = vld [vmem:[%s247 + $0x30] sm:$0xf]
      %v546 = vld [vmem:[%s247 + $0x34] sm:$0xf]
      %v547 = vld [vmem:[%s247 + $0x38] sm:$0xf]
      %v548 = vld [vmem:[%s247 + $0x3c] sm:$0xf]
      %v549 = vld [vmem:[%s247 + $0x40] sm:$0xf]
      %v550 = vld [vmem:[%s247 + $0x44] sm:$0xf]
      %v551 = vld [vmem:[%s247 + $0x48] sm:$0xf]
      %v552 = vld [vmem:[%s247 + $0x4c] sm:$0xf]
      %v553 = vld [vmem:[%s247 + $0x50] sm:$0xf]
      %v554 = vld [vmem:[%s247 + $0x54] sm:$0xf]
      %v555 = vld [vmem:[%s247 + $0x58] sm:$0xf]
      %v556 = vld [vmem:[%s247 + $0x5c] sm:$0xf]
      %v557 = vld [vmem:[%s247 + $0x60] sm:$0xf]
      %v558 = vld [vmem:[%s247 + $0x64] sm:$0xf]
      %v559 = vld [vmem:[%s247 + $0x68] sm:$0xf]
      %v560 = vld [vmem:[%s247 + $0x6c] sm:$0xf]
      %v561 = vld [vmem:[%s247 + $0x70] sm:$0xf]
      %v562 = vld [vmem:[%s247 + $0x74] sm:$0xf]
      %v563 = vld [vmem:[%s247 + $0x78] sm:$0xf]
      %v564 = vld [vmem:[%s247 + $0x7c] sm:$0xf]
      %v581 = vunpack.c.l.b16 %v533
      %v582 = vunpack.c.l.b16 %v534
      %v583 = vunpack.c.l.b16 %v535
      %v584 = vunpack.c.l.b16 %v536
      %v585 = vunpack.c.l.b16 %v537
      %v586 = vunpack.c.l.b16 %v538
      %v587 = vunpack.c.l.b16 %v539
      %v588 = vunpack.c.l.b16 %v540
      %v589 = vunpack.c.l.b16 %v541
      %v590 = vunpack.c.l.b16 %v542
      %v591 = vunpack.c.l.b16 %v543
      %v592 = vunpack.c.l.b16 %v544
      %v593 = vunpack.c.l.b16 %v545
      %v594 = vunpack.c.l.b16 %v546
      %v595 = vunpack.c.l.b16 %v547
      %v596 = vunpack.c.l.b16 %v548
      %v597 = vpack.c.b16 %v582, %v581
      %v598 = vpack.c.b16 %v584, %v583
      %v599 = vpack.c.b16 %v586, %v585
      %v600 = vpack.c.b16 %v588, %v587
      %v601 = vpack.c.b16 %v590, %v589
      %v602 = vpack.c.b16 %v592, %v591
      %v603 = vpack.c.b16 %v594, %v593
      %v604 = vpack.c.b16 %v596, %v595
      %613 = vmatprep.subr.bf16.mxu0 0
      %614 = vmatpush1.bf16.msra.mxu0 %v597
      %615 = vmatprep.subr.bf16.mxu0 0
      %616 = vmatpush1.bf16.msra.mxu0 %v598
      %617 = vmatprep.subr.bf16.mxu0 0
      %618 = vmatpush1.bf16.msra.mxu0 %v599
      %619 = vmatprep.subr.bf16.mxu0 0
      %620 = vmatpush1.bf16.msra.mxu0 %v600
      %621 = vmatprep.subr.bf16.mxu0 0
      %622 = vmatpush1.bf16.msra.mxu0 %v601
      %623 = vmatprep.subr.bf16.mxu0 0
      %624 = vmatpush1.bf16.msra.mxu0 %v602
      %625 = vmatprep.subr.bf16.mxu0 0
      %626 = vmatpush1.bf16.msra.mxu0 %v603
      %627 = vmatprep.subr.bf16.mxu0 0
      %628 = vmatpush1.bf16.msra.mxu0 %v604
      %629 = vmatprep.subr.bf16.mxu0 0
      %630 = vmatpush1.bf16.msra.mxu0 0
      %631 = vmatprep.subr.bf16.mxu0 0
      %632 = vmatpush1.bf16.msra.mxu0 0
      %633 = vmatprep.subr.bf16.mxu0 0
      %634 = vmatpush1.bf16.msra.mxu0 0
      %635 = vmatprep.subr.bf16.mxu0 0
      %636 = vmatpush1.bf16.msra.mxu0 0
      %637 = vmatprep.subr.bf16.mxu0 0
      %638 = vmatpush1.bf16.msra.mxu0 0
      %639 = vmatprep.subr.bf16.mxu0 0
      %640 = vmatpush1.bf16.msra.mxu0 0
      %641 = vmatprep.subr.bf16.mxu0 0
      %642 = vmatpush1.bf16.msra.mxu0 0
      %643 = vmatprep.subr.bf16.mxu0 0
      %644 = vmatpush1.bf16.msra.mxu0 0
      %645 = vmatprep.mubr.bf16.mxu0 0
      %646 = vmatmul.mubr.bf16.gmra.mrb[0].mxu0 %v531
      %v647 = vpop.f32.mrb[0].mxu0
      %v648 = vadd.f32 0.0, %v647
      %v649 = vpop.f32.mrb[0].mxu0
      %v650 = vpop.f32.mrb[0].mxu0
      %v651 = vadd.f32 0.0, %v650
      %v652 = vpop.f32.mrb[0].mxu0
      %653 = vdwg.mxu0
      %v670 = vunpack.c.l.b16 %v549
      %v671 = vunpack.c.l.b16 %v550
      %v672 = vunpack.c.l.b16 %v551
      %v673 = vunpack.c.l.b16 %v552
      %v674 = vunpack.c.l.b16 %v553
      %v675 = vunpack.c.l.b16 %v554
      %v676 = vunpack.c.l.b16 %v555
      %v677 = vunpack.c.l.b16 %v556
      %v678 = vunpack.c.l.b16 %v557
      %v679 = vunpack.c.l.b16 %v558
      %v680 = vunpack.c.l.b16 %v559
      %v681 = vunpack.c.l.b16 %v560
      %v682 = vunpack.c.l.b16 %v561
      %v683 = vunpack.c.l.b16 %v562
      %v684 = vunpack.c.l.b16 %v563
      %v685 = vunpack.c.l.b16 %v564
      %v686 = vpack.c.b16 %v671, %v670
      %v687 = vpack.c.b16 %v673, %v672
      %v688 = vpack.c.b16 %v675, %v674
      %v689 = vpack.c.b16 %v677, %v676
      %v690 = vpack.c.b16 %v679, %v678
      %v691 = vpack.c.b16 %v681, %v680
      %v692 = vpack.c.b16 %v683, %v682
      %v693 = vpack.c.b16 %v685, %v684
      %702 = vmatprep.subr.bf16.mxu0 0
      %703 = vmatpush1.bf16.msra.mxu0 %v686
      %704 = vmatprep.subr.bf16.mxu0 0
      %705 = vmatpush1.bf16.msra.mxu0 %v687
      %706 = vmatprep.subr.bf16.mxu0 0
      %707 = vmatpush1.bf16.msra.mxu0 %v688
      %708 = vmatprep.subr.bf16.mxu0 0
      %709 = vmatpush1.bf16.msra.mxu0 %v689
      %710 = vmatprep.subr.bf16.mxu0 0
      %711 = vmatpush1.bf16.msra.mxu0 %v690
      %712 = vmatprep.subr.bf16.mxu0 0
      %713 = vmatpush1.bf16.msra.mxu0 %v691
      %714 = vmatprep.subr.bf16.mxu0 0
      %715 = vmatpush1.bf16.msra.mxu0 %v692
      %716 = vmatprep.subr.bf16.mxu0 0
      %717 = vmatpush1.bf16.msra.mxu0 %v693
      %718 = vmatprep.subr.bf16.mxu0 0
      %719 = vmatpush1.bf16.msra.mxu0 0
      %720 = vmatprep.subr.bf16.mxu0 0
      %721 = vmatpush1.bf16.msra.mxu0 0
      %722 = vmatprep.subr.bf16.mxu0 0
      %723 = vmatpush1.bf16.msra.mxu0 0
      %724 = vmatprep.subr.bf16.mxu0 0
      %725 = vmatpush1.bf16.msra.mxu0 0
      %726 = vmatprep.subr.bf16.mxu0 0
      %727 = vmatpush1.bf16.msra.mxu0 0
      %728 = vmatprep.subr.bf16.mxu0 0
      %729 = vmatpush1.bf16.msra.mxu0 0
      %730 = vmatprep.subr.bf16.mxu0 0
      %731 = vmatpush1.bf16.msra.mxu0 0
      %732 = vmatprep.subr.bf16.mxu0 0
      %733 = vmatpush1.bf16.msra.mxu0 0
      %734 = vmatprep.mubr.bf16.mxu0 0
      %735 = vmatmul.mubr.bf16.gmra.mrb[0].mxu0 %v532
      %v736 = vpop.f32.mrb[0].mxu0
      %v737 = vadd.f32 0.0, %v736
      %v738 = vpop.f32.mrb[0].mxu0
      %v739 = vpop.f32.mrb[0].mxu0
      %v740 = vadd.f32 0.0, %v739
      %v741 = vpop.f32.mrb[0].mxu0
      %742 = vdwg.mxu0
      %v743 = vpack.c.bf16 %v651, %v648
      %v744 = vpack.c.bf16 %v740, %v737
      %v747 = vunpack.c.l.b16 %v743
      %v748 = vunpack.c.h.b16 %v743
      %v749 = vunpack.c.l.b16 %v744
      %v750 = vunpack.c.h.b16 %v744
      %v751 = vpack.c.b16 %v747, %v747
      %v752 = vpack.c.b16 %v748, %v748
      %v753 = vpack.c.b16 %v749, %v749
      %v754 = vpack.c.b16 %v750, %v750
      %759 = vst [vmem:[%s257] sm:$0xf] %v751
      %760 = vst [vmem:[%s257 + $0x4] sm:$0xf] %v752
      %761 = vst [vmem:[%s257 + $0x8] sm:$0xf] %v753
      %762 = vst [vmem:[%s257 + $0xc] sm:$0xf] %v754
      %p763 = scmp.lt.s32.totalorder %s15, 1
      %s764 = scalar_select %p763, %s15, 1
      %s765 = smul.addr %s764, 4
      %s766 = smul.addr %s765, 4
      %s767 = scalar_lea.vmem %s4, %s766
      // Predicated region
      $region37: #{mod_rztx_decoder_layer.9} parent=35 // pred_check
        %p768 = pneg %p137
      $region38: #{mod_rztx_decoder_layer.9} parent=35 // pred_check_branch
        %770 = sbr.rel (%p768) target = $region40
      $region39: #{mod_rztx_decoder_layer.9} parent=35 // pred_region
        _
      $region40: #{mod_rztx_decoder_layer.9} parent=35 // pred_fallthru
        _
    $region36: #{mod_rztx_decoder_layer.9} parent=5 // pred_fallthru
      _
    %p771 = scmp.le.s32.totalorder 2, %s10
    // Predicated region
    $region41: #{mod_rztx_decoder_layer.9} parent=5 // pred_check
      %p772 = pneg %p771
    $region42: #{mod_rztx_decoder_layer.9} parent=5 // pred_check_branch
      %774 = sbr.rel (%p772) target = $region44
    $region43: #{mod_rztx_decoder_layer.9} parent=5 // pred_region
      %s775 = ssub.s32 %s10, 2
      // Predicated region
      $region45: #{mod_rztx_decoder_layer.9} parent=43 // pred_check
        %p776 = pneg %p143
      $region46: #{mod_rztx_decoder_layer.9} parent=43 // pred_check_branch
        %778 = sbr.rel (%p776) target = $region48
      $region47: #{mod_rztx_decoder_layer.9} parent=43 // pred_region
        %p779 = scmp.lt.s32.totalorder %s16, 1
        %s780 = scalar_select %p779, %s16, 1
        %s781 = smul.addr %s780, 4
        %s782 = smul.addr %s781, 4
        %s783 = scalar_lea.vmem %s4, %s782
      $region48: #{mod_rztx_decoder_layer.9} parent=43 // pred_fallthru
        _
    $region44: #{mod_rztx_decoder_layer.9} parent=5 // pred_fallthru
      _
  $region6: #{mod_rztx_decoder_layer.9} parent=0 // loop_footer
    %s14 = sadd.s32 1, %s10
  $region7: #{mod_rztx_decoder_layer.9} parent=0 // loop_footer_branch
    %9 = sbr.rel target = $region3
  $region8: #{mod_rztx_decoder_layer.9} parent=0 // loop_exit
    _

// kernel: mod_rztx_decoder_layer.12
$region0: #{mod_rztx_decoder_layer.12}
  #allocation0 [shape = 'u32[]', space=smem, size = 0x4, offset = 0x4, fixed_abs, tag = 'smem constant byte address 0x4 - core index']
  #allocation1 [shape = 'u32[144,128]{1,0:T(1,128)}', space=vmem, size = 0x12000, scoped, tag = 'internal scratch']
  %s0 = inlined_call_operand.vmem [shape: f32[48,256], index: 0, kind: input, shape index: {}]
  %s1 = inlined_call_operand.vmem [shape: bf16[256,512], index: 1, kind: input, shape index: {}]
  %s2 = inlined_call_operand.vmem [shape: f32[1,512], index: 2, kind: input, shape index: {}]
  %s3 = inlined_call_operand.vmem [shape: bf16[48,512], index: 3, kind: output, shape index: {}]
  %s4 = sld [smem:[#allocation0]]
  $region117: #{mod_rztx_decoder_layer.12} parent=0
    _
  %s6 = ssub.s32 1, %s4
  %s7 = scalar_select 0, %s6, %s4
  $region1: #{mod_rztx_decoder_layer.12} parent=0
    #allocation2 [shape = 'u8[262144]{0}', space=vmem, size = 0x40000, scoped, tag = 'input window, operand 1']
    #allocation3 [shape = 'u8[16384]{0}', space=vmem, size = 0x4000, scoped, tag = 'output window, operand 0']
    loop: start=0, step=1, limit=8
    $region2: #{mod_rztx_decoder_layer.12} parent=1 // loop_pre_header
      _
    $region3: #{mod_rztx_decoder_layer.12} parent=1 // loop_header
      %s9 = sphi 0, %s13
      %p10 = scmp.ge.s32.totalorder %s9, 8
      %s16 = sphi 0, %s28
      %s17 = sphi 0, %s24
      %s18 = sphi 0, %s16
      %s19 = sphi 0, %s17
      %s20 = sphi 0, %s18
      %s21 = sphi 0, %s19
      %s31 = sphi 0, %s33
      %s34 = sphi 0, %s31
      %s35 = sphi 0, %s34
      %s51 = sphi 0, %s35
      %s57 = sphi 0, %s59
      %s60 = sphi 0, %s57
      %s61 = sphi 0, %s60
      %s77 = sphi 0, %s61
      %s83 = sphi 0, %s85
      %s86 = sphi 0, %s83
      %s87 = sphi 0, %s86
      %s103 = sphi 0, %s87
      %s111 = sphi 0, %s113
      %s114 = sphi 0, %s111
      %s115 = sphi 0, %s114
      %s131 = sphi 0, %s115
    $region4: #{mod_rztx_decoder_layer.12} parent=1 // loop_header_branch
      %12 = sbr.rel (%p10) target = $region8
    $region5: #{mod_rztx_decoder_layer.12} parent=1 // loop_body
      %s14 = ssub.s32 %s9, 1
      %s15 = ssub.s32 %s9, 2
      %s22 = sadd.s32 1, %s17
      %p23 = scmp.ge.s32.totalorder %s22, 2
      %s24 = scalar_select %p23, 0, %s22
      %s25 = sadd.s32 1, %s16
      %s26 = scalar_select %p23, %s25, %s16
      %p27 = scmp.ge.s32.totalorder %s26, 3
      %s28 = scalar_select %p27, 0, %s26
      %s29 = ssub.s32 %s16, %s28
      %p30 = scmp.eq.s32.totalorder %s29, 0
      %s32 = sadd.s32 %s31, 1
      %s33 = scalar_select %p30, %s31, %s32
      %p36 = pneg %p30
      %p37 = scmp.eq.s32.totalorder %s9, 5
      %p38 = por %p36, %p37
      %p39 = scmp.ne.s32.totalorder %s31, %s34
      %p40 = scmp.eq.s32.totalorder %s9, 0
      %p41 = por %p39, %p40
      %p42 = scmp.ne.s32.totalorder %s31, %s34
      %p43 = scmp.eq.s32.totalorder %s14, 5
      %p44 = por %p42, %p43
      %p45 = scmp.ne.s32.totalorder %s34, %s35
      %p46 = scmp.eq.s32.totalorder %s14, 0
      %p47 = por %p45, %p46
      %p48 = scmp.ne.s32.totalorder %s34, %s35
      %p49 = scmp.eq.s32.totalorder %s15, 5
      %p50 = por %p48, %p49
      %p52 = scmp.ne.s32.totalorder %s35, %s51
      %p53 = scmp.eq.s32.totalorder %s15, 0
      %p54 = por %p52, %p53
      %s55 = ssub.s32 %s17, %s24
      %p56 = scmp.eq.s32.totalorder %s55, 0
      %s58 = sadd.s32 %s57, 1
      %s59 = scalar_select %p56, %s57, %s58
      %p62 = pneg %p56
      %p63 = scmp.eq.s32.totalorder %s9, 5
      %p64 = por %p62, %p63
      %p65 = scmp.ne.s32.totalorder %s57, %s60
      %p66 = scmp.eq.s32.totalorder %s9, 0
      %p67 = por %p65, %p66
      %p68 = scmp.ne.s32.totalorder %s57, %s60
      %p69 = scmp.eq.s32.totalorder %s14, 5
      %p70 = por %p68, %p69
      %p71 = scmp.ne.s32.totalorder %s60, %s61
      %p72 = scmp.eq.s32.totalorder %s14, 0
      %p73 = por %p71, %p72
      %p74 = scmp.ne.s32.totalorder %s60, %s61
      %p75 = scmp.eq.s32.totalorder %s15, 5
      %p76 = por %p74, %p75
      %p78 = scmp.ne.s32.totalorder %s61, %s77
      %p79 = scmp.eq.s32.totalorder %s15, 0
      %p80 = por %p78, %p79
      %s81 = ssub.s32 %s17, %s24
      %p82 = scmp.eq.s32.totalorder %s81, 0
      %s84 = sadd.s32 %s83, 1
      %s85 = scalar_select %p82, %s83, %s84
      %p88 = pneg %p82
      %p89 = scmp.eq.s32.totalorder %s9, 5
      %p90 = por %p88, %p89
      %p91 = scmp.ne.s32.totalorder %s83, %s86
      %p92 = scmp.eq.s32.totalorder %s9, 0
      %p93 = por %p91, %p92
      %p94 = scmp.ne.s32.totalorder %s83, %s86
      %p95 = scmp.eq.s32.totalorder %s14, 5
      %p96 = por %p94, %p95
      %p97 = scmp.ne.s32.totalorder %s86, %s87
      %p98 = scmp.eq.s32.totalorder %s14, 0
      %p99 = por %p97, %p98
      %p100 = scmp.ne.s32.totalorder %s86, %s87
      %p101 = scmp.eq.s32.totalorder %s15, 5
      %p102 = por %p100, %p101
      %p104 = scmp.ne.s32.totalorder %s87, %s103
      %p105 = scmp.eq.s32.totalorder %s15, 0
      %p106 = por %p104, %p105
      %s107 = ssub.s32 %s16, %s28
      %s108 = ssub.s32 %s17, %s24
      %s109 = sor.u32 %s107, %s108
      %p110 = scmp.eq.s32.totalorder %s109, 0
      %s112 = sadd.s32 %s111, 1
      %s113 = scalar_select %p110, %s111, %s112
      %p116 = pneg %p110
      %p117 = scmp.eq.s32.totalorder %s9, 5
      %p118 = por %p116, %p117
      %p119 = scmp.ne.s32.totalorder %s111, %s114
      %p120 = scmp.eq.s32.totalorder %s9, 0
      %p121 = por %p119, %p120
      %p122 = scmp.ne.s32.totalorder %s111, %s114
      %p123 = scmp.eq.s32.totalorder %s14, 5
      %p124 = por %p122, %p123
      %p125 = scmp.ne.s32.totalorder %s114, %s115
      %p126 = scmp.eq.s32.totalorder %s14, 0
      %p127 = por %p125, %p126
      %p128 = scmp.ne.s32.totalorder %s114, %s115
      %p129 = scmp.eq.s32.totalorder %s15, 5
      %p130 = por %p128, %p129
      %p132 = scmp.ne.s32.totalorder %s115, %s131
      %p133 = scmp.eq.s32.totalorder %s15, 0
      %p134 = por %p132, %p133
      %p135 = scmp.le.s32.totalorder 1, %s9
      %p136 = scmp.lt.s32.totalorder %s9, 7
      %p137 = pnand %p135, %p136
      %p138 = pneg %p137
      // Predicated region
      $region9: #{mod_rztx_decoder_layer.12} parent=5 // pred_check
        _
      $region10: #{mod_rztx_decoder_layer.12} parent=5 // pred_check_branch
        %140 = sbr.rel (%p137) target = $region12
      $region11: #{mod_rztx_decoder_layer.12} parent=5 // pred_region
        %s141 = ssub.s32 %s9, 1
      $region12: #{mod_rztx_decoder_layer.12} parent=5 // pred_fallthru
        _
      %p142 = scmp.lt.s32.totalorder %s9, 6
      // Predicated region
      $region13: #{mod_rztx_decoder_layer.12} parent=5 // pred_check
        %p143 = pneg %p142
      $region14: #{mod_rztx_decoder_layer.12} parent=5 // pred_check_branch
        %145 = sbr.rel (%p143) target = $region16
      $region15: #{mod_rztx_decoder_layer.12} parent=5 // pred_region
        // Predicated region
        $region17: #{mod_rztx_decoder_layer.12} parent=15 // pred_check
          %p146 = pneg %p41
        $region18: #{mod_rztx_decoder_layer.12} parent=15 // pred_check_branch
          %148 = sbr.rel (%p146) target = $region20
        $region19: #{mod_rztx_decoder_layer.12} parent=15 // pred_region
          %s149 = smul.u32 2, %s16
          %p150 = scmp.lt.s32.totalorder %s149, 5
          %s151 = scalar_select %p150, %s149, 5
          %s152 = smul.addr %s151, 2
          %s153 = smul.addr %s152, 8
          %s154 = scalar_lea.vmem %s0, %s153
          %s155 = smul.u32 2, %s16
        $region20: #{mod_rztx_decoder_layer.12} parent=15 // pred_fallthru
          _
        // Predicated region
        $region21: #{mod_rztx_decoder_layer.12} parent=15 // pred_check
          %p156 = pneg %p67
        $region22: #{mod_rztx_decoder_layer.12} parent=15 // pred_check_branch
          %158 = sbr.rel (%p156) target = $region24
        $region23: #{mod_rztx_decoder_layer.12} parent=15 // pred_region
          %s159 = sand.u32 %s57, 1
          %s160 = sand.u32 %s57, 1
          %s161 = smul.addr %s160, 256
          %s162 = scalar_lea.vmem [#allocation2], %s161
          %s163 = smul.u32 2, %s17
          %s164 = smul.addr %s163, 4
          %s165 = scalar_lea.vmem %s1, %s164
          // Predicated region
          $region25: #{mod_rztx_decoder_layer.12} parent=23 // pred_check
            _
          $region26: #{mod_rztx_decoder_layer.12} parent=23 // pred_check_branch
            %167 = sbr.rel (0) target = $region28
          $region27: #{mod_rztx_decoder_layer.12} parent=23 // pred_region
            // Predicated region
            $region29: #{mod_rztx_decoder_layer.12} parent=27 // pred_check
              _
            $region30: #{mod_rztx_decoder_layer.12} parent=27 // pred_check_branch
              %169 = sbr.rel (0) target = $region32
            $region31: #{mod_rztx_decoder_layer.12} parent=27 // pred_region
              // Predicated region
              $region44: #{mod_rztx_decoder_layer.12} parent=31 // pred_check
                _
              $region45: #{mod_rztx_decoder_layer.12} parent=31 // pred_check_branch
                %246 = sbr.rel (0) target = $region47
              $region46: #{mod_rztx_decoder_layer.12} parent=31 // pred_region
                loop: start=0, step=1, limit=1
                $region48: #{mod_rztx_decoder_layer.12} parent=46 // loop_pre_header
                  _
                $region49: #{mod_rztx_decoder_layer.12} parent=46 // loop_header
                  %s248 = sphi 0, %s252
                  %p249 = scmp.ge.s32.totalorder %s248, 1
                  %s253 = sphi %s165, %s165
                  %s254 = sphi %s162, %s162
                $region50: #{mod_rztx_decoder_layer.12} parent=46 // loop_header_branch
                  %251 = sbr.rel (%p249) target = $region54
                $region51: #{mod_rztx_decoder_layer.12} parent=46 // loop_body
                  %v255 = vld [vmem:[%s253] sm:$0xff]
                  %256 = vst [vmem:[%s254] sm:$0xff] %v255
                  %v257 = vld [vmem:[%s253 + $0x10] sm:$0xff]
                  %258 = vst [vmem:[%s254 + $0x8] sm:$0xff] %v257
                  %v259 = vld [vmem:[%s253 + $0x20] sm:$0xff]
                  %260 = vst [vmem:[%s254 + $0x10] sm:$0xff] %v259
                  %v261 = vld [vmem:[%s253 + $0x30] sm:$0xff]
                  %262 = vst [vmem:[%s254 + $0x18] sm:$0xff] %v261
                  %v263 = vld [vmem:[%s253 + $0x40] sm:$0xff]
                  %264 = vst [vmem:[%s254 + $0x20] sm:$0xff] %v263
                  %v265 = vld [vmem:[%s253 + $0x50] sm:$0xff]
                  %266 = vst [vmem:[%s254 + $0x28] sm:$0xff] %v265
                  %v267 = vld [vmem:[%s253 + $0x60] sm:$0xff]
                  %268 = vst [vmem:[%s254 + $0x30] sm:$0xff] %v267
                  %v269 = vld [vmem:[%s253 + $0x70] sm:$0xff]
                  %270 = vst [vmem:[%s254 + $0x38] sm:$0xff] %v269
                  %v271 = vld [vmem:[%s253 + $0x80] sm:$0xff]
                  %272 = vst [vmem:[%s254 + $0x40] sm:$0xff] %v271
                  %v273 = vld [vmem:[%s253 + $0x90] sm:$0xff]
                  %274 = vst [vmem:[%s254 + $0x48] sm:$0xff] %v273
                  %v275 = vld [vmem:[%s253 + $0xa0] sm:$0xff]
                  %276 = vst [vmem:[%s254 + $0x50] sm:$0xff] %v275
                  %v277 = vld [vmem:[%s253 + $0xb0] sm:$0xff]
                  %278 = vst [vmem:[%s254 + $0x58] sm:$0xff] %v277
                  %v279 = vld [vmem:[%s253 + $0xc0] sm:$0xff]
                  %280 = vst [vmem:[%s254 + $0x60] sm:$0xff] %v279
                  %v281 = vld [vmem:[%s253 + $0xd0] sm:$0xff]
                  %282 = vst [vmem:[%s254 + $0x68] sm:$0xff] %v281
                  %v283 = vld [vmem:[%s253 + $0xe0] sm:$0xff]
                  %284 = vst [vmem:[%s254 + $0x70] sm:$0xff] %v283
                  %v285 = vld [vmem:[%s253 + $0xf0] sm:$0xff]
                  %286 = vst [vmem:[%s254 + $0x78] sm:$0xff] %v285
                  %v287 = vld [vmem:[%s253 + $0x100] sm:$0xff]
                  %288 = vst [vmem:[%s254 + $0x80] sm:$0xff] %v287
                  %v289 = vld [vmem:[%s253 + $0x110] sm:$0xff]
                  %290 = vst [vmem:[%s254 + $0x88] sm:$0xff] %v289
                  %v291 = vld [vmem:[%s253 + $0x120] sm:$0xff]
                  %292 = vst [vmem:[%s254 + $0x90] sm:$0xff] %v291
                  %v293 = vld [vmem:[%s253 + $0x130] sm:$0xff]
                  %294 = vst [vmem:[%s254 + $0x98] sm:$0xff] %v293
                  %v295 = vld [vmem:[%s253 + $0x140] sm:$0xff]
                  %296 = vst [vmem:[%s254 + $0xa0] sm:$0xff] %v295
                  %v297 = vld [vmem:[%s253 + $0x150] sm:$0xff]
                  %298 = vst [vmem:[%s254 + $0xa8] sm:$0xff] %v297
                  %v299 = vld [vmem:[%s253 + $0x160] sm:$0xff]
                  %300 = vst [vmem:[%s254 + $0xb0] sm:$0xff] %v299
                  %v301 = vld [vmem:[%s253 + $0x170] sm:$0xff]
                  %302 = vst [vmem:[%s254 + $0xb8] sm:$0xff] %v301
                  %v303 = vld [vmem:[%s253 + $0x180] sm:$0xff]
                  %304 = vst [vmem:[%s254 + $0xc0] sm:$0xff] %v303
                  %v305 = vld [vmem:[%s253 + $0x190] sm:$0xff]
                  %306 = vst [vmem:[%s254 + $0xc8] sm:$0xff] %v305
                  %v307 = vld [vmem:[%s253 + $0x1a0] sm:$0xff]
                  %308 = vst [vmem:[%s254 + $0xd0] sm:$0xff] %v307
                  %v309 = vld [vmem:[%s253 + $0x1b0] sm:$0xff]
                  %310 = vst [vmem:[%s254 + $0xd8] sm:$0xff] %v309
                  %v311 = vld [vmem:[%s253 + $0x1c0] sm:$0xff]
                  %312 = vst [vmem:[%s254 + $0xe0] sm:$0xff] %v311
                  %v313 = vld [vmem:[%s253 + $0x1d0] sm:$0xff]
                  %314 = vst [vmem:[%s254 + $0xe8] sm:$0xff] %v313
                  %v315 = vld [vmem:[%s253 + $0x1e0] sm:$0xff]
                  %316 = vst [vmem:[%s254 + $0xf0] sm:$0xff] %v315
                  %v317 = vld [vmem:[%s253 + $0x1f0] sm:$0xff]
                  %318 = vst [vmem:[%s254 + $0xf8] sm:$0xff] %v317
                $region52: #{mod_rztx_decoder_layer.12} parent=46 // loop_footer
                  %s252 = sadd.s32 1, %s248
                $region53: #{mod_rztx_decoder_layer.12} parent=46 // loop_footer_branch
                  %247 = sbr.rel target = $region49
                $region54: #{mod_rztx_decoder_layer.12} parent=46 // loop_exit
                  _
              $region47: #{mod_rztx_decoder_layer.12} parent=31 // pred_fallthru
                _
              // Predicated region
              $region55: #{mod_rztx_decoder_layer.12} parent=31 // pred_check
                _
              $region56: #{mod_rztx_decoder_layer.12} parent=31 // pred_check_branch
                %320 = sbr.rel target = $region58
              $region57: #{mod_rztx_decoder_layer.12} parent=31 // pred_region
                _
              $region58: #{mod_rztx_decoder_layer.12} parent=31 // pred_fallthru
                _
            $region32: #{mod_rztx_decoder_layer.12} parent=27 // pred_fallthru
              _
            // Predicated region
            $region33: #{mod_rztx_decoder_layer.12} parent=27 // pred_check
              _
            $region34: #{mod_rztx_decoder_layer.12} parent=27 // pred_check_branch
              %171 = sbr.rel target = $region36
            $region35: #{mod_rztx_decoder_layer.12} parent=27 // pred_region
              loop: start=0, step=1, limit=1
              $region37: #{mod_rztx_decoder_layer.12} parent=35 // loop_pre_header
                _
              $region38: #{mod_rztx_decoder_layer.12} parent=35 // loop_header
                %s174 = sphi 0, %s178
                %p175 = scmp.ge.s32.totalorder %s174, 1
                %s179 = sphi %s165, %s165
                %s180 = sphi %s162, %s162
              $region39: #{mod_rztx_decoder_layer.12} parent=35 // loop_header_branch
                %177 = sbr.rel (%p175) target = $region43
              $region40: #{mod_rztx_decoder_layer.12} parent=35 // loop_body
                %v181 = vld [vmem:[%s179] sm:$0xff]
                %182 = vst [vmem:[%s180] sm:$0xff] %v181
                %v183 = vld [vmem:[%s179 + $0x10] sm:$0xff]
                %184 = vst [vmem:[%s180 + $0x8] sm:$0xff] %v183
                %v185 = vld [vmem:[%s179 + $0x20] sm:$0xff]
                %186 = vst [vmem:[%s180 + $0x10] sm:$0xff] %v185
                %v187 = vld [vmem:[%s179 + $0x30] sm:$0xff]
                %188 = vst [vmem:[%s180 + $0x18] sm:$0xff] %v187
                %v189 = vld [vmem:[%s179 + $0x40] sm:$0xff]
                %190 = vst [vmem:[%s180 + $0x20] sm:$0xff] %v189
                %v191 = vld [vmem:[%s179 + $0x50] sm:$0xff]
                %192 = vst [vmem:[%s180 + $0x28] sm:$0xff] %v191
                %v193 = vld [vmem:[%s179 + $0x60] sm:$0xff]
                %194 = vst [vmem:[%s180 + $0x30] sm:$0xff] %v193
                %v195 = vld [vmem:[%s179 + $0x70] sm:$0xff]
                %196 = vst [vmem:[%s180 + $0x38] sm:$0xff] %v195
                %v197 = vld [vmem:[%s179 + $0x80] sm:$0xff]
                %198 = vst [vmem:[%s180 + $0x40] sm:$0xff] %v197
                %v199 = vld [vmem:[%s179 + $0x90] sm:$0xff]
                %200 = vst [vmem:[%s180 + $0x48] sm:$0xff] %v199
                %v201 = vld [vmem:[%s179 + $0xa0] sm:$0xff]
                %202 = vst [vmem:[%s180 + $0x50] sm:$0xff] %v201
                %v203 = vld [vmem:[%s179 + $0xb0] sm:$0xff]
                %204 = vst [vmem:[%s180 + $0x58] sm:$0xff] %v203
                %v205 = vld [vmem:[%s179 + $0xc0] sm:$0xff]
                %206 = vst [vmem:[%s180 + $0x60] sm:$0xff] %v205
                %v207 = vld [vmem:[%s179 + $0xd0] sm:$0xff]
                %208 = vst [vmem:[%s180 + $0x68] sm:$0xff] %v207
                %v209 = vld [vmem:[%s179 + $0xe0] sm:$0xff]
                %210 = vst [vmem:[%s180 + $0x70] sm:$0xff] %v209
                %v211 = vld [vmem:[%s179 + $0xf0] sm:$0xff]
                %212 = vst [vmem:[%s180 + $0x78] sm:$0xff] %v211
                %v213 = vld [vmem:[%s179 + $0x100] sm:$0xff]
                %214 = vst [vmem:[%s180 + $0x80] sm:$0xff] %v213
                %v215 = vld [vmem:[%s179 + $0x110] sm:$0xff]
                %216 = vst [vmem:[%s180 + $0x88] sm:$0xff] %v215
                %v217 = vld [vmem:[%s179 + $0x120] sm:$0xff]
                %218 = vst [vmem:[%s180 + $0x90] sm:$0xff] %v217
                %v219 = vld [vmem:[%s179 + $0x130] sm:$0xff]
                %220 = vst [vmem:[%s180 + $0x98] sm:$0xff] %v219
                %v221 = vld [vmem:[%s179 + $0x140] sm:$0xff]
                %222 = vst [vmem:[%s180 + $0xa0] sm:$0xff] %v221
                %v223 = vld [vmem:[%s179 + $0x150] sm:$0xff]
                %224 = vst [vmem:[%s180 + $0xa8] sm:$0xff] %v223
                %v225 = vld [vmem:[%s179 + $0x160] sm:$0xff]
                %226 = vst [vmem:[%s180 + $0xb0] sm:$0xff] %v225
                %v227 = vld [vmem:[%s179 + $0x170] sm:$0xff]
                %228 = vst [vmem:[%s180 + $0xb8] sm:$0xff] %v227
                %v229 = vld [vmem:[%s179 + $0x180] sm:$0xff]
                %230 = vst [vmem:[%s180 + $0xc0] sm:$0xff] %v229
                %v231 = vld [vmem:[%s179 + $0x190] sm:$0xff]
                %232 = vst [vmem:[%s180 + $0xc8] sm:$0xff] %v231
                %v233 = vld [vmem:[%s179 + $0x1a0] sm:$0xff]
                %234 = vst [vmem:[%s180 + $0xd0] sm:$0xff] %v233
                %v235 = vld [vmem:[%s179 + $0x1b0] sm:$0xff]
                %236 = vst [vmem:[%s180 + $0xd8] sm:$0xff] %v235
                %v237 = vld [vmem:[%s179 + $0x1c0] sm:$0xff]
                %238 = vst [vmem:[%s180 + $0xe0] sm:$0xff] %v237
                %v239 = vld [vmem:[%s179 + $0x1d0] sm:$0xff]
                %240 = vst [vmem:[%s180 + $0xe8] sm:$0xff] %v239
                %v241 = vld [vmem:[%s179 + $0x1e0] sm:$0xff]
                %242 = vst [vmem:[%s180 + $0xf0] sm:$0xff] %v241
                %v243 = vld [vmem:[%s179 + $0x1f0] sm:$0xff]
                %244 = vst [vmem:[%s180 + $0xf8] sm:$0xff] %v243
              $region41: #{mod_rztx_decoder_layer.12} parent=35 // loop_footer
                %s178 = sadd.s32 1, %s174
              $region42: #{mod_rztx_decoder_layer.12} parent=35 // loop_footer_branch
                %173 = sbr.rel target = $region38
              $region43: #{mod_rztx_decoder_layer.12} parent=35 // loop_exit
                _
            $region36: #{mod_rztx_decoder_layer.12} parent=27 // pred_fallthru
              _
          $region28: #{mod_rztx_decoder_layer.12} parent=23 // pred_fallthru
            _
          %321 = vnop
        $region24: #{mod_rztx_decoder_layer.12} parent=15 // pred_fallthru
          _
        // Predicated region
        $region59: #{mod_rztx_decoder_layer.12} parent=15 // pred_check
          %p322 = pneg %p93
        $region60: #{mod_rztx_decoder_layer.12} parent=15 // pred_check_branch
          %324 = sbr.rel (%p322) target = $region62
        $region61: #{mod_rztx_decoder_layer.12} parent=15 // pred_region
          %s325 = smul.u32 2, %s17
          %p326 = scmp.lt.s32.totalorder %s325, 3
          %s327 = scalar_select %p326, %s325, 3
          %s328 = scalar_lea.vmem %s2, %s327
          %s329 = smul.u32 2, %s17
        $region62: #{mod_rztx_decoder_layer.12} parent=15 // pred_fallthru
          _
      $region16: #{mod_rztx_decoder_layer.12} parent=5 // pred_fallthru
        _
      %p330 = scmp.le.s32.totalorder 1, %s9
      %p331 = scmp.lt.s32.totalorder %s9, 7
      %p332 = pnand %p330, %p331
      %p333 = pneg %p332
      // Predicated region
      $region63: #{mod_rztx_decoder_layer.12} parent=5 // pred_check
        _
      $region64: #{mod_rztx_decoder_layer.12} parent=5 // pred_check_branch
        %335 = sbr.rel (%p332) target = $region66
      $region65: #{mod_rztx_decoder_layer.12} parent=5 // pred_region
        %s336 = ssub.s32 %s9, 1
        %s337 = sand.u32 %s60, 1
        %s338 = sand.u32 %s60, 1
        %s339 = smul.addr %s338, 256
        %s340 = scalar_lea.vmem [#allocation2], %s339
        // Predicated region
        $region67: #{mod_rztx_decoder_layer.12} parent=65 // pred_check
          %p341 = pneg %p73
        $region68: #{mod_rztx_decoder_layer.12} parent=65 // pred_check_branch
          %343 = sbr.rel (%p341) target = $region70
        $region69: #{mod_rztx_decoder_layer.12} parent=65 // pred_region
          _
        $region70: #{mod_rztx_decoder_layer.12} parent=65 // pred_fallthru
          _
        %s344 = smul.u32 2, %s18
        %p345 = scmp.lt.s32.totalorder %s344, 5
        %s346 = scalar_select %p345, %s344, 5
        %s347 = smul.addr %s346, 2
        %s348 = smul.addr %s347, 8
        %s349 = scalar_lea.vmem %s0, %s348
        %p350 = pneg %p47
        %p351 = pneg %p44
        %s352 = sand.u32 %s60, 1
        %s353 = sand.u32 %s60, 1
        %s354 = smul.addr %s353, 256
        %s355 = scalar_lea.vmem [#allocation2], %s354
        %p356 = pneg %p73
        %p357 = pneg %p70
        %s358 = smul.u32 2, %s19
        %p359 = scmp.lt.s32.totalorder %s358, 3
        %s360 = scalar_select %p359, %s358, 3
        %s361 = scalar_lea.vmem %s2, %s360
        %p362 = pneg %p99
        %p363 = pneg %p96
        %p364 = pneg %p127
        %p365 = pneg %p124
        %s366 = sand.u32 %s114, 1
        %s367 = sand.u32 %s114, 1
        %s368 = smul.addr %s367, 16
        %s369 = scalar_lea.vmem [#allocation3], %s368
        %s370 = smul.u32 2, %s18
        %p371 = scmp.lt.s32.totalorder %s370, 5
        %s372 = scalar_select %p371, %s370, 5
        %s373 = smul.addr %s372, 2
        %s374 = smul.addr %s373, 8
        %s375 = scalar_lea.vmem %s0, %s374
        %s376 = smul.u32 2, %s18
        %s377 = smul.u32 2, %s19
        %s378 = smul.u32 2, %s19
        %p379 = scmp.lt.s32.totalorder %s378, 3
        %s380 = scalar_select %p379, %s378, 3
        %s381 = scalar_lea.vmem %s2, %s380
        %s382 = smul.u32 2, %s19
        %s383 = smul.u32 2, %s18
        %s384 = smul.u32 2, %s19
        %v385 = vld [vmem:[%s375] sm:$0xff]
        %v386 = vld [vmem:[%s375 + $0x8] sm:$0xff]
        %v387 = vld [vmem:[%s375 + $0x10] sm:$0xff]
        %v388 = vld [vmem:[%s375 + $0x18] sm:$0xff]
        %v389 = vpack.c.bf16 %v387, %v385
        %v390 = vpack.c.bf16 %v388, %v386
        %v391 = vld [vmem:[%s340] sm:$0xff]
        %v392 = vld [vmem:[%s340 + $0x8] sm:$0xff]
        %v393 = vld [vmem:[%s340 + $0x10] sm:$0xff]
        %v394 = vld [vmem:[%s340 + $0x18] sm:$0xff]
        %v395 = vld [vmem:[%s340 + $0x20] sm:$0xff]
        %v396 = vld [vmem:[%s340 + $0x28] sm:$0xff]
        %v397 = vld [vmem:[%s340 + $0x30] sm:$0xff]
        %v398 = vld [vmem:[%s340 + $0x38] sm:$0xff]
        %v399 = vld [vmem:[%s340 + $0x40] sm:$0xff]
        %v400 = vld [vmem:[%s340 + $0x48] sm:$0xff]
        %v401 = vld [vmem:[%s340 + $0x50] sm:$0xff]
        %v402 = vld [vmem:[%s340 + $0x58] sm:$0xff]
        %v403 = vld [vmem:[%s340 + $0x60] sm:$0xff]
        %v404 = vld [vmem:[%s340 + $0x68] sm:$0xff]
        %v405 = vld [vmem:[%s340 + $0x70] sm:$0xff]
        %v406 = vld [vmem:[%s340 + $0x78] sm:$0xff]
        %v407 = vld [vmem:[%s340 + $0x80] sm:$0xff]
        %v408 = vld [vmem:[%s340 + $0x88] sm:$0xff]
        %v409 = vld [vmem:[%s340 + $0x90] sm:$0xff]
        %v410 = vld [vmem:[%s340 + $0x98] sm:$0xff]
        %v411 = vld [vmem:[%s340 + $0xa0] sm:$0xff]
        %v412 = vld [vmem:[%s340 + $0xa8] sm:$0xff]
        %v413 = vld [vmem:[%s340 + $0xb0] sm:$0xff]
        %v414 = vld [vmem:[%s340 + $0xb8] sm:$0xff]
        %v415 = vld [vmem:[%s340 + $0xc0] sm:$0xff]
        %v416 = vld [vmem:[%s340 + $0xc8] sm:$0xff]
        %v417 = vld [vmem:[%s340 + $0xd0] sm:$0xff]
        %v418 = vld [vmem:[%s340 + $0xd8] sm:$0xff]
        %v419 = vld [vmem:[%s340 + $0xe0] sm:$0xff]
        %v420 = vld [vmem:[%s340 + $0xe8] sm:$0xff]
        %v421 = vld [vmem:[%s340 + $0xf0] sm:$0xff]
        %v422 = vld [vmem:[%s340 + $0xf8] sm:$0xff]
        %v423 = vld [vmem:[%s381] sm:$0x3]
        %v425 = vlaneseq
        %v426 = vshrl.u32 %v425, 7
        %v427 = vsub.s32 0, %v426
        %v428 = vrot.slane %v423, %v427
        %v429 = vlaneseq
        %v430 = vshrl.u32 %v429, 7
        %v431 = vsub.s32 1, %v430
        %v432 = vrot.slane %v423, %v431
        %v467 = vunpack.c.l.b16 %v391
        %v468 = vunpack.c.h.b16 %v391
        %v469 = vunpack.c.l.b16 %v392
        %v470 = vunpack.c.h.b16 %v392
        %v471 = vunpack.c.l.b16 %v393
        %v472 = vunpack.c.h.b16 %v393
        %v473 = vunpack.c.l.b16 %v394
        %v474 = vunpack.c.h.b16 %v394
        %v475 = vunpack.c.l.b16 %v395
        %v476 = vunpack.c.h.b16 %v395
        %v477 = vunpack.c.l.b16 %v396
        %v478 = vunpack.c.h.b16 %v396
        %v479 = vunpack.c.l.b16 %v397
        %v480 = vunpack.c.h.b16 %v397
        %v481 = vunpack.c.l.b16 %v398
        %v482 = vunpack.c.h.b16 %v398
        %v483 = vunpack.c.l.b16 %v399
        %v484 = vunpack.c.h.b16 %v399
        %v485 = vunpack.c.l.b16 %v400
        %v486 = vunpack.c.h.b16 %v400
        %v487 = vunpack.c.l.b16 %v401
        %v488 = vunpack.c.h.b16 %v401
        %v489 = vunpack.c.l.b16 %v402
        %v490 = vunpack.c.h.b16 %v402
        %v491 = vunpack.c.l.b16 %v403
        %v492 = vunpack.c.h.b16 %v403
        %v493 = vunpack.c.l.b16 %v404
        %v494 = vunpack.c.h.b16 %v404
        %v495 = vunpack.c.l.b16 %v405
        %v496 = vunpack.c.h.b16 %v405
        %v497 = vunpack.c.l.b16 %v406
        %v498 = vunpack.c.h.b16 %v406
        %v499 = vunpack.c.l.b16 %v407
        %v500 = vunpack.c.h.b16 %v407
        %v501 = vunpack.c.l.b16 %v408
        %v502 = vunpack.c.h.b16 %v408
        %v503 = vunpack.c.l.b16 %v409
        %v504 = vunpack.c.h.b16 %v409
        %v505 = vunpack.c.l.b16 %v410
        %v506 = vunpack.c.h.b16 %v410
        %v507 = vunpack.c.l.b16 %v411
        %v508 = vunpack.c.h.b16 %v411
        %v509 = vunpack.c.l.b16 %v412
        %v510 = vunpack.c.h.b16 %v412
        %v511 = vunpack.c.l.b16 %v413
        %v512 = vunpack.c.h.b16 %v413
        %v513 = vunpack.c.l.b16 %v414
        %v514 = vunpack.c.h.b16 %v414
        %v515 = vunpack.c.l.b16 %v415
        %v516 = vunpack.c.h.b16 %v415
        %v517 = vunpack.c.l.b16 %v416
        %v518 = vunpack.c.h.b16 %v416
        %v519 = vunpack.c.l.b16 %v417
        %v520 = vunpack.c.h.b16 %v417
        %v521 = vunpack.c.l.b16 %v418
        %v522 = vunpack.c.h.b16 %v418
        %v523 = vunpack.c.l.b16 %v419
        %v524 = vunpack.c.h.b16 %v419
        %v525 = vunpack.c.l.b16 %v420
        %v526 = vunpack.c.h.b16 %v420
        %v527 = vunpack.c.l.b16 %v421
        %v528 = vunpack.c.h.b16 %v421
        %v529 = vunpack.c.l.b16 %v422
        %v530 = vunpack.c.h.b16 %v422
        %v531 = vpack.c.b16 %v469, %v467
        %v532 = vpack.c.b16 %v470, %v468
        %v533 = vpack.c.b16 %v473, %v471
        %v534 = vpack.c.b16 %v474, %v472
        %v535 = vpack.c.b16 %v477, %v475
        %v536 = vpack.c.b16 %v478, %v476
        %v537 = vpack.c.b16 %v481, %v479
        %v538 = vpack.c.b16 %v482, %v480
        %v539 = vpack.c.b16 %v485, %v483
        %v540 = vpack.c.b16 %v486, %v484
        %v541 = vpack.c.b16 %v489, %v487
        %v542 = vpack.c.b16 %v490, %v488
        %v543 = vpack.c.b16 %v493, %v491
        %v544 = vpack.c.b16 %v494, %v492
        %v545 = vpack.c.b16 %v497, %v495
        %v546 = vpack.c.b16 %v498, %v496
        %v547 = vpack.c.b16 %v501, %v499
        %v548 = vpack.c.b16 %v502, %v500
        %v549 = vpack.c.b16 %v505, %v503
        %v550 = vpack.c.b16 %v506, %v504
        %v551 = vpack.c.b16 %v509, %v507
        %v552 = vpack.c.b16 %v510, %v508
        %v553 = vpack.c.b16 %v513, %v511
        %v554 = vpack.c.b16 %v514, %v512
        %v555 = vpack.c.b16 %v517, %v515
        %v556 = vpack.c.b16 %v518, %v516
        %v557 = vpack.c.b16 %v521, %v519
        %v558 = vpack.c.b16 %v522, %v520
        %v559 = vpack.c.b16 %v525, %v523
        %v560 = vpack.c.b16 %v526, %v524
        %v561 = vpack.c.b16 %v529, %v527
        %v562 = vpack.c.b16 %v530, %v528
        %595 = vmatprep.subr.bf16.mxu0 %v532
        %596 = vmatpush1.bf16.msra.mxu0 %v531
        %597 = vmatprep.subr.bf16.mxu0 %v534
        %598 = vmatpush1.bf16.msra.mxu0 %v533
        %599 = vmatprep.subr.bf16.mxu0 %v536
        %600 = vmatpush1.bf16.msra.mxu0 %v535
        %601 = vmatprep.subr.bf16.mxu0 %v538
        %602 = vmatpush1.bf16.msra.mxu0 %v537
        %603 = vmatprep.subr.bf16.mxu0 %v540
        %604 = vmatpush1.bf16.msra.mxu0 %v539
        %605 = vmatprep.subr.bf16.mxu0 %v542
        %606 = vmatpush1.bf16.msra.mxu0 %v541
        %607 = vmatprep.subr.bf16.mxu0 %v544
        %608 = vmatpush1.bf16.msra.mxu0 %v543
        %609 = vmatprep.subr.bf16.mxu0 %v546
        %610 = vmatpush1.bf16.msra.mxu0 %v545
        %611 = vmatprep.subr.bf16.mxu0 %v548
        %612 = vmatpush1.bf16.msra.mxu0 %v547
        %613 = vmatprep.subr.bf16.mxu0 %v550
        %614 = vmatpush1.bf16.msra.mxu0 %v549
        %615 = vmatprep.subr.bf16.mxu0 %v552
        %616 = vmatpush1.bf16.msra.mxu0 %v551
        %617 = vmatprep.subr.bf16.mxu0 %v554
        %618 = vmatpush1.bf16.msra.mxu0 %v553
        %619 = vmatprep.subr.bf16.mxu0 %v556
        %620 = vmatpush1.bf16.msra.mxu0 %v555
        %621 = vmatprep.subr.bf16.mxu0 %v558
        %622 = vmatpush1.bf16.msra.mxu0 %v557
        %623 = vmatprep.subr.bf16.mxu0 %v560
        %624 = vmatpush1.bf16.msra.mxu0 %v559
        %625 = vmatprep.subr.bf16.mxu0 %v562
        %626 = vmatpush1.bf16.msra.mxu0 %v561
        %627 = vmatprep.mubr.bf16.mxu0 %v390
        %628 = vmatmul.mubr.bf16.gmra.mrb[0].mxu0 %v389
        %v629 = vpop.f32.mrb[0].mxu0
        %v630 = vadd.f32 %v428, %v629
        %v631 = vpop.f32.mrb[0].mxu0
        %v632 = vadd.f32 %v432, %v631
        %v633 = vpop.f32.mrb[0].mxu0
        %v634 = vadd.f32 %v428, %v633
        %v635 = vpop.f32.mrb[0].mxu0
        %v636 = vadd.f32 %v432, %v635
        %637 = vdwg.mxu0
        %v638 = vpack.c.bf16 %v634, %v630
        %v639 = vpack.c.bf16 %v636, %v632
        %v642 = vunpack.c.l.b16 %v638
        %v643 = vunpack.c.l.b16 %v639
        %v644 = vunpack.c.h.b16 %v638
        %v645 = vunpack.c.h.b16 %v639
        %v646 = vpack.c.b16 %v643, %v642
        %v647 = vpack.c.b16 %v645, %v644
        %650 = vst [vmem:[%s369] sm:$0xff] %v646
        %651 = vst [vmem:[%s369 + $0x8] sm:$0xff] %v647
        %s652 = sand.u32 %s114, 1
        %s653 = sand.u32 %s114, 1
        %s654 = smul.addr %s653, 16
        %s655 = scalar_lea.vmem [#allocation3], %s654
        // Predicated region
        $region71: #{mod_rztx_decoder_layer.12} parent=65 // pred_check
          %p656 = pneg %p124
        $region72: #{mod_rztx_decoder_layer.12} parent=65 // pred_check_branch
          %658 = sbr.rel (%p656) target = $region74
        $region73: #{mod_rztx_decoder_layer.12} parent=65 // pred_region
          %s659 = smul.u32 2, %s18
          %s660 = smul.u32 2, %s19
          %s661 = smul.addr %s659, 4
          %s662 = sadd.s32 %s660, %s661
          %s663 = smul.addr %s662, 4
          %s664 = scalar_lea.vmem %s3, %s663
          // Predicated region
          $region75: #{mod_rztx_decoder_layer.12} parent=73 // pred_check
            _
          $region76: #{mod_rztx_decoder_layer.12} parent=73 // pred_check_branch
            %666 = sbr.rel (0) target = $region78
          $region77: #{mod_rztx_decoder_layer.12} parent=73 // pred_region
            // Predicated region
            $region79: #{mod_rztx_decoder_layer.12} parent=77 // pred_check
              _
            $region80: #{mod_rztx_decoder_layer.12} parent=77 // pred_check_branch
              %668 = sbr.rel (0) target = $region82
            $region81: #{mod_rztx_decoder_layer.12} parent=77 // pred_region
              // Predicated region
              $region94: #{mod_rztx_decoder_layer.12} parent=81 // pred_check
                _
              $region95: #{mod_rztx_decoder_layer.12} parent=81 // pred_check_branch
                %685 = sbr.rel (0) target = $region97
              $region96: #{mod_rztx_decoder_layer.12} parent=81 // pred_region
                loop: start=0, step=1, limit=1
                $region98: #{mod_rztx_decoder_layer.12} parent=96 // loop_pre_header
                  _
                $region99: #{mod_rztx_decoder_layer.12} parent=96 // loop_header
                  %s687 = sphi 0, %s691
                  %p688 = scmp.ge.s32.totalorder %s687, 1
                  %s692 = sphi %s655, %s655
                  %s693 = sphi %s664, %s664
                $region100: #{mod_rztx_decoder_layer.12} parent=96 // loop_header_branch
                  %690 = sbr.rel (%p688) target = $region104
                $region101: #{mod_rztx_decoder_layer.12} parent=96 // loop_body
                  %v694 = vld [vmem:[%s692] sm:$0xff]
                  %695 = vst [vmem:[%s693] sm:$0xff] %v694
                  %v696 = vld [vmem:[%s692 + $0x8] sm:$0xff]
                  %697 = vst [vmem:[%s693 + $0x10] sm:$0xff] %v696
                $region102: #{mod_rztx_decoder_layer.12} parent=96 // loop_footer
                  %s691 = sadd.s32 1, %s687
                $region103: #{mod_rztx_decoder_layer.12} parent=96 // loop_footer_branch
                  %686 = sbr.rel target = $region99
                $region104: #{mod_rztx_decoder_layer.12} parent=96 // loop_exit
                  _
              $region97: #{mod_rztx_decoder_layer.12} parent=81 // pred_fallthru
                _
              // Predicated region
              $region105: #{mod_rztx_decoder_layer.12} parent=81 // pred_check
                _
              $region106: #{mod_rztx_decoder_layer.12} parent=81 // pred_check_branch
                %699 = sbr.rel target = $region108
              $region107: #{mod_rztx_decoder_layer.12} parent=81 // pred_region
                _
              $region108: #{mod_rztx_decoder_layer.12} parent=81 // pred_fallthru
                _
            $region82: #{mod_rztx_decoder_layer.12} parent=77 // pred_fallthru
              _
            // Predicated region
            $region83: #{mod_rztx_decoder_layer.12} parent=77 // pred_check
              _
            $region84: #{mod_rztx_decoder_layer.12} parent=77 // pred_check_branch
              %670 = sbr.rel target = $region86
            $region85: #{mod_rztx_decoder_layer.12} parent=77 // pred_region
              loop: start=0, step=1, limit=1
              $region87: #{mod_rztx_decoder_layer.12} parent=85 // loop_pre_header
                _
              $region88: #{mod_rztx_decoder_layer.12} parent=85 // loop_header
                %s673 = sphi 0, %s677
                %p674 = scmp.ge.s32.totalorder %s673, 1
                %s678 = sphi %s655, %s655
                %s679 = sphi %s664, %s664
              $region89: #{mod_rztx_decoder_layer.12} parent=85 // loop_header_branch
                %676 = sbr.rel (%p674) target = $region93
              $region90: #{mod_rztx_decoder_layer.12} parent=85 // loop_body
                %v680 = vld [vmem:[%s678] sm:$0xff]
                %681 = vst [vmem:[%s679] sm:$0xff] %v680
                %v682 = vld [vmem:[%s678 + $0x8] sm:$0xff]
                %683 = vst [vmem:[%s679 + $0x10] sm:$0xff] %v682
              $region91: #{mod_rztx_decoder_layer.12} parent=85 // loop_footer
                %s677 = sadd.s32 1, %s673
              $region92: #{mod_rztx_decoder_layer.12} parent=85 // loop_footer_branch
                %672 = sbr.rel target = $region88
              $region93: #{mod_rztx_decoder_layer.12} parent=85 // loop_exit
                _
            $region86: #{mod_rztx_decoder_layer.12} parent=77 // pred_fallthru
              _
          $region78: #{mod_rztx_decoder_layer.12} parent=73 // pred_fallthru
            _
          %700 = vnop
        $region74: #{mod_rztx_decoder_layer.12} parent=65 // pred_fallthru
          _
      $region66: #{mod_rztx_decoder_layer.12} parent=5 // pred_fallthru
        _
      %p701 = scmp.le.s32.totalorder 2, %s9
      // Predicated region
      $region109: #{mod_rztx_decoder_layer.12} parent=5 // pred_check
        %p702 = pneg %p701
      $region110: #{mod_rztx_decoder_layer.12} parent=5 // pred_check_branch
        %704 = sbr.rel (%p702) target = $region112
      $region111: #{mod_rztx_decoder_layer.12} parent=5 // pred_region
        %s705 = ssub.s32 %s9, 2
        // Predicated region
        $region113: #{mod_rztx_decoder_layer.12} parent=111 // pred_check
          %p706 = pneg %p130
        $region114: #{mod_rztx_decoder_layer.12} parent=111 // pred_check_branch
          %708 = sbr.rel (%p706) target = $region116
        $region115: #{mod_rztx_decoder_layer.12} parent=111 // pred_region
          %s709 = sand.u32 %s115, 1
          %s710 = sand.u32 %s115, 1
          %s711 = smul.addr %s710, 16
          %s712 = scalar_lea.vmem [#allocation3], %s711
        $region116: #{mod_rztx_decoder_layer.12} parent=111 // pred_fallthru
          _
      $region112: #{mod_rztx_decoder_layer.12} parent=5 // pred_fallthru
        _
    $region6: #{mod_rztx_decoder_layer.12} parent=1 // loop_footer
      %s13 = sadd.s32 1, %s9
    $region7: #{mod_rztx_decoder_layer.12} parent=1 // loop_footer_branch
      %8 = sbr.rel target = $region3
    $region8: #{mod_rztx_decoder_layer.12} parent=1 // loop_exit
      _

// kernel: mod_rztx_decoder_layer.13
$region0: #{mod_rztx_decoder_layer.13}
  #allocation0 [shape = 'u32[]', space=smem, size = 0x4, offset = 0x4, fixed_abs, tag = 'smem constant byte address 0x4 - core index']
  #allocation1 [shape = 'u32[144,128]{1,0:T(1,128)}', space=vmem, size = 0x12000, scoped, tag = 'internal scratch']
  %s0 = inlined_call_operand.vmem [shape: bf16[2,2,16,128], index: 0, kind: input, shape index: {}]
  %s1 = inlined_call_operand.vmem [shape: bf16[2,2,128,128], index: 1, kind: input, shape index: {}]
  %s2 = inlined_call_operand.vmem [shape: bf16[2,2,128,128], index: 2, kind: input, shape index: {}]
  %s3 = inlined_call_operand.vmem [shape: f32[2,16,128], index: 3, kind: input, shape index: {}]
  %s4 = inlined_call_operand.vmem [shape: bf16[2,2,16,128], index: 4, kind: output, shape index: {0}]
  %s5 = inlined_call_operand.hbm [shape: f32[2,16,128], index: 5, kind: output, shape index: {1}]
  %6 = xla_tuple %s4, %s5
  %s7 = sld [smem:[#allocation0]]
  $region57: #{mod_rztx_decoder_layer.13} parent=0
    _
  %s9 = ssub.s32 1, %s7
  %s10 = scalar_select 0, %s9, %s7
  $region1: #{mod_rztx_decoder_layer.13} parent=0
    #allocation2 [shape = 'u8[16384]{0}', space=vmem, size = 0x4000, scoped, tag = 'output window, operand 1']
    #allocation3 [shape = 's32[2]{0}', space=sflag, size = 0x8, scoped, tag = 'scoped memory for mod_rztx_decoder_layer.13']
    %11 = vsyncpa [#allocation3], 0
    %s12 = scalar_lea.sflag [#allocation3], 1
    %13 = vsyncpa %s12, 0
    loop: start=0, step=1, limit=4
    $region2: #{mod_rztx_decoder_layer.13} parent=1 // loop_pre_header
      _
    $region3: #{mod_rztx_decoder_layer.13} parent=1 // loop_header
      %s15 = sphi 0, %s19
      %p16 = scmp.ge.s32.totalorder %s15, 4
      %s25 = sphi 0, %s27
      %s28 = sphi 0, %s25
      %s29 = sphi 0, %s28
      %s45 = sphi 0, %s29
      %s51 = sphi 0, %s53
      %s54 = sphi 0, %s51
      %s55 = sphi 0, %s54
      %s71 = sphi 0, %s55
      %s77 = sphi 0, %s79
      %s80 = sphi 0, %s77
      %s81 = sphi 0, %s80
      %s97 = sphi 0, %s81
      %s103 = sphi 0, %s105
      %s106 = sphi 0, %s103
      %s107 = sphi 0, %s106
      %s123 = sphi 0, %s107
      %s129 = sphi 0, %s131
      %s132 = sphi 0, %s129
      %s133 = sphi 0, %s132
      %s149 = sphi 0, %s133
      %s155 = sphi 0, %s157
      %s158 = sphi 0, %s155
      %s159 = sphi 0, %s158
      %s175 = sphi 0, %s159
    $region4: #{mod_rztx_decoder_layer.13} parent=1 // loop_header_branch
      %18 = sbr.rel (%p16) target = $region8
    $region5: #{mod_rztx_decoder_layer.13} parent=1 // loop_body
      %s20 = ssub.s32 %s15, 1
      %s21 = ssub.s32 %s15, 2
      %s22 = sadd.s32 %s15, 1
      %s23 = ssub.s32 %s15, %s22
      %p24 = scmp.eq.s32.totalorder %s23, 0
      %s26 = sadd.s32 %s25, 1
      %s27 = scalar_select %p24, %s25, %s26
      %p30 = pneg %p24
      %p31 = scmp.eq.s32.totalorder %s15, 1
      %p32 = por %p30, %p31
      %p33 = scmp.ne.s32.totalorder %s25, %s28
      %p34 = scmp.eq.s32.totalorder %s15, 0
      %p35 = por %p33, %p34
      %p36 = scmp.ne.s32.totalorder %s25, %s28
      %p37 = scmp.eq.s32.totalorder %s20, 1
      %p38 = por %p36, %p37
      %p39 = scmp.ne.s32.totalorder %s28, %s29
      %p40 = scmp.eq.s32.totalorder %s20, 0
      %p41 = por %p39, %p40
      %p42 = scmp.ne.s32.totalorder %s28, %s29
      %p43 = scmp.eq.s32.totalorder %s21, 1
      %p44 = por %p42, %p43
      %p46 = scmp.ne.s32.totalorder %s29, %s45
      %p47 = scmp.eq.s32.totalorder %s21, 0
      %p48 = por %p46, %p47
      %s49 = ssub.s32 %s15, %s22
      %p50 = scmp.eq.s32.totalorder %s49, 0
      %s52 = sadd.s32 %s51, 1
      %s53 = scalar_select %p50, %s51, %s52
      %p56 = pneg %p50
      %p57 = scmp.eq.s32.totalorder %s15, 1
      %p58 = por %p56, %p57
      %p59 = scmp.ne.s32.totalorder %s51, %s54
      %p60 = scmp.eq.s32.totalorder %s15, 0
      %p61 = por %p59, %p60
      %p62 = scmp.ne.s32.totalorder %s51, %s54
      %p63 = scmp.eq.s32.totalorder %s20, 1
      %p64 = por %p62, %p63
      %p65 = scmp.ne.s32.totalorder %s54, %s55
      %p66 = scmp.eq.s32.totalorder %s20, 0
      %p67 = por %p65, %p66
      %p68 = scmp.ne.s32.totalorder %s54, %s55
      %p69 = scmp.eq.s32.totalorder %s21, 1
      %p70 = por %p68, %p69
      %p72 = scmp.ne.s32.totalorder %s55, %s71
      %p73 = scmp.eq.s32.totalorder %s21, 0
      %p74 = por %p72, %p73
      %s75 = ssub.s32 %s15, %s22
      %p76 = scmp.eq.s32.totalorder %s75, 0
      %s78 = sadd.s32 %s77, 1
      %s79 = scalar_select %p76, %s77, %s78
      %p82 = pneg %p76
      %p83 = scmp.eq.s32.totalorder %s15, 1
      %p84 = por %p82, %p83
      %p85 = scmp.ne.s32.totalorder %s77, %s80
      %p86 = scmp.eq.s32.totalorder %s15, 0
      %p87 = por %p85, %p86
      %p88 = scmp.ne.s32.totalorder %s77, %s80
      %p89 = scmp.eq.s32.totalorder %s20, 1
      %p90 = por %p88, %p89
      %p91 = scmp.ne.s32.totalorder %s80, %s81
      %p92 = scmp.eq.s32.totalorder %s20, 0
      %p93 = por %p91, %p92
      %p94 = scmp.ne.s32.totalorder %s80, %s81
      %p95 = scmp.eq.s32.totalorder %s21, 1
      %p96 = por %p94, %p95
      %p98 = scmp.ne.s32.totalorder %s81, %s97
      %p99 = scmp.eq.s32.totalorder %s21, 0
      %p100 = por %p98, %p99
      %s101 = ssub.s32 %s15, %s22
      %p102 = scmp.eq.s32.totalorder %s101, 0
      %s104 = sadd.s32 %s103, 1
      %s105 = scalar_select %p102, %s103, %s104
      %p108 = pneg %p102
      %p109 = scmp.eq.s32.totalorder %s15, 1
      %p110 = por %p108, %p109
      %p111 = scmp.ne.s32.totalorder %s103, %s106
      %p112 = scmp.eq.s32.totalorder %s15, 0
      %p113 = por %p111, %p112
      %p114 = scmp.ne.s32.totalorder %s103, %s106
      %p115 = scmp.eq.s32.totalorder %s20, 1
      %p116 = por %p114, %p115
      %p117 = scmp.ne.s32.totalorder %s106, %s107
      %p118 = scmp.eq.s32.totalorder %s20, 0
      %p119 = por %p117, %p118
      %p120 = scmp.ne.s32.totalorder %s106, %s107
      %p121 = scmp.eq.s32.totalorder %s21, 1
      %p122 = por %p120, %p121
      %p124 = scmp.ne.s32.totalorder %s107, %s123
      %p125 = scmp.eq.s32.totalorder %s21, 0
      %p126 = por %p124, %p125
      %s127 = ssub.s32 %s15, %s22
      %p128 = scmp.eq.s32.totalorder %s127, 0
      %s130 = sadd.s32 %s129, 1
      %s131 = scalar_select %p128, %s129, %s130
      %p134 = pneg %p128
      %p135 = scmp.eq.s32.totalorder %s15, 1
      %p136 = por %p134, %p135
      %p137 = scmp.ne.s32.totalorder %s129, %s132
      %p138 = scmp.eq.s32.totalorder %s15, 0
      %p139 = por %p137, %p138
      %p140 = scmp.ne.s32.totalorder %s129, %s132
      %p141 = scmp.eq.s32.totalorder %s20, 1
      %p142 = por %p140, %p141
      %p143 = scmp.ne.s32.totalorder %s132, %s133
      %p144 = scmp.eq.s32.totalorder %s20, 0
      %p145 = por %p143, %p144
      %p146 = scmp.ne.s32.totalorder %s132, %s133
      %p147 = scmp.eq.s32.totalorder %s21, 1
      %p148 = por %p146, %p147
      %p150 = scmp.ne.s32.totalorder %s133, %s149
      %p151 = scmp.eq.s32.totalorder %s21, 0
      %p152 = por %p150, %p151
      %s153 = ssub.s32 %s15, %s22
      %p154 = scmp.eq.s32.totalorder %s153, 0
      %s156 = sadd.s32 %s155, 1
      %s157 = scalar_select %p154, %s155, %s156
      %p160 = pneg %p154
      %p161 = scmp.eq.s32.totalorder %s15, 1
      %p162 = por %p160, %p161
      %p163 = scmp.ne.s32.totalorder %s155, %s158
      %p164 = scmp.eq.s32.totalorder %s15, 0
      %p165 = por %p163, %p164
      %p166 = scmp.ne.s32.totalorder %s155, %s158
      %p167 = scmp.eq.s32.totalorder %s20, 1
      %p168 = por %p166, %p167
      %p169 = scmp.ne.s32.totalorder %s158, %s159
      %p170 = scmp.eq.s32.totalorder %s20, 0
      %p171 = por %p169, %p170
      %p172 = scmp.ne.s32.totalorder %s158, %s159
      %p173 = scmp.eq.s32.totalorder %s21, 1
      %p174 = por %p172, %p173
      %p176 = scmp.ne.s32.totalorder %s159, %s175
      %p177 = scmp.eq.s32.totalorder %s21, 0
      %p178 = por %p176, %p177
      %p179 = scmp.le.s32.totalorder 1, %s15
      %p180 = scmp.lt.s32.totalorder %s15, 3
      %p181 = pnand %p179, %p180
      %p182 = pneg %p181
      // Predicated region
      $region9: #{mod_rztx_decoder_layer.13} parent=5 // pred_check
        _
      $region10: #{mod_rztx_decoder_layer.13} parent=5 // pred_check_branch
        %184 = sbr.rel (%p181) target = $region12
      $region11: #{mod_rztx_decoder_layer.13} parent=5 // pred_region
        %s185 = ssub.s32 %s15, 1
      $region12: #{mod_rztx_decoder_layer.13} parent=5 // pred_fallthru
        _
      %p186 = scmp.lt.s32.totalorder %s15, 2
      // Predicated region
      $region13: #{mod_rztx_decoder_layer.13} parent=5 // pred_check
        %p187 = pneg %p186
      $region14: #{mod_rztx_decoder_layer.13} parent=5 // pred_check_branch
        %189 = sbr.rel (%p187) target = $region16
      $region15: #{mod_rztx_decoder_layer.13} parent=5 // pred_region
        // Predicated region
        $region17: #{mod_rztx_decoder_layer.13} parent=15 // pred_check
          %p190 = pneg %p35
        $region18: #{mod_rztx_decoder_layer.13} parent=15 // pred_check_branch
          %192 = sbr.rel (%p190) target = $region20
        $region19: #{mod_rztx_decoder_layer.13} parent=15 // pred_region
          %p193 = scmp.lt.s32.totalorder %s15, 1
          %s194 = scalar_select %p193, %s15, 1
          %s195 = smul.addr %s194, 4
          %s196 = smul.addr %s195, 4
          %s197 = scalar_lea.vmem %s0, %s196
        $region20: #{mod_rztx_decoder_layer.13} parent=15 // pred_fallthru
          _
        // Predicated region
        $region21: #{mod_rztx_decoder_layer.13} parent=15 // pred_check
          %p198 = pneg %p61
        $region22: #{mod_rztx_decoder_layer.13} parent=15 // pred_check_branch
          %200 = sbr.rel (%p198) target = $region24
        $region23: #{mod_rztx_decoder_layer.13} parent=15 // pred_region
          %p201 = scmp.lt.s32.totalorder %s15, 1
          %s202 = scalar_select %p201, %s15, 1
          %s203 = smul.addr %s202, 32
          %s204 = smul.addr %s203, 4
          %s205 = scalar_lea.vmem %s1, %s204
        $region24: #{mod_rztx_decoder_layer.13} parent=15 // pred_fallthru
          _
        // Predicated region
        $region25: #{mod_rztx_decoder_layer.13} parent=15 // pred_check
          %p206 = pneg %p87
        $region26: #{mod_rztx_decoder_layer.13} parent=15 // pred_check_branch
          %208 = sbr.rel (%p206) target = $region28
        $region27: #{mod_rztx_decoder_layer.13} parent=15 // pred_region
          %p209 = scmp.lt.s32.totalorder %s15, 1
          %s210 = scalar_select %p209, %s15, 1
          %s211 = smul.addr %s210, 32
          %s212 = smul.addr %s211, 4
          %s213 = scalar_lea.vmem %s2, %s212
        $region28: #{mod_rztx_decoder_layer.13} parent=15 // pred_fallthru
          _
        // Predicated region
        $region29: #{mod_rztx_decoder_layer.13} parent=15 // pred_check
          %p214 = pneg %p113
        $region30: #{mod_rztx_decoder_layer.13} parent=15 // pred_check_branch
          %216 = sbr.rel (%p214) target = $region32
        $region31: #{mod_rztx_decoder_layer.13} parent=15 // pred_region
          %p217 = scmp.lt.s32.totalorder %s15, 1
          %s218 = scalar_select %p217, %s15, 1
          %s219 = smul.addr %s218, 2
          %s220 = smul.addr %s219, 8
          %s221 = scalar_lea.vmem %s3, %s220
        $region32: #{mod_rztx_decoder_layer.13} parent=15 // pred_fallthru
          _
      $region16: #{mod_rztx_decoder_layer.13} parent=5 // pred_fallthru
        _
      %p222 = scmp.le.s32.totalorder 1, %s15
      %p223 = scmp.lt.s32.totalorder %s15, 3
      %p224 = pnand %p222, %p223
      %p225 = pneg %p224
      // Predicated region
      $region33: #{mod_rztx_decoder_layer.13} parent=5 // pred_check
        _
      $region34: #{mod_rztx_decoder_layer.13} parent=5 // pred_check_branch
        %227 = sbr.rel (%p224) target = $region36
      $region35: #{mod_rztx_decoder_layer.13} parent=5 // pred_region
        %s228 = ssub.s32 %s15, 1
        %p229 = scmp.lt.s32.totalorder %s20, 1
        %s230 = scalar_select %p229, %s20, 1
        %s231 = smul.addr %s230, 4
        %s232 = smul.addr %s231, 4
        %s233 = scalar_lea.vmem %s0, %s232
        %p234 = pneg %p41
        %p235 = pneg %p38
        %p236 = scmp.lt.s32.totalorder %s20, 1
        %s237 = scalar_select %p236, %s20, 1
        %s238 = smul.addr %s237, 32
        %s239 = smul.addr %s238, 4
        %s240 = scalar_lea.vmem %s1, %s239
        %p241 = pneg %p67
        %p242 = pneg %p64
        %p243 = scmp.lt.s32.totalorder %s20, 1
        %s244 = scalar_select %p243, %s20, 1
        %s245 = smul.addr %s244, 32
        %s246 = smul.addr %s245, 4
        %s247 = scalar_lea.vmem %s2, %s246
        %p248 = pneg %p93
        %p249 = pneg %p90
        %p250 = scmp.lt.s32.totalorder %s20, 1
        %s251 = scalar_select %p250, %s20, 1
        %s252 = smul.addr %s251, 2
        %s253 = smul.addr %s252, 8
        %s254 = scalar_lea.vmem %s3, %s253
        %p255 = pneg %p119
        %p256 = pneg %p116
        %p257 = pneg %p145
        %p258 = pneg %p142
        %p259 = scmp.lt.s32.totalorder %s20, 1
        %s260 = scalar_select %p259, %s20, 1
        %s261 = smul.addr %s260, 4
        %s262 = smul.addr %s261, 4
        %s263 = scalar_lea.vmem %s4, %s262
        %p264 = pneg %p171
        %p265 = pneg %p168
        %s266 = sand.u32 %s158, 1
        %s267 = scalar_lea.sflag [#allocation3], %s266
        %s268 = sand.u32 %s158, 1
        %s269 = smul.addr %s268, 16
        %s270 = scalar_lea.vmem [#allocation2], %s269
        %p271 = scmp.lt.s32.totalorder %s20, 1
        %s272 = scalar_select %p271, %s20, 1
        %s273 = smul.addr %s272, 4
        %s274 = smul.addr %s273, 4
        %s275 = scalar_lea.vmem %s0, %s274
        %p276 = scmp.lt.s32.totalorder %s20, 1
        %s277 = scalar_select %p276, %s20, 1
        %s278 = smul.addr %s277, 32
        %s279 = smul.addr %s278, 4
        %s280 = scalar_lea.vmem %s1, %s279
        %p281 = scmp.lt.s32.totalorder %s20, 1
        %s282 = scalar_select %p281, %s20, 1
        %s283 = smul.addr %s282, 32
        %s284 = smul.addr %s283, 4
        %s285 = scalar_lea.vmem %s2, %s284
        %p286 = scmp.lt.s32.totalorder %s20, 1
        %s287 = scalar_select %p286, %s20, 1
        %s288 = smul.addr %s287, 2
        %s289 = smul.addr %s288, 8
        %s290 = scalar_lea.vmem %s3, %s289
        %p291 = scmp.lt.s32.totalorder %s20, 1
        %s292 = scalar_select %p291, %s20, 1
        %s293 = smul.addr %s292, 4
        %s294 = smul.addr %s293, 4
        %s295 = scalar_lea.vmem %s4, %s294
        %v297 = vld [vmem:[%s275] sm:$0xf]
        %v298 = vld [vmem:[%s275 + $0x4] sm:$0xf]
        %v299 = vld [vmem:[%s275 + $0x8] sm:$0xf]
        %v300 = vld [vmem:[%s275 + $0xc] sm:$0xf]
        %v301 = vld [vmem:[%s280] sm:$0xf]
        %v302 = vld [vmem:[%s280 + $0x4] sm:$0xf]
        %v303 = vld [vmem:[%s280 + $0x8] sm:$0xf]
        %v304 = vld [vmem:[%s280 + $0xc] sm:$0xf]
        %v305 = vld [vmem:[%s280 + $0x10] sm:$0xf]
        %v306 = vld [vmem:[%s280 + $0x14] sm:$0xf]
        %v307 = vld [vmem:[%s280 + $0x18] sm:$0xf]
        %v308 = vld [vmem:[%s280 + $0x1c] sm:$0xf]
        %v309 = vld [vmem:[%s280 + $0x20] sm:$0xf]
        %v310 = vld [vmem:[%s280 + $0x24] sm:$0xf]
        %v311 = vld [vmem:[%s280 + $0x28] sm:$0xf]
        %v312 = vld [vmem:[%s280 + $0x2c] sm:$0xf]
        %v313 = vld [vmem:[%s280 + $0x30] sm:$0xf]
        %v314 = vld [vmem:[%s280 + $0x34] sm:$0xf]
        %v315 = vld [vmem:[%s280 + $0x38] sm:$0xf]
        %v316 = vld [vmem:[%s280 + $0x3c] sm:$0xf]
        %v317 = vld [vmem:[%s280 + $0x40] sm:$0xf]
        %v318 = vld [vmem:[%s280 + $0x44] sm:$0xf]
        %v319 = vld [vmem:[%s280 + $0x48] sm:$0xf]
        %v320 = vld [vmem:[%s280 + $0x4c] sm:$0xf]
        %v321 = vld [vmem:[%s280 + $0x50] sm:$0xf]
        %v322 = vld [vmem:[%s280 + $0x54] sm:$0xf]
        %v323 = vld [vmem:[%s280 + $0x58] sm:$0xf]
        %v324 = vld [vmem:[%s280 + $0x5c] sm:$0xf]
        %v325 = vld [vmem:[%s280 + $0x60] sm:$0xf]
        %v326 = vld [vmem:[%s280 + $0x64] sm:$0xf]
        %v327 = vld [vmem:[%s280 + $0x68] sm:$0xf]
        %v328 = vld [vmem:[%s280 + $0x6c] sm:$0xf]
        %v329 = vld [vmem:[%s280 + $0x70] sm:$0xf]
        %v330 = vld [vmem:[%s280 + $0x74] sm:$0xf]
        %v331 = vld [vmem:[%s280 + $0x78] sm:$0xf]
        %v332 = vld [vmem:[%s280 + $0x7c] sm:$0xf]
        %v335 = vunpack.c.l.b16 %v297
        %v336 = vunpack.c.l.b16 %v298
        %v337 = vpack.c.b16 %v336, %v335
        %v355 = vunpack.c.l.b16 %v301
        %v356 = vunpack.c.l.b16 %v302
        %v357 = vunpack.c.l.b16 %v303
        %v358 = vunpack.c.l.b16 %v304
        %v359 = vunpack.c.l.b16 %v305
        %v360 = vunpack.c.l.b16 %v306
        %v361 = vunpack.c.l.b16 %v307
        %v362 = vunpack.c.l.b16 %v308
        %v363 = vunpack.c.l.b16 %v309
        %v364 = vunpack.c.l.b16 %v310
        %v365 = vunpack.c.l.b16 %v311
        %v366 = vunpack.c.l.b16 %v312
        %v367 = vunpack.c.l.b16 %v313
        %v368 = vunpack.c.l.b16 %v314
        %v369 = vunpack.c.l.b16 %v315
        %v370 = vunpack.c.l.b16 %v316
        %v371 = vpack.c.b16 %v356, %v355
        %v372 = vpack.c.b16 %v358, %v357
        %v373 = vpack.c.b16 %v360, %v359
        %v374 = vpack.c.b16 %v362, %v361
        %v375 = vpack.c.b16 %v364, %v363
        %v376 = vpack.c.b16 %v366, %v365
        %v377 = vpack.c.b16 %v368, %v367
        %v378 = vpack.c.b16 %v370, %v369
        %387 = vmatprep.subr.bf16.mxu0 0
        %388 = vmatpush1.bf16.msra.mxu0 %v371
        %389 = vmatprep.subr.bf16.mxu0 0
        %390 = vmatpush1.bf16.msra.mxu0 %v372
        %391 = vmatprep.subr.bf16.mxu0 0
        %392 = vmatpush1.bf16.msra.mxu0 %v373
        %393 = vmatprep.subr.bf16.mxu0 0
        %394 = vmatpush1.bf16.msra.mxu0 %v374
        %395 = vmatprep.subr.bf16.mxu0 0
        %396 = vmatpush1.bf16.msra.mxu0 %v375
        %397 = vmatprep.subr.bf16.mxu0 0
        %398 = vmatpush1.bf16.msra.mxu0 %v376
        %399 = vmatprep.subr.bf16.mxu0 0
        %400 = vmatpush1.bf16.msra.mxu0 %v377
        %401 = vmatprep.subr.bf16.mxu0 0
        %402 = vmatpush1.bf16.msra.mxu0 %v378
        %403 = vmatprep.subr.bf16.mxu0 0
        %404 = vmatpush1.bf16.msra.mxu0 0
        %405 = vmatprep.subr.bf16.mxu0 0
        %406 = vmatpush1.bf16.msra.mxu0 0
        %407 = vmatprep.subr.bf16.mxu0 0
        %408 = vmatpush1.bf16.msra.mxu0 0
        %409 = vmatprep.subr.bf16.mxu0 0
        %410 = vmatpush1.bf16.msra.mxu0 0
        %411 = vmatprep.subr.bf16.mxu0 0
        %412 = vmatpush1.bf16.msra.mxu0 0
        %413 = vmatprep.subr.bf16.mxu0 0
        %414 = vmatpush1.bf16.msra.mxu0 0
        %415 = vmatprep.subr.bf16.mxu0 0
        %416 = vmatpush1.bf16.msra.mxu0 0
        %417 = vmatprep.subr.bf16.mxu0 0
        %418 = vmatpush1.bf16.msra.mxu0 0
        %419 = vmatprep.mubr.bf16.mxu0 0
        %420 = vmatmul.mubr.bf16.gmra.mrb[0].mxu0 %v337
        %v421 = vpop.f32.mrb[0].mxu0
        %v422 = vadd.f32 0.0, %v421
        %v423 = vpop.f32.mrb[0].mxu0
        %v424 = vpop.f32.mrb[0].mxu0
        %v425 = vadd.f32 0.0, %v424
        %v426 = vpop.f32.mrb[0].mxu0
        %427 = vdwg.mxu0
        %v430 = vunpack.c.l.b16 %v299
        %v431 = vunpack.c.l.b16 %v300
        %v432 = vpack.c.b16 %v431, %v430
        %v450 = vunpack.c.l.b16 %v317
        %v451 = vunpack.c.l.b16 %v318
        %v452 = vunpack.c.l.b16 %v319
        %v453 = vunpack.c.l.b16 %v320
        %v454 = vunpack.c.l.b16 %v321
        %v455 = vunpack.c.l.b16 %v322
        %v456 = vunpack.c.l.b16 %v323
        %v457 = vunpack.c.l.b16 %v324
        %v458 = vunpack.c.l.b16 %v325
        %v459 = vunpack.c.l.b16 %v326
        %v460 = vunpack.c.l.b16 %v327
        %v461 = vunpack.c.l.b16 %v328
        %v462 = vunpack.c.l.b16 %v329
        %v463 = vunpack.c.l.b16 %v330
        %v464 = vunpack.c.l.b16 %v331
        %v465 = vunpack.c.l.b16 %v332
        %v466 = vpack.c.b16 %v451, %v450
        %v467 = vpack.c.b16 %v453, %v452
        %v468 = vpack.c.b16 %v455, %v454
        %v469 = vpack.c.b16 %v457, %v456
        %v470 = vpack.c.b16 %v459, %v458
        %v471 = vpack.c.b16 %v461, %v460
        %v472 = vpack.c.b16 %v463, %v462
        %v473 = vpack.c.b16 %v465, %v464
        %482 = vmatprep.subr.bf16.mxu0 0
        %483 = vmatpush1.bf16.msra.mxu0 %v466
        %484 = vmatprep.subr.bf16.mxu0 0
        %485 = vmatpush1.bf16.msra.mxu0 %v467
        %486 = vmatprep.subr.bf16.mxu0 0
        %487 = vmatpush1.bf16.msra.mxu0 %v468
        %488 = vmatprep.subr.bf16.mxu0 0
        %489 = vmatpush1.bf16.msra.mxu0 %v469
        %490 = vmatprep.subr.bf16.mxu0 0
        %491 = vmatpush1.bf16.msra.mxu0 %v470
        %492 = vmatprep.subr.bf16.mxu0 0
        %493 = vmatpush1.bf16.msra.mxu0 %v471
        %494 = vmatprep.subr.bf16.mxu0 0
        %495 = vmatpush1.bf16.msra.mxu0 %v472
        %496 = vmatprep.subr.bf16.mxu0 0
        %497 = vmatpush1.bf16.msra.mxu0 %v473
        %498 = vmatprep.subr.bf16.mxu0 0
        %499 = vmatpush1.bf16.msra.mxu0 0
        %500 = vmatprep.subr.bf16.mxu0 0
        %501 = vmatpush1.bf16.msra.mxu0 0
        %502 = vmatprep.subr.bf16.mxu0 0
        %503 = vmatpush1.bf16.msra.mxu0 0
        %504 = vmatprep.subr.bf16.mxu0 0
        %505 = vmatpush1.bf16.msra.mxu0 0
        %506 = vmatprep.subr.bf16.mxu0 0
        %507 = vmatpush1.bf16.msra.mxu0 0
        %508 = vmatprep.subr.bf16.mxu0 0
        %509 = vmatpush1.bf16.msra.mxu0 0
        %510 = vmatprep.subr.bf16.mxu0 0
        %511 = vmatpush1.bf16.msra.mxu0 0
        %512 = vmatprep.subr.bf16.mxu0 0
        %513 = vmatpush1.bf16.msra.mxu0 0
        %514 = vmatprep.mubr.bf16.mxu0 0
        %515 = vmatmul.mubr.bf16.gmra.mrb[0].mxu0 %v432
        %v516 = vpop.f32.mrb[0].mxu0
        %v517 = vadd.f32 0.0, %v516
        %v518 = vpop.f32.mrb[0].mxu0
        %v519 = vpop.f32.mrb[0].mxu0
        %v520 = vadd.f32 0.0, %v519
        %v521 = vpop.f32.mrb[0].mxu0
        %522 = vdwg.mxu0
        %v523 = vmul.f32 %v422, 0.088388346
        %v524 = vmul.f32 %v425, 0.088388346
        %v525 = vmul.f32 %v517, 0.088388346
        %v526 = vmul.f32 %v520, 0.088388346
        %v527 = vld [vmem:[%s290] sm:$0xff]
        %v528 = vld [vmem:[%s290 + $0x8] sm:$0xff]
        %v529 = vadd.f32 %v523, %v527
        %v530 = vadd.f32 %v524, %v528
        %v531 = vadd.f32 %v525, %v527
        %v532 = vadd.f32 %v526, %v528
        %533 = vmax.xlane.f32.xlu0 %v529
        %v534 = vpop.xlane.xlu0 %533
        %535 = vmax.xlane.f32.xlu0 %v530
        %v536 = vpop.xlane.xlu0 %535
        %537 = vmax.xlane.f32.xlu0 %v531
        %v538 = vpop.xlane.xlu0 %537
        %539 = vmax.xlane.f32.xlu0 %v532
        %v540 = vpop.xlane.xlu0 %539
        %v541 = vsub.f32 %v529, %v534
        %v542 = vsub.f32 %v530, %v536
        %v543 = vsub.f32 %v531, %v538
        %v544 = vsub.f32 %v532, %v540
        %v545 = vmul.f32 %v541, 1.442695
        %v546 = vpow.pop %v545
        %v547 = vmul.f32 %v542, 1.442695
        %v548 = vpow.pop %v547
        %v549 = vmul.f32 %v543, 1.442695
        %v550 = vpow.pop %v549
        %v551 = vmul.f32 %v544, 1.442695
        %v552 = vpow.pop %v551
        %553 = vadd.xlane.f32.xlu0 %v546
        %v554 = vpop.xlane.xlu0 %553
        %555 = vadd.xlane.f32.xlu0 %v548
        %v556 = vpop.xlane.xlu0 %555
        %557 = vadd.xlane.f32.xlu0 %v550
        %v558 = vpop.xlane.xlu0 %557
        %559 = vadd.xlane.f32.xlu0 %v552
        %v560 = vpop.xlane.xlu0 %559
        %v561 = vrcp.pop %v554
        %v562 = vrcp.pop %v556
        %v563 = vrcp.pop %v558
        %v564 = vrcp.pop %v560
        %v565 = vmul.f32 %v546, %v561
        %v566 = vmul.f32 %v548, %v562
        %v567 = vmul.f32 %v550, %v563
        %v568 = vmul.f32 %v552, %v564
        %v569 = vpack.c.bf16 %v566, %v565
        %v570 = vpack.c.bf16 %v568, %v567
        %v571 = vld [vmem:[%s285] sm:$0xf]
        %v572 = vld [vmem:[%s285 + $0x4] sm:$0xf]
        %v573 = vld [vmem:[%s285 + $0x8] sm:$0xf]
        %v574 = vld [vmem:[%s285 + $0xc] sm:$0xf]
        %v575 = vld [vmem:[%s285 + $0x10] sm:$0xf]
        %v576 = vld [vmem:[%s285 + $0x14] sm:$0xf]
        %v577 = vld [vmem:[%s285 + $0x18] sm:$0xf]
        %v578 = vld [vmem:[%s285 + $0x1c] sm:$0xf]
        %v579 = vld [vmem:[%s285 + $0x20] sm:$0xf]
        %v580 = vld [vmem:[%s285 + $0x24] sm:$0xf]
        %v581 = vld [vmem:[%s285 + $0x28] sm:$0xf]
        %v582 = vld [vmem:[%s285 + $0x2c] sm:$0xf]
        %v583 = vld [vmem:[%s285 + $0x30] sm:$0xf]
        %v584 = vld [vmem:[%s285 + $0x34] sm:$0xf]
        %v585 = vld [vmem:[%s285 + $0x38] sm:$0xf]
        %v586 = vld [vmem:[%s285 + $0x3c] sm:$0xf]
        %v587 = vld [vmem:[%s285 + $0x40] sm:$0xf]
        %v588 = vld [vmem:[%s285 + $0x44] sm:$0xf]
        %v589 = vld [vmem:[%s285 + $0x48] sm:$0xf]
        %v590 = vld [vmem:[%s285 + $0x4c] sm:$0xf]
        %v591 = vld [vmem:[%s285 + $0x50] sm:$0xf]
        %v592 = vld [vmem:[%s285 + $0x54] sm:$0xf]
        %v593 = vld [vmem:[%s285 + $0x58] sm:$0xf]
        %v594 = vld [vmem:[%s285 + $0x5c] sm:$0xf]
        %v595 = vld [vmem:[%s285 + $0x60] sm:$0xf]
        %v596 = vld [vmem:[%s285 + $0x64] sm:$0xf]
        %v597 = vld [vmem:[%s285 + $0x68] sm:$0xf]
        %v598 = vld [vmem:[%s285 + $0x6c] sm:$0xf]
        %v599 = vld [vmem:[%s285 + $0x70] sm:$0xf]
        %v600 = vld [vmem:[%s285 + $0x74] sm:$0xf]
        %v601 = vld [vmem:[%s285 + $0x78] sm:$0xf]
        %v602 = vld [vmem:[%s285 + $0x7c] sm:$0xf]
        %v619 = vunpack.c.l.b16 %v571
        %v620 = vunpack.c.l.b16 %v572
        %v621 = vunpack.c.l.b16 %v573
        %v622 = vunpack.c.l.b16 %v574
        %v623 = vunpack.c.l.b16 %v575
        %v624 = vunpack.c.l.b16 %v576
        %v625 = vunpack.c.l.b16 %v577
        %v626 = vunpack.c.l.b16 %v578
        %v627 = vunpack.c.l.b16 %v579
        %v628 = vunpack.c.l.b16 %v580
        %v629 = vunpack.c.l.b16 %v581
        %v630 = vunpack.c.l.b16 %v582
        %v631 = vunpack.c.l.b16 %v583
        %v632 = vunpack.c.l.b16 %v584
        %v633 = vunpack.c.l.b16 %v585
        %v634 = vunpack.c.l.b16 %v586
        %v635 = vpack.c.b16 %v620, %v619
        %v636 = vpack.c.b16 %v622, %v621
        %v637 = vpack.c.b16 %v624, %v623
        %v638 = vpack.c.b16 %v626, %v625
        %v639 = vpack.c.b16 %v628, %v627
        %v640 = vpack.c.b16 %v630, %v629
        %v641 = vpack.c.b16 %v632, %v631
        %v642 = vpack.c.b16 %v634, %v633
        %651 = vmatprep.subr.bf16.mxu0 0
        %652 = vmatpush1.bf16.msra.mxu0 %v635
        %653 = vmatprep.subr.bf16.mxu0 0
        %654 = vmatpush1.bf16.msra.mxu0 %v636
        %655 = vmatprep.subr.bf16.mxu0 0
        %656 = vmatpush1.bf16.msra.mxu0 %v637
        %657 = vmatprep.subr.bf16.mxu0 0
        %658 = vmatpush1.bf16.msra.mxu0 %v638
        %659 = vmatprep.subr.bf16.mxu0 0
        %660 = vmatpush1.bf16.msra.mxu0 %v639
        %661 = vmatprep.subr.bf16.mxu0 0
        %662 = vmatpush1.bf16.msra.mxu0 %v640
        %663 = vmatprep.subr.bf16.mxu0 0
        %664 = vmatpush1.bf16.msra.mxu0 %v641
        %665 = vmatprep.subr.bf16.mxu0 0
        %666 = vmatpush1.bf16.msra.mxu0 %v642
        %667 = vmatprep.subr.bf16.mxu0 0
        %668 = vmatpush1.bf16.msra.mxu0 0
        %669 = vmatprep.subr.bf16.mxu0 0
        %670 = vmatpush1.bf16.msra.mxu0 0
        %671 = vmatprep.subr.bf16.mxu0 0
        %672 = vmatpush1.bf16.msra.mxu0 0
        %673 = vmatprep.subr.bf16.mxu0 0
        %674 = vmatpush1.bf16.msra.mxu0 0
        %675 = vmatprep.subr.bf16.mxu0 0
        %676 = vmatpush1.bf16.msra.mxu0 0
        %677 = vmatprep.subr.bf16.mxu0 0
        %678 = vmatpush1.bf16.msra.mxu0 0
        %679 = vmatprep.subr.bf16.mxu0 0
        %680 = vmatpush1.bf16.msra.mxu0 0
        %681 = vmatprep.subr.bf16.mxu0 0
        %682 = vmatpush1.bf16.msra.mxu0 0
        %683 = vmatprep.mubr.bf16.mxu0 0
        %684 = vmatmul.mubr.bf16.gmra.mrb[0].mxu0 %v569
        %v685 = vpop.f32.mrb[0].mxu0
        %v686 = vadd.f32 0.0, %v685
        %v687 = vpop.f32.mrb[0].mxu0
        %v688 = vpop.f32.mrb[0].mxu0
        %v689 = vadd.f32 0.0, %v688
        %v690 = vpop.f32.mrb[0].mxu0
        %691 = vdwg.mxu0
        %v708 = vunpack.c.l.b16 %v587
        %v709 = vunpack.c.l.b16 %v588
        %v710 = vunpack.c.l.b16 %v589
        %v711 = vunpack.c.l.b16 %v590
        %v712 = vunpack.c.l.b16 %v591
        %v713 = vunpack.c.l.b16 %v592
        %v714 = vunpack.c.l.b16 %v593
        %v715 = vunpack.c.l.b16 %v594
        %v716 = vunpack.c.l.b16 %v595
        %v717 = vunpack.c.l.b16 %v596
        %v718 = vunpack.c.l.b16 %v597
        %v719 = vunpack.c.l.b16 %v598
        %v720 = vunpack.c.l.b16 %v599
        %v721 = vunpack.c.l.b16 %v600
        %v722 = vunpack.c.l.b16 %v601
        %v723 = vunpack.c.l.b16 %v602
        %v724 = vpack.c.b16 %v709, %v708
        %v725 = vpack.c.b16 %v711, %v710
        %v726 = vpack.c.b16 %v713, %v712
        %v727 = vpack.c.b16 %v715, %v714
        %v728 = vpack.c.b16 %v717, %v716
        %v729 = vpack.c.b16 %v719, %v718
        %v730 = vpack.c.b16 %v721, %v720
        %v731 = vpack.c.b16 %v723, %v722
        %740 = vmatprep.subr.bf16.mxu0 0
        %741 = vmatpush1.bf16.msra.mxu0 %v724
        %742 = vmatprep.subr.bf16.mxu0 0
        %743 = vmatpush1.bf16.msra.mxu0 %v725
        %744 = vmatprep.subr.bf16.mxu0 0
        %745 = vmatpush1.bf16.msra.mxu0 %v726
        %746 = vmatprep.subr.bf16.mxu0 0
        %747 = vmatpush1.bf16.msra.mxu0 %v727
        %748 = vmatprep.subr.bf16.mxu0 0
        %749 = vmatpush1.bf16.msra.mxu0 %v728
        %750 = vmatprep.subr.bf16.mxu0 0
        %751 = vmatpush1.bf16.msra.mxu0 %v729
        %752 = vmatprep.subr.bf16.mxu0 0
        %753 = vmatpush1.bf16.msra.mxu0 %v730
        %754 = vmatprep.subr.bf16.mxu0 0
        %755 = vmatpush1.bf16.msra.mxu0 %v731
        %756 = vmatprep.subr.bf16.mxu0 0
        %757 = vmatpush1.bf16.msra.mxu0 0
        %758 = vmatprep.subr.bf16.mxu0 0
        %759 = vmatpush1.bf16.msra.mxu0 0
        %760 = vmatprep.subr.bf16.mxu0 0
        %761 = vmatpush1.bf16.msra.mxu0 0
        %762 = vmatprep.subr.bf16.mxu0 0
        %763 = vmatpush1.bf16.msra.mxu0 0
        %764 = vmatprep.subr.bf16.mxu0 0
        %765 = vmatpush1.bf16.msra.mxu0 0
        %766 = vmatprep.subr.bf16.mxu0 0
        %767 = vmatpush1.bf16.msra.mxu0 0
        %768 = vmatprep.subr.bf16.mxu0 0
        %769 = vmatpush1.bf16.msra.mxu0 0
        %770 = vmatprep.subr.bf16.mxu0 0
        %771 = vmatpush1.bf16.msra.mxu0 0
        %772 = vmatprep.mubr.bf16.mxu0 0
        %773 = vmatmul.mubr.bf16.gmra.mrb[0].mxu0 %v570
        %v774 = vpop.f32.mrb[0].mxu0
        %v775 = vadd.f32 0.0, %v774
        %v776 = vpop.f32.mrb[0].mxu0
        %v777 = vpop.f32.mrb[0].mxu0
        %v778 = vadd.f32 0.0, %v777
        %v779 = vpop.f32.mrb[0].mxu0
        %780 = vdwg.mxu0
        %v781 = vpack.c.bf16 %v689, %v686
        %v782 = vpack.c.bf16 %v778, %v775
        %v785 = vunpack.c.l.b16 %v781
        %v786 = vunpack.c.h.b16 %v781
        %v787 = vunpack.c.l.b16 %v782
        %v788 = vunpack.c.h.b16 %v782
        %v789 = vpack.c.b16 %v785, %v785
        %v790 = vpack.c.b16 %v786, %v786
        %v791 = vpack.c.b16 %v787, %v787
        %v792 = vpack.c.b16 %v788, %v788
        %797 = vst [vmem:[%s295] sm:$0xf] %v789
        %798 = vst [vmem:[%s295 + $0x4] sm:$0xf] %v790
        %799 = vst [vmem:[%s295 + $0x8] sm:$0xf] %v791
        %800 = vst [vmem:[%s295 + $0xc] sm:$0xf] %v792
        %v801 = vadd.f32 %v565, %v567
        %v802 = vadd.f32 %v566, %v568
        %v803 = vrcp.pop 2.0
        %v804 = vmul.f32 %v801, %v803
        %v805 = vmul.f32 %v802, %v803
        %806 = vst [vmem:[%s270] sm:$0xff] %v804
        %807 = vst [vmem:[%s270 + $0x8] sm:$0xff] %v805
        %p808 = scmp.lt.s32.totalorder %s20, 1
        %s809 = scalar_select %p808, %s20, 1
        %s810 = smul.addr %s809, 4
        %s811 = smul.addr %s810, 4
        %s812 = scalar_lea.vmem %s4, %s811
        %s813 = sand.u32 %s158, 1
        %s814 = scalar_lea.sflag [#allocation3], %s813
        %s815 = sand.u32 %s158, 1
        %s816 = smul.addr %s815, 16
        %s817 = scalar_lea.vmem [#allocation2], %s816
        // Predicated region
        $region37: #{mod_rztx_decoder_layer.13} parent=35 // pred_check
          %p818 = pneg %p142
        $region38: #{mod_rztx_decoder_layer.13} parent=35 // pred_check_branch
          %820 = sbr.rel (%p818) target = $region40
        $region39: #{mod_rztx_decoder_layer.13} parent=35 // pred_region
          _
        $region40: #{mod_rztx_decoder_layer.13} parent=35 // pred_fallthru
          _
        // Predicated region
        $region41: #{mod_rztx_decoder_layer.13} parent=35 // pred_check
          %p821 = pneg %p168
        $region42: #{mod_rztx_decoder_layer.13} parent=35 // pred_check_branch
          %823 = sbr.rel (%p821) target = $region44
        $region43: #{mod_rztx_decoder_layer.13} parent=35 // pred_region
          %s825 = ssub.s32 256, 256
          %826 = vsyncadd %s814, %s825
          %s827 = smul.addr %s20, 2
          %s828 = smul.addr %s827, 128
          %s829 = scalar_lea.hbm %s5, %s828
          %s830 = sshll.u32 %s817, 4
          %s831 = int_to_ptr.vmem [resolvable:$true] %s830
          %836 = dma.vmem_to_hbm [thread:$0]  %s831, 256, %s829, %s814, 128, 128, 8
        $region44: #{mod_rztx_decoder_layer.13} parent=35 // pred_fallthru
          _
      $region36: #{mod_rztx_decoder_layer.13} parent=5 // pred_fallthru
        _
      %p837 = scmp.le.s32.totalorder 2, %s15
      // Predicated region
      $region45: #{mod_rztx_decoder_layer.13} parent=5 // pred_check
        %p838 = pneg %p837
      $region46: #{mod_rztx_decoder_layer.13} parent=5 // pred_check_branch
        %840 = sbr.rel (%p838) target = $region48
      $region47: #{mod_rztx_decoder_layer.13} parent=5 // pred_region
        %s841 = ssub.s32 %s15, 2
        // Predicated region
        $region49: #{mod_rztx_decoder_layer.13} parent=47 // pred_check
          %p842 = pneg %p148
        $region50: #{mod_rztx_decoder_layer.13} parent=47 // pred_check_branch
          %844 = sbr.rel (%p842) target = $region52
        $region51: #{mod_rztx_decoder_layer.13} parent=47 // pred_region
          %p845 = scmp.lt.s32.totalorder %s21, 1
          %s846 = scalar_select %p845, %s21, 1
          %s847 = smul.addr %s846, 4
          %s848 = smul.addr %s847, 4
          %s849 = scalar_lea.vmem %s4, %s848
        $region52: #{mod_rztx_decoder_layer.13} parent=47 // pred_fallthru
          _
        // Predicated region
        $region53: #{mod_rztx_decoder_layer.13} parent=47 // pred_check
          %p850 = pneg %p174
        $region54: #{mod_rztx_decoder_layer.13} parent=47 // pred_check_branch
          %852 = sbr.rel (%p850) target = $region56
        $region55: #{mod_rztx_decoder_layer.13} parent=47 // pred_region
          %s853 = sand.u32 %s159, 1
          %s854 = scalar_lea.sflag [#allocation3], %s853
          %s855 = sand.u32 %s159, 1
          %s856 = smul.addr %s855, 16
          %s857 = scalar_lea.vmem [#allocation2], %s856
          %858 = dma.done %s854, 256
        $region56: #{mod_rztx_decoder_layer.13} parent=47 // pred_fallthru
          _
      $region48: #{mod_rztx_decoder_layer.13} parent=5 // pred_fallthru
        _
    $region6: #{mod_rztx_decoder_layer.13} parent=1 // loop_footer
      %s19 = sadd.s32 1, %s15
    $region7: #{mod_rztx_decoder_layer.13} parent=1 // loop_footer_branch
      %14 = sbr.rel target = $region3
    $region8: #{mod_rztx_decoder_layer.13} parent=1 // loop_exit
      _
    %859 = vsyncpa [#allocation3], 1
    %s860 = scalar_lea.sflag [#allocation3], 1
    %861 = vsyncpa %s860, 1

// kernel: mod_rztx_decoder_layer.15
$region0: #{mod_rztx_decoder_layer.15}
  #allocation0 [shape = 'u32[]', space=smem, size = 0x4, offset = 0x4, fixed_abs, tag = 'smem constant byte address 0x4 - core index']
  #allocation1 [shape = 'u32[144,128]{1,0:T(1,128)}', space=vmem, size = 0x12000, scoped, tag = 'internal scratch']
  #allocation2 [shape = 'f32[16,256]{1,0:T(8,128)}', space=vmem, size = 0x4000, scoped, tag = 'scratch operand']
  #allocation3 [shape = 'f32[1,1]{1,0:T(1,128)S(6)}', space=smem, size = 0x200, scoped, tag = 'scoped memory for mod_rztx_decoder_layer.15']
  %s0 = inlined_call_operand.vmem [shape: f32[32,256], index: 0, kind: input, shape index: {}]
  %s1 = inlined_call_operand.vmem [shape: bf16[256,512], index: 1, kind: input, shape index: {}]
  %s2 = inlined_call_operand.vmem [shape: f32[1,512], index: 2, kind: input, shape index: {}]
  %s3 = inlined_call_operand.vmem [shape: bf16[512,256], index: 3, kind: input, shape index: {}]
  %s4 = inlined_call_operand.vmem [shape: f32[1,256], index: 4, kind: input, shape index: {}]
  %s5 = inlined_call_operand.<no memory space> [shape: f32[1,1], index: 5, kind: input, shape index: {}]
  %s6 = inlined_call_operand.vmem [shape: f32[32,256], index: 6, kind: output, shape index: {}]
  %s7 = sld [smem:[#allocation0]]
  $region65: #{mod_rztx_decoder_layer.15} parent=0
    _
  %s9 = ssub.s32 1, %s7
  %s10 = scalar_select 0, %s9, %s7
  %11 = sst [smem:[#allocation3]] %s5
  loop: start=0, step=1, limit=4
  $region2: #{mod_rztx_decoder_layer.15} parent=0 // loop_pre_header
    _
  $region3: #{mod_rztx_decoder_layer.15} parent=0 // loop_header
    %s13 = sphi 0, %s17
    %p14 = scmp.ge.s32.totalorder %s13, 4
    %s20 = sphi 0, %s32
    %s21 = sphi 0, %s28
    %s22 = sphi 0, %s20
    %s23 = sphi 0, %s21
    %s24 = sphi 0, %s22
    %s25 = sphi 0, %s23
    %s35 = sphi 0, %s37
    %s38 = sphi 0, %s35
    %s39 = sphi 0, %s38
    %s55 = sphi 0, %s39
    %s61 = sphi 0, %s63
    %s64 = sphi 0, %s61
    %s65 = sphi 0, %s64
    %s81 = sphi 0, %s65
    %s87 = sphi 0, %s89
    %s90 = sphi 0, %s87
    %s91 = sphi 0, %s90
    %s107 = sphi 0, %s91
    %s113 = sphi 0, %s115
    %s116 = sphi 0, %s113
    %s117 = sphi 0, %s116
    %s133 = sphi 0, %s117
    %s137 = sphi 0, %s137
    %s139 = sphi 0, %s137
    %s140 = sphi 0, %s139
    %s154 = sphi 0, %s140
    %s158 = sphi 0, %s158
    %s160 = sphi 0, %s158
    %s161 = sphi 0, %s160
    %s175 = sphi 0, %s161
    %s181 = sphi 0, %s183
    %s184 = sphi 0, %s181
    %s185 = sphi 0, %s184
    %s201 = sphi 0, %s185
  $region4: #{mod_rztx_decoder_layer.15} parent=0 // loop_header_branch
    %16 = sbr.rel (%p14) target = $region8
  $region5: #{mod_rztx_decoder_layer.15} parent=0 // loop_body
    %s18 = ssub.s32 %s13, 1
    %s19 = ssub.s32 %s13, 2
    %s26 = sadd.s32 1, %s21
    %p27 = scmp.ge.s32.totalorder %s26, 1
    %s28 = scalar_select %p27, 0, %s26
    %s29 = sadd.s32 1, %s20
    %s30 = scalar_select %p27, %s29, %s20
    %p31 = scmp.ge.s32.totalorder %s30, 2
    %s32 = scalar_select %p31, 0, %s30
    %s33 = ssub.s32 %s20, %s32
    %p34 = scmp.eq.s32.totalorder %s33, 0
    %s36 = sadd.s32 %s35, 1
    %s37 = scalar_select %p34, %s35, %s36
    %p40 = pneg %p34
    %p41 = scmp.eq.s32.totalorder %s13, 1
    %p42 = por %p40, %p41
    %p43 = scmp.ne.s32.totalorder %s35, %s38
    %p44 = scmp.eq.s32.totalorder %s13, 0
    %p45 = por %p43, %p44
    %p46 = scmp.ne.s32.totalorder %s35, %s38
    %p47 = scmp.eq.s32.totalorder %s18, 1
    %p48 = por %p46, %p47
    %p49 = scmp.ne.s32.totalorder %s38, %s39
    %p50 = scmp.eq.s32.totalorder %s18, 0
    %p51 = por %p49, %p50
    %p52 = scmp.ne.s32.totalorder %s38, %s39
    %p53 = scmp.eq.s32.totalorder %s19, 1
    %p54 = por %p52, %p53
    %p56 = scmp.ne.s32.totalorder %s39, %s55
    %p57 = scmp.eq.s32.totalorder %s19, 0
    %p58 = por %p56, %p57
    %s59 = ssub.s32 %s21, %s28
    %p60 = scmp.eq.s32.totalorder %s59, 0
    %s62 = sadd.s32 %s61, 1
    %s63 = scalar_select %p60, %s61, %s62
    %p66 = pneg %p60
    %p67 = scmp.eq.s32.totalorder %s13, 1
    %p68 = por %p66, %p67
    %p69 = scmp.ne.s32.totalorder %s61, %s64
    %p70 = scmp.eq.s32.totalorder %s13, 0
    %p71 = por %p69, %p70
    %p72 = scmp.ne.s32.totalorder %s61, %s64
    %p73 = scmp.eq.s32.totalorder %s18, 1
    %p74 = por %p72, %p73
    %p75 = scmp.ne.s32.totalorder %s64, %s65
    %p76 = scmp.eq.s32.totalorder %s18, 0
    %p77 = por %p75, %p76
    %p78 = scmp.ne.s32.totalorder %s64, %s65
    %p79 = scmp.eq.s32.totalorder %s19, 1
    %p80 = por %p78, %p79
    %p82 = scmp.ne.s32.totalorder %s65, %s81
    %p83 = scmp.eq.s32.totalorder %s19, 0
    %p84 = por %p82, %p83
    %s85 = ssub.s32 %s21, %s28
    %p86 = scmp.eq.s32.totalorder %s85, 0
    %s88 = sadd.s32 %s87, 1
    %s89 = scalar_select %p86, %s87, %s88
    %p92 = pneg %p86
    %p93 = scmp.eq.s32.totalorder %s13, 1
    %p94 = por %p92, %p93
    %p95 = scmp.ne.s32.totalorder %s87, %s90
    %p96 = scmp.eq.s32.totalorder %s13, 0
    %p97 = por %p95, %p96
    %p98 = scmp.ne.s32.totalorder %s87, %s90
    %p99 = scmp.eq.s32.totalorder %s18, 1
    %p100 = por %p98, %p99
    %p101 = scmp.ne.s32.totalorder %s90, %s91
    %p102 = scmp.eq.s32.totalorder %s18, 0
    %p103 = por %p101, %p102
    %p104 = scmp.ne.s32.totalorder %s90, %s91
    %p105 = scmp.eq.s32.totalorder %s19, 1
    %p106 = por %p104, %p105
    %p108 = scmp.ne.s32.totalorder %s91, %s107
    %p109 = scmp.eq.s32.totalorder %s19, 0
    %p110 = por %p108, %p109
    %s111 = ssub.s32 %s21, %s28
    %p112 = scmp.eq.s32.totalorder %s111, 0
    %s114 = sadd.s32 %s113, 1
    %s115 = scalar_select %p112, %s113, %s114
    %p118 = pneg %p112
    %p119 = scmp.eq.s32.totalorder %s13, 1
    %p120 = por %p118, %p119
    %p121 = scmp.ne.s32.totalorder %s113, %s116
    %p122 = scmp.eq.s32.totalorder %s13, 0
    %p123 = por %p121, %p122
    %p124 = scmp.ne.s32.totalorder %s113, %s116
    %p125 = scmp.eq.s32.totalorder %s18, 1
    %p126 = por %p124, %p125
    %p127 = scmp.ne.s32.totalorder %s116, %s117
    %p128 = scmp.eq.s32.totalorder %s18, 0
    %p129 = por %p127, %p128
    %p130 = scmp.ne.s32.totalorder %s116, %s117
    %p131 = scmp.eq.s32.totalorder %s19, 1
    %p132 = por %p130, %p131
    %p134 = scmp.ne.s32.totalorder %s117, %s133
    %p135 = scmp.eq.s32.totalorder %s19, 0
    %p136 = por %p134, %p135
    %s138 = sadd.s32 %s137, 1
    %p141 = scmp.eq.s32.totalorder %s13, 1
    %p142 = scmp.ne.s32.totalorder %s137, %s139
    %p143 = scmp.eq.s32.totalorder %s13, 0
    %p144 = por %p142, %p143
    %p145 = scmp.ne.s32.totalorder %s137, %s139
    %p146 = scmp.eq.s32.totalorder %s18, 1
    %p147 = por %p145, %p146
    %p148 = scmp.ne.s32.totalorder %s139, %s140
    %p149 = scmp.eq.s32.totalorder %s18, 0
    %p150 = por %p148, %p149
    %p151 = scmp.ne.s32.totalorder %s139, %s140
    %p152 = scmp.eq.s32.totalorder %s19, 1
    %p153 = por %p151, %p152
    %p155 = scmp.ne.s32.totalorder %s140, %s154
    %p156 = scmp.eq.s32.totalorder %s19, 0
    %p157 = por %p155, %p156
    %s159 = sadd.s32 %s158, 1
    %p162 = scmp.eq.s32.totalorder %s13, 1
    %p163 = scmp.ne.s32.totalorder %s158, %s160
    %p164 = scmp.eq.s32.totalorder %s13, 0
    %p165 = por %p163, %p164
    %p166 = scmp.ne.s32.totalorder %s158, %s160
    %p167 = scmp.eq.s32.totalorder %s18, 1
    %p168 = por %p166, %p167
    %p169 = scmp.ne.s32.totalorder %s160, %s161
    %p170 = scmp.eq.s32.totalorder %s18, 0
    %p171 = por %p169, %p170
    %p172 = scmp.ne.s32.totalorder %s160, %s161
    %p173 = scmp.eq.s32.totalorder %s19, 1
    %p174 = por %p172, %p173
    %p176 = scmp.ne.s32.totalorder %s161, %s175
    %p177 = scmp.eq.s32.totalorder %s19, 0
    %p178 = por %p176, %p177
    %s179 = ssub.s32 %s20, %s32
    %p180 = scmp.eq.s32.totalorder %s179, 0
    %s182 = sadd.s32 %s181, 1
    %s183 = scalar_select %p180, %s181, %s182
    %p186 = pneg %p180
    %p187 = scmp.eq.s32.totalorder %s13, 1
    %p188 = por %p186, %p187
    %p189 = scmp.ne.s32.totalorder %s181, %s184
    %p190 = scmp.eq.s32.totalorder %s13, 0
    %p191 = por %p189, %p190
    %p192 = scmp.ne.s32.totalorder %s181, %s184
    %p193 = scmp.eq.s32.totalorder %s18, 1
    %p194 = por %p192, %p193
    %p195 = scmp.ne.s32.totalorder %s184, %s185
    %p196 = scmp.eq.s32.totalorder %s18, 0
    %p197 = por %p195, %p196
    %p198 = scmp.ne.s32.totalorder %s184, %s185
    %p199 = scmp.eq.s32.totalorder %s19, 1
    %p200 = por %p198, %p199
    %p202 = scmp.ne.s32.totalorder %s185, %s201
    %p203 = scmp.eq.s32.totalorder %s19, 0
    %p204 = por %p202, %p203
    %p205 = scmp.le.s32.totalorder 1, %s13
    %p206 = scmp.lt.s32.totalorder %s13, 3
    %p207 = pnand %p205, %p206
    %p208 = pneg %p207
    // Predicated region
    $region9: #{mod_rztx_decoder_layer.15} parent=5 // pred_check
      _
    $region10: #{mod_rztx_decoder_layer.15} parent=5 // pred_check_branch
      %210 = sbr.rel (%p207) target = $region12
    $region11: #{mod_rztx_decoder_layer.15} parent=5 // pred_region
      %s211 = ssub.s32 %s13, 1
      // Predicated region
      $region13: #{mod_rztx_decoder_layer.15} parent=11 // pred_check
        %p212 = pneg %p77
      $region14: #{mod_rztx_decoder_layer.15} parent=11 // pred_check_branch
        %214 = sbr.rel (%p212) target = $region16
      $region15: #{mod_rztx_decoder_layer.15} parent=11 // pred_region
        %s215 = smul.u32 4, %s23
        %p216 = scmp.lt.s32.totalorder %s215, 3
        %s217 = scalar_select %p216, %s215, 3
        %s218 = smul.addr %s217, 4
        %s219 = scalar_lea.vmem %s1, %s218
        %s220 = smul.u32 4, %s23
      $region16: #{mod_rztx_decoder_layer.15} parent=11 // pred_fallthru
        _
      // Predicated region
      $region17: #{mod_rztx_decoder_layer.15} parent=11 // pred_check
        %p221 = pneg %p103
      $region18: #{mod_rztx_decoder_layer.15} parent=11 // pred_check_branch
        %223 = sbr.rel (%p221) target = $region20
      $region19: #{mod_rztx_decoder_layer.15} parent=11 // pred_region
        %s224 = smul.u32 4, %s23
        %p225 = scmp.lt.s32.totalorder %s224, 3
        %s226 = scalar_select %p225, %s224, 3
        %s227 = scalar_lea.vmem %s2, %s226
        %s228 = smul.u32 4, %s23
      $region20: #{mod_rztx_decoder_layer.15} parent=11 // pred_fallthru
        _
      // Predicated region
      $region21: #{mod_rztx_decoder_layer.15} parent=11 // pred_check
        %p229 = pneg %p129
      $region22: #{mod_rztx_decoder_layer.15} parent=11 // pred_check_branch
        %231 = sbr.rel (%p229) target = $region24
      $region23: #{mod_rztx_decoder_layer.15} parent=11 // pred_region
        %s232 = smul.u32 64, %s23
        %p233 = scmp.lt.s32.totalorder %s232, 63
        %s234 = scalar_select %p233, %s232, 63
        %s235 = smul.addr %s234, 2
        %s236 = smul.addr %s235, 4
        %s237 = scalar_lea.vmem %s3, %s236
        %s238 = smul.u32 64, %s23
      $region24: #{mod_rztx_decoder_layer.15} parent=11 // pred_fallthru
        _
      // Predicated region
      $region25: #{mod_rztx_decoder_layer.15} parent=11 // pred_check
        %p239 = pneg %p150
      $region26: #{mod_rztx_decoder_layer.15} parent=11 // pred_check_branch
        %241 = sbr.rel (%p239) target = $region28
      $region27: #{mod_rztx_decoder_layer.15} parent=11 // pred_region
        _
      $region28: #{mod_rztx_decoder_layer.15} parent=11 // pred_fallthru
        _
      // Predicated region
      $region29: #{mod_rztx_decoder_layer.15} parent=11 // pred_check
        %p242 = pneg %p171
      $region30: #{mod_rztx_decoder_layer.15} parent=11 // pred_check_branch
        %244 = sbr.rel (%p242) target = $region32
      $region31: #{mod_rztx_decoder_layer.15} parent=11 // pred_region
        _
      $region32: #{mod_rztx_decoder_layer.15} parent=11 // pred_fallthru
        _
    $region12: #{mod_rztx_decoder_layer.15} parent=5 // pred_fallthru
      _
    %p245 = scmp.lt.s32.totalorder %s13, 2
    // Predicated region
    $region33: #{mod_rztx_decoder_layer.15} parent=5 // pred_check
      %p246 = pneg %p245
    $region34: #{mod_rztx_decoder_layer.15} parent=5 // pred_check_branch
      %248 = sbr.rel (%p246) target = $region36
    $region35: #{mod_rztx_decoder_layer.15} parent=5 // pred_region
      // Predicated region
      $region37: #{mod_rztx_decoder_layer.15} parent=35 // pred_check
        %p249 = pneg %p45
      $region38: #{mod_rztx_decoder_layer.15} parent=35 // pred_check_branch
        %251 = sbr.rel (%p249) target = $region40
      $region39: #{mod_rztx_decoder_layer.15} parent=35 // pred_region
        %s252 = smul.u32 2, %s20
        %p253 = scmp.lt.s32.totalorder %s252, 3
        %s254 = scalar_select %p253, %s252, 3
        %s255 = smul.addr %s254, 2
        %s256 = smul.addr %s255, 8
        %s257 = scalar_lea.vmem %s0, %s256
        %s258 = smul.u32 2, %s20
      $region40: #{mod_rztx_decoder_layer.15} parent=35 // pred_fallthru
        _
    $region36: #{mod_rztx_decoder_layer.15} parent=5 // pred_fallthru
      _
    %p259 = scmp.le.s32.totalorder 1, %s13
    %p260 = scmp.lt.s32.totalorder %s13, 3
    %p261 = pnand %p259, %p260
    %p262 = pneg %p261
    // Predicated region
    $region41: #{mod_rztx_decoder_layer.15} parent=5 // pred_check
      _
    $region42: #{mod_rztx_decoder_layer.15} parent=5 // pred_check_branch
      %264 = sbr.rel (%p261) target = $region44
    $region43: #{mod_rztx_decoder_layer.15} parent=5 // pred_region
      %s265 = ssub.s32 %s13, 1
      %s266 = smul.u32 2, %s22
      %p267 = scmp.lt.s32.totalorder %s266, 3
      %s268 = scalar_select %p267, %s266, 3
      %s269 = smul.addr %s268, 2
      %s270 = smul.addr %s269, 8
      %s271 = scalar_lea.vmem %s0, %s270
      %p272 = pneg %p51
      %p273 = pneg %p48
      %s274 = smul.u32 4, %s23
      %p275 = scmp.lt.s32.totalorder %s274, 3
      %s276 = scalar_select %p275, %s274, 3
      %s277 = smul.addr %s276, 4
      %s278 = scalar_lea.vmem %s1, %s277
      %p279 = pneg %p77
      %p280 = pneg %p74
      %s281 = smul.u32 4, %s23
      %p282 = scmp.lt.s32.totalorder %s281, 3
      %s283 = scalar_select %p282, %s281, 3
      %s284 = scalar_lea.vmem %s2, %s283
      %p285 = pneg %p103
      %p286 = pneg %p100
      %s287 = smul.u32 64, %s23
      %p288 = scmp.lt.s32.totalorder %s287, 63
      %s289 = scalar_select %p288, %s287, 63
      %s290 = smul.addr %s289, 2
      %s291 = smul.addr %s290, 4
      %s292 = scalar_lea.vmem %s3, %s291
      %p293 = pneg %p129
      %p294 = pneg %p126
      %p295 = pneg %p150
      %p296 = pneg %p147
      %p297 = pneg %p171
      %p298 = pneg %p168
      %p299 = pneg %p197
      %p300 = pneg %p194
      %s301 = smul.u32 2, %s22
      %p302 = scmp.lt.s32.totalorder %s301, 3
      %s303 = scalar_select %p302, %s301, 3
      %s304 = smul.addr %s303, 2
      %s305 = smul.addr %s304, 8
      %s306 = scalar_lea.vmem %s6, %s305
      %s307 = smul.u32 2, %s22
      %p308 = scmp.lt.s32.totalorder %s307, 3
      %s309 = scalar_select %p308, %s307, 3
      %s310 = smul.addr %s309, 2
      %s311 = smul.addr %s310, 8
      %s312 = scalar_lea.vmem %s0, %s311
      %s313 = smul.u32 2, %s22
      %s314 = smul.u32 4, %s23
      %p315 = scmp.lt.s32.totalorder %s314, 3
      %s316 = scalar_select %p315, %s314, 3
      %s317 = smul.addr %s316, 4
      %s318 = scalar_lea.vmem %s1, %s317
      %s319 = smul.u32 4, %s23
      %s320 = smul.u32 4, %s23
      %p321 = scmp.lt.s32.totalorder %s320, 3
      %s322 = scalar_select %p321, %s320, 3
      %s323 = scalar_lea.vmem %s2, %s322
      %s324 = smul.u32 4, %s23
      %s325 = smul.u32 64, %s23
      %p326 = scmp.lt.s32.totalorder %s325, 63
      %s327 = scalar_select %p326, %s325, 63
      %s328 = smul.addr %s327, 2
      %s329 = smul.addr %s328, 4
      %s330 = scalar_lea.vmem %s3, %s329
      %s331 = smul.u32 64, %s23
      %s332 = smul.u32 2, %s22
      %p333 = scmp.lt.s32.totalorder %s332, 3
      %s334 = scalar_select %p333, %s332, 3
      %s335 = smul.addr %s334, 2
      %s336 = smul.addr %s335, 8
      %s337 = scalar_lea.vmem %s6, %s336
      %s338 = smul.u32 2, %s22
      %p339 = scmp.eq.s32.totalorder %s23, 0
      // Predicated region
      $region45: #{mod_rztx_decoder_layer.15} parent=43 // pred_check
        %p340 = pneg %p339
      $region46: #{mod_rztx_decoder_layer.15} parent=43 // pred_check_branch
        %342 = sbr.rel (%p340) target = $region48
      $region47: #{mod_rztx_decoder_layer.15} parent=43 // pred_region
        %343 = vst [vmem:[#allocation2] sm:$0xff] 0.0
        %344 = vst [vmem:[#allocation2 + $0x8] sm:$0xff] 0.0
        %345 = vst [vmem:[#allocation2 + $0x10] sm:$0xff] 0.0
        %346 = vst [vmem:[#allocation2 + $0x18] sm:$0xff] 0.0
      $region48: #{mod_rztx_decoder_layer.15} parent=43 // pred_fallthru
        _
      %v347 = vld [vmem:[%s312] sm:$0xff]
      %v348 = vld [vmem:[%s312 + $0x8] sm:$0xff]
      %v349 = vld [vmem:[%s312 + $0x10] sm:$0xff]
      %v350 = vld [vmem:[%s312 + $0x18] sm:$0xff]
      %v351 = vpack.c.bf16 %v349, %v347
      %v352 = vpack.c.bf16 %v350, %v348
      %v353 = vld [vmem:[%s318] sm:$0xff]
      %v354 = vld [vmem:[%s318 + $0x8] sm:$0xff]
      %v355 = vld [vmem:[%s318 + $0x10] sm:$0xff]
      %v356 = vld [vmem:[%s318 + $0x18] sm:$0xff]
      %v357 = vld [vmem:[%s318 + $0x20] sm:$0xff]
      %v358 = vld [vmem:[%s318 + $0x28] sm:$0xff]
      %v359 = vld [vmem:[%s318 + $0x30] sm:$0xff]
      %v360 = vld [vmem:[%s318 + $0x38] sm:$0xff]
      %v361 = vld [vmem:[%s318 + $0x40] sm:$0xff]
      %v362 = vld [vmem:[%s318 + $0x48] sm:$0xff]
      %v363 = vld [vmem:[%s318 + $0x50] sm:$0xff]
      %v364 = vld [vmem:[%s318 + $0x58] sm:$0xff]
      %v365 = vld [vmem:[%s318 + $0x60] sm:$0xff]
      %v366 = vld [vmem:[%s318 + $0x68] sm:$0xff]
      %v367 = vld [vmem:[%s318 + $0x70] sm:$0xff]
      %v368 = vld [vmem:[%s318 + $0x78] sm:$0xff]
      %v369 = vld [vmem:[%s318 + $0x80] sm:$0xff]
      %v370 = vld [vmem:[%s318 + $0x88] sm:$0xff]
      %v371 = vld [vmem:[%s318 + $0x90] sm:$0xff]
      %v372 = vld [vmem:[%s318 + $0x98] sm:$0xff]
      %v373 = vld [vmem:[%s318 + $0xa0] sm:$0xff]
      %v374 = vld [vmem:[%s318 + $0xa8] sm:$0xff]
      %v375 = vld [vmem:[%s318 + $0xb0] sm:$0xff]
      %v376 = vld [vmem:[%s318 + $0xb8] sm:$0xff]
      %v377 = vld [vmem:[%s318 + $0xc0] sm:$0xff]
      %v378 = vld [vmem:[%s318 + $0xc8] sm:$0xff]
      %v379 = vld [vmem:[%s318 + $0xd0] sm:$0xff]
      %v380 = vld [vmem:[%s318 + $0xd8] sm:$0xff]
      %v381 = vld [vmem:[%s318 + $0xe0] sm:$0xff]
      %v382 = vld [vmem:[%s318 + $0xe8] sm:$0xff]
      %v383 = vld [vmem:[%s318 + $0xf0] sm:$0xff]
      %v384 = vld [vmem:[%s318 + $0xf8] sm:$0xff]
      %v385 = vld [vmem:[%s318 + $0x100] sm:$0xff]
      %v386 = vld [vmem:[%s318 + $0x108] sm:$0xff]
      %v387 = vld [vmem:[%s318 + $0x110] sm:$0xff]
      %v388 = vld [vmem:[%s318 + $0x118] sm:$0xff]
      %v389 = vld [vmem:[%s318 + $0x120] sm:$0xff]
      %v390 = vld [vmem:[%s318 + $0x128] sm:$0xff]
      %v391 = vld [vmem:[%s318 + $0x130] sm:$0xff]
      %v392 = vld [vmem:[%s318 + $0x138] sm:$0xff]
      %v393 = vld [vmem:[%s318 + $0x140] sm:$0xff]
      %v394 = vld [vmem:[%s318 + $0x148] sm:$0xff]
      %v395 = vld [vmem:[%s318 + $0x150] sm:$0xff]
      %v396 = vld [vmem:[%s318 + $0x158] sm:$0xff]
      %v397 = vld [vmem:[%s318 + $0x160] sm:$0xff]
      %v398 = vld [vmem:[%s318 + $0x168] sm:$0xff]
      %v399 = vld [vmem:[%s318 + $0x170] sm:$0xff]
      %v400 = vld [vmem:[%s318 + $0x178] sm:$0xff]
      %v401 = vld [vmem:[%s318 + $0x180] sm:$0xff]
      %v402 = vld [vmem:[%s318 + $0x188] sm:$0xff]
      %v403 = vld [vmem:[%s318 + $0x190] sm:$0xff]
      %v404 = vld [vmem:[%s318 + $0x198] sm:$0xff]
      %v405 = vld [vmem:[%s318 + $0x1a0] sm:$0xff]
      %v406 = vld [vmem:[%s318 + $0x1a8] sm:$0xff]
      %v407 = vld [vmem:[%s318 + $0x1b0] sm:$0xff]
      %v408 = vld [vmem:[%s318 + $0x1b8] sm:$0xff]
      %v409 = vld [vmem:[%s318 + $0x1c0] sm:$0xff]
      %v410 = vld [vmem:[%s318 + $0x1c8] sm:$0xff]
      %v411 = vld [vmem:[%s318 + $0x1d0] sm:$0xff]
      %v412 = vld [vmem:[%s318 + $0x1d8] sm:$0xff]
      %v413 = vld [vmem:[%s318 + $0x1e0] sm:$0xff]
      %v414 = vld [vmem:[%s318 + $0x1e8] sm:$0xff]
      %v415 = vld [vmem:[%s318 + $0x1f0] sm:$0xff]
      %v416 = vld [vmem:[%s318 + $0x1f8] sm:$0xff]
      %v417 = vld [vmem:[%s323] sm:$0xf]
      %v419 = vlaneseq
      %v420 = vshrl.u32 %v419, 7
      %v421 = vsub.s32 0, %v420
      %v422 = vrot.slane %v417, %v421
      %v423 = vlaneseq
      %v424 = vshrl.u32 %v423, 7
      %v425 = vsub.s32 1, %v424
      %v426 = vrot.slane %v417, %v425
      %v427 = vlaneseq
      %v428 = vshrl.u32 %v427, 7
      %v429 = vsub.s32 2, %v428
      %v430 = vrot.slane %v417, %v429
      %v431 = vlaneseq
      %v432 = vshrl.u32 %v431, 7
      %v433 = vsub.s32 3, %v432
      %v434 = vrot.slane %v417, %v433
      %v503 = vunpack.c.l.b16 %v353
      %v504 = vunpack.c.h.b16 %v353
      %v505 = vunpack.c.l.b16 %v354
      %v506 = vunpack.c.h.b16 %v354
      %v507 = vunpack.c.l.b16 %v355
      %v508 = vunpack.c.h.b16 %v355
      %v509 = vunpack.c.l.b16 %v356
      %v510 = vunpack.c.h.b16 %v356
      %v511 = vunpack.c.l.b16 %v357
      %v512 = vunpack.c.h.b16 %v357
      %v513 = vunpack.c.l.b16 %v358
      %v514 = vunpack.c.h.b16 %v358
      %v515 = vunpack.c.l.b16 %v359
      %v516 = vunpack.c.h.b16 %v359
      %v517 = vunpack.c.l.b16 %v360
      %v518 = vunpack.c.h.b16 %v360
      %v519 = vunpack.c.l.b16 %v361
      %v520 = vunpack.c.h.b16 %v361
      %v521 = vunpack.c.l.b16 %v362
      %v522 = vunpack.c.h.b16 %v362
      %v523 = vunpack.c.l.b16 %v363
      %v524 = vunpack.c.h.b16 %v363
      %v525 = vunpack.c.l.b16 %v364
      %v526 = vunpack.c.h.b16 %v364
      %v527 = vunpack.c.l.b16 %v365
      %v528 = vunpack.c.h.b16 %v365
      %v529 = vunpack.c.l.b16 %v366
      %v530 = vunpack.c.h.b16 %v366
      %v531 = vunpack.c.l.b16 %v367
      %v532 = vunpack.c.h.b16 %v367
      %v533 = vunpack.c.l.b16 %v368
      %v534 = vunpack.c.h.b16 %v368
      %v535 = vunpack.c.l.b16 %v369
      %v536 = vunpack.c.h.b16 %v369
      %v537 = vunpack.c.l.b16 %v370
      %v538 = vunpack.c.h.b16 %v370
      %v539 = vunpack.c.l.b16 %v371
      %v540 = vunpack.c.h.b16 %v371
      %v541 = vunpack.c.l.b16 %v372
      %v542 = vunpack.c.h.b16 %v372
      %v543 = vunpack.c.l.b16 %v373
      %v544 = vunpack.c.h.b16 %v373
      %v545 = vunpack.c.l.b16 %v374
      %v546 = vunpack.c.h.b16 %v374
      %v547 = vunpack.c.l.b16 %v375
      %v548 = vunpack.c.h.b16 %v375
      %v549 = vunpack.c.l.b16 %v376
      %v550 = vunpack.c.h.b16 %v376
      %v551 = vunpack.c.l.b16 %v377
      %v552 = vunpack.c.h.b16 %v377
      %v553 = vunpack.c.l.b16 %v378
      %v554 = vunpack.c.h.b16 %v378
      %v555 = vunpack.c.l.b16 %v379
      %v556 = vunpack.c.h.b16 %v379
      %v557 = vunpack.c.l.b16 %v380
      %v558 = vunpack.c.h.b16 %v380
      %v559 = vunpack.c.l.b16 %v381
      %v560 = vunpack.c.h.b16 %v381
      %v561 = vunpack.c.l.b16 %v382
      %v562 = vunpack.c.h.b16 %v382
      %v563 = vunpack.c.l.b16 %v383
      %v564 = vunpack.c.h.b16 %v383
      %v565 = vunpack.c.l.b16 %v384
      %v566 = vunpack.c.h.b16 %v384
      %v567 = vunpack.c.l.b16 %v385
      %v568 = vunpack.c.h.b16 %v385
      %v569 = vunpack.c.l.b16 %v386
      %v570 = vunpack.c.h.b16 %v386
      %v571 = vunpack.c.l.b16 %v387
      %v572 = vunpack.c.h.b16 %v387
      %v573 = vunpack.c.l.b16 %v388
      %v574 = vunpack.c.h.b16 %v388
      %v575 = vunpack.c.l.b16 %v389
      %v576 = vunpack.c.h.b16 %v389
      %v577 = vunpack.c.l.b16 %v390
      %v578 = vunpack.c.h.b16 %v390
      %v579 = vunpack.c.l.b16 %v391
      %v580 = vunpack.c.h.b16 %v391
      %v581 = vunpack.c.l.b16 %v392
      %v582 = vunpack.c.h.b16 %v392
      %v583 = vunpack.c.l.b16 %v393
      %v584 = vunpack.c.h.b16 %v393
      %v585 = vunpack.c.l.b16 %v394
      %v586 = vunpack.c.h.b16 %v394
      %v587 = vunpack.c.l.b16 %v395
      %v588 = vunpack.c.h.b16 %v395
      %v589 = vunpack.c.l.b16 %v396
      %v590 = vunpack.c.h.b16 %v396
      %v591 = vunpack.c.l.b16 %v397
      %v592 = vunpack.c.h.b16 %v397
      %v593 = vunpack.c.l.b16 %v398
      %v594 = vunpack.c.h.b16 %v398
      %v595 = vunpack.c.l.b16 %v399
      %v596 = vunpack.c.h.b16 %v399
      %v597 = vunpack.c.l.b16 %v400
      %v598 = vunpack.c.h.b16 %v400
      %v599 = vunpack.c.l.b16 %v401
      %v600 = vunpack.c.h.b16 %v401
      %v601 = vunpack.c.l.b16 %v402
      %v602 = vunpack.c.h.b16 %v402
      %v603 = vunpack.c.l.b16 %v403
      %v604 = vunpack.c.h.b16 %v403
      %v605 = vunpack.c.l.b16 %v404
      %v606 = vunpack.c.h.b16 %v404
      %v607 = vunpack.c.l.b16 %v405
      %v608 = vunpack.c.h.b16 %v405
      %v609 = vunpack.c.l.b16 %v406
      %v610 = vunpack.c.h.b16 %v406
      %v611 = vunpack.c.l.b16 %v407
      %v612 = vunpack.c.h.b16 %v407
      %v613 = vunpack.c.l.b16 %v408
      %v614 = vunpack.c.h.b16 %v408
      %v615 = vunpack.c.l.b16 %v409
      %v616 = vunpack.c.h.b16 %v409
      %v617 = vunpack.c.l.b16 %v410
      %v618 = vunpack.c.h.b16 %v410
      %v619 = vunpack.c.l.b16 %v411
      %v620 = vunpack.c.h.b16 %v411
      %v621 = vunpack.c.l.b16 %v412
      %v622 = vunpack.c.h.b16 %v412
      %v623 = vunpack.c.l.b16 %v413
      %v624 = vunpack.c.h.b16 %v413
      %v625 = vunpack.c.l.b16 %v414
      %v626 = vunpack.c.h.b16 %v414
      %v627 = vunpack.c.l.b16 %v415
      %v628 = vunpack.c.h.b16 %v415
      %v629 = vunpack.c.l.b16 %v416
      %v630 = vunpack.c.h.b16 %v416
      %v631 = vpack.c.b16 %v507, %v503
      %v632 = vpack.c.b16 %v508, %v504
      %v633 = vpack.c.b16 %v509, %v505
      %v634 = vpack.c.b16 %v510, %v506
      %v635 = vpack.c.b16 %v515, %v511
      %v636 = vpack.c.b16 %v516, %v512
      %v637 = vpack.c.b16 %v517, %v513
      %v638 = vpack.c.b16 %v518, %v514
      %v639 = vpack.c.b16 %v523, %v519
      %v640 = vpack.c.b16 %v524, %v520
      %v641 = vpack.c.b16 %v525, %v521
      %v642 = vpack.c.b16 %v526, %v522
      %v643 = vpack.c.b16 %v531, %v527
      %v644 = vpack.c.b16 %v532, %v528
      %v645 = vpack.c.b16 %v533, %v529
      %v646 = vpack.c.b16 %v534, %v530
      %v647 = vpack.c.b16 %v539, %v535
      %v648 = vpack.c.b16 %v540, %v536
      %v649 = vpack.c.b16 %v541, %v537
      %v650 = vpack.c.b16 %v542, %v538
      %v651 = vpack.c.b16 %v547, %v543
      %v652 = vpack.c.b16 %v548, %v544
      %v653 = vpack.c.b16 %v549, %v545
      %v654 = vpack.c.b16 %v550, %v546
      %v655 = vpack.c.b16 %v555, %v551
      %v656 = vpack.c.b16 %v556, %v552
      %v657 = vpack.c.b16 %v557, %v553
      %v658 = vpack.c.b16 %v558, %v554
      %v659 = vpack.c.b16 %v563, %v559
      %v660 = vpack.c.b16 %v564, %v560
      %v661 = vpack.c.b16 %v565, %v561
      %v662 = vpack.c.b16 %v566, %v562
      %v663 = vpack.c.b16 %v571, %v567
      %v664 = vpack.c.b16 %v572, %v568
      %v665 = vpack.c.b16 %v573, %v569
      %v666 = vpack.c.b16 %v574, %v570
      %v667 = vpack.c.b16 %v579, %v575
      %v668 = vpack.c.b16 %v580, %v576
      %v669 = vpack.c.b16 %v581, %v577
      %v670 = vpack.c.b16 %v582, %v578
      %v671 = vpack.c.b16 %v587, %v583
      %v672 = vpack.c.b16 %v588, %v584
      %v673 = vpack.c.b16 %v589, %v585
      %v674 = vpack.c.b16 %v590, %v586
      %v675 = vpack.c.b16 %v595, %v591
      %v676 = vpack.c.b16 %v596, %v592
      %v677 = vpack.c.b16 %v597, %v593
      %v678 = vpack.c.b16 %v598, %v594
      %v679 = vpack.c.b16 %v603, %v599
      %v680 = vpack.c.b16 %v604, %v600
      %v681 = vpack.c.b16 %v605, %v601
      %v682 = vpack.c.b16 %v606, %v602
      %v683 = vpack.c.b16 %v611, %v607
      %v684 = vpack.c.b16 %v612, %v608
      %v685 = vpack.c.b16 %v613, %v609
      %v686 = vpack.c.b16 %v614, %v610
      %v687 = vpack.c.b16 %v619, %v615
      %v688 = vpack.c.b16 %v620, %v616
      %v689 = vpack.c.b16 %v621, %v617
      %v690 = vpack.c.b16 %v622, %v618
      %v691 = vpack.c.b16 %v627, %v623
      %v692 = vpack.c.b16 %v628, %v624
      %v693 = vpack.c.b16 %v629, %v625
      %v694 = vpack.c.b16 %v630, %v626
      %759 = vmatprep.subr.bf16.mxu0 %v632
      %760 = vmatpush1.bf16.msra.mxu0 %v631
      %761 = vmatprep.subr.bf16.mxu0 %v636
      %762 = vmatpush1.bf16.msra.mxu0 %v635
      %763 = vmatprep.subr.bf16.mxu0 %v640
      %764 = vmatpush1.bf16.msra.mxu0 %v639
      %765 = vmatprep.subr.bf16.mxu0 %v644
      %766 = vmatpush1.bf16.msra.mxu0 %v643
      %767 = vmatprep.subr.bf16.mxu0 %v648
      %768 = vmatpush1.bf16.msra.mxu0 %v647
      %769 = vmatprep.subr.bf16.mxu0 %v652
      %770 = vmatpush1.bf16.msra.mxu0 %v651
      %771 = vmatprep.subr.bf16.mxu0 %v656
      %772 = vmatpush1.bf16.msra.mxu0 %v655
      %773 = vmatprep.subr.bf16.mxu0 %v660
      %774 = vmatpush1.bf16.msra.mxu0 %v659
      %775 = vmatprep.subr.bf16.mxu0 %v664
      %776 = vmatpush1.bf16.msra.mxu0 %v663
      %777 = vmatprep.subr.bf16.mxu0 %v668
      %778 = vmatpush1.bf16.msra.mxu0 %v667
      %779 = vmatprep.subr.bf16.mxu0 %v672
      %780 = vmatpush1.bf16.msra.mxu0 %v671
      %781 = vmatprep.subr.bf16.mxu0 %v676
      %782 = vmatpush1.bf16.msra.mxu0 %v675
      %783 = vmatprep.subr.bf16.mxu0 %v680
      %784 = vmatpush1.bf16.msra.mxu0 %v679
      %785 = vmatprep.subr.bf16.mxu0 %v684
      %786 = vmatpush1.bf16.msra.mxu0 %v683
      %787 = vmatprep.subr.bf16.mxu0 %v688
      %788 = vmatpush1.bf16.msra.mxu0 %v687
      %789 = vmatprep.subr.bf16.mxu0 %v692
      %790 = vmatpush1.bf16.msra.mxu0 %v691
      %791 = vmatprep.mubr.bf16.mxu0 %v352
      %792 = vmatmul.mubr.bf16.gmra.mrb[0].mxu0 %v351
      %v793 = vpop.f32.mrb[0].mxu0
      %v794 = vadd.f32 %v422, %v793
      %v795 = vpop.f32.mrb[0].mxu0
      %v796 = vadd.f32 %v426, %v795
      %v797 = vpop.f32.mrb[0].mxu0
      %v798 = vadd.f32 %v422, %v797
      %v799 = vpop.f32.mrb[0].mxu0
      %v800 = vadd.f32 %v426, %v799
      %801 = vdwg.mxu0
      %802 = vmatprep.subr.bf16.mxu0 %v634
      %803 = vmatpush1.bf16.msra.mxu0 %v633
      %804 = vmatprep.subr.bf16.mxu0 %v638
      %805 = vmatpush1.bf16.msra.mxu0 %v637
      %806 = vmatprep.subr.bf16.mxu0 %v642
      %807 = vmatpush1.bf16.msra.mxu0 %v641
      %808 = vmatprep.subr.bf16.mxu0 %v646
      %809 = vmatpush1.bf16.msra.mxu0 %v645
      %810 = vmatprep.subr.bf16.mxu0 %v650
      %811 = vmatpush1.bf16.msra.mxu0 %v649
      %812 = vmatprep.subr.bf16.mxu0 %v654
      %813 = vmatpush1.bf16.msra.mxu0 %v653
      %814 = vmatprep.subr.bf16.mxu0 %v658
      %815 = vmatpush1.bf16.msra.mxu0 %v657
      %816 = vmatprep.subr.bf16.mxu0 %v662
      %817 = vmatpush1.bf16.msra.mxu0 %v661
      %818 = vmatprep.subr.bf16.mxu0 %v666
      %819 = vmatpush1.bf16.msra.mxu0 %v665
      %820 = vmatprep.subr.bf16.mxu0 %v670
      %821 = vmatpush1.bf16.msra.mxu0 %v669
      %822 = vmatprep.subr.bf16.mxu0 %v674
      %823 = vmatpush1.bf16.msra.mxu0 %v673
      %824 = vmatprep.subr.bf16.mxu0 %v678
      %825 = vmatpush1.bf16.msra.mxu0 %v677
      %826 = vmatprep.subr.bf16.mxu0 %v682
      %827 = vmatpush1.bf16.msra.mxu0 %v681
      %828 = vmatprep.subr.bf16.mxu0 %v686
      %829 = vmatpush1.bf16.msra.mxu0 %v685
      %830 = vmatprep.subr.bf16.mxu0 %v690
      %831 = vmatpush1.bf16.msra.mxu0 %v689
      %832 = vmatprep.subr.bf16.mxu0 %v694
      %833 = vmatpush1.bf16.msra.mxu0 %v693
      %834 = vmatprep.mubr.bf16.mxu0 %v352
      %835 = vmatmul.mubr.bf16.gmra.mrb[0].mxu0 %v351
      %v836 = vpop.f32.mrb[0].mxu0
      %v837 = vadd.f32 %v430, %v836
      %v838 = vpop.f32.mrb[0].mxu0
      %v839 = vadd.f32 %v434, %v838
      %v840 = vpop.f32.mrb[0].mxu0
      %v841 = vadd.f32 %v430, %v840
      %v842 = vpop.f32.mrb[0].mxu0
      %v843 = vadd.f32 %v434, %v842
      %844 = vdwg.mxu0
      %v845 = vmax.f32 %v794, 0.0
      %v846 = vmax.f32 %v796, 0.0
      %v847 = vmax.f32 %v837, 0.0
      %v848 = vmax.f32 %v839, 0.0
      %v849 = vmax.f32 %v798, 0.0
      %v850 = vmax.f32 %v800, 0.0
      %v851 = vmax.f32 %v841, 0.0
      %v852 = vmax.f32 %v843, 0.0
      %v853 = vld [vmem:[#allocation2] sm:$0xff]
      %v854 = vld [vmem:[#allocation2 + $0x8] sm:$0xff]
      %v855 = vld [vmem:[#allocation2 + $0x10] sm:$0xff]
      %v856 = vld [vmem:[#allocation2 + $0x18] sm:$0xff]
      %v857 = vpack.c.bf16 %v849, %v845
      %v858 = vpack.c.bf16 %v850, %v846
      %v859 = vpack.c.bf16 %v851, %v847
      %v860 = vpack.c.bf16 %v852, %v848
      %v861 = vld [vmem:[%s330] sm:$0xff]
      %v862 = vld [vmem:[%s330 + $0x8] sm:$0xff]
      %v863 = vld [vmem:[%s330 + $0x10] sm:$0xff]
      %v864 = vld [vmem:[%s330 + $0x18] sm:$0xff]
      %v865 = vld [vmem:[%s330 + $0x20] sm:$0xff]
      %v866 = vld [vmem:[%s330 + $0x28] sm:$0xff]
      %v867 = vld [vmem:[%s330 + $0x30] sm:$0xff]
      %v868 = vld [vmem:[%s330 + $0x38] sm:$0xff]
      %v869 = vld [vmem:[%s330 + $0x40] sm:$0xff]
      %v870 = vld [vmem:[%s330 + $0x48] sm:$0xff]
      %v871 = vld [vmem:[%s330 + $0x50] sm:$0xff]
      %v872 = vld [vmem:[%s330 + $0x58] sm:$0xff]
      %v873 = vld [vmem:[%s330 + $0x60] sm:$0xff]
      %v874 = vld [vmem:[%s330 + $0x68] sm:$0xff]
      %v875 = vld [vmem:[%s330 + $0x70] sm:$0xff]
      %v876 = vld [vmem:[%s330 + $0x78] sm:$0xff]
      %v877 = vld [vmem:[%s330 + $0x80] sm:$0xff]
      %v878 = vld [vmem:[%s330 + $0x88] sm:$0xff]
      %v879 = vld [vmem:[%s330 + $0x90] sm:$0xff]
      %v880 = vld [vmem:[%s330 + $0x98] sm:$0xff]
      %v881 = vld [vmem:[%s330 + $0xa0] sm:$0xff]
      %v882 = vld [vmem:[%s330 + $0xa8] sm:$0xff]
      %v883 = vld [vmem:[%s330 + $0xb0] sm:$0xff]
      %v884 = vld [vmem:[%s330 + $0xb8] sm:$0xff]
      %v885 = vld [vmem:[%s330 + $0xc0] sm:$0xff]
      %v886 = vld [vmem:[%s330 + $0xc8] sm:$0xff]
      %v887 = vld [vmem:[%s330 + $0xd0] sm:$0xff]
      %v888 = vld [vmem:[%s330 + $0xd8] sm:$0xff]
      %v889 = vld [vmem:[%s330 + $0xe0] sm:$0xff]
      %v890 = vld [vmem:[%s330 + $0xe8] sm:$0xff]
      %v891 = vld [vmem:[%s330 + $0xf0] sm:$0xff]
      %v892 = vld [vmem:[%s330 + $0xf8] sm:$0xff]
      %v893 = vld [vmem:[%s330 + $0x100] sm:$0xff]
      %v894 = vld [vmem:[%s330 + $0x108] sm:$0xff]
      %v895 = vld [vmem:[%s330 + $0x110] sm:$0xff]
      %v896 = vld [vmem:[%s330 + $0x118] sm:$0xff]
      %v897 = vld [vmem:[%s330 + $0x120] sm:$0xff]
      %v898 = vld [vmem:[%s330 + $0x128] sm:$0xff]
      %v899 = vld [vmem:[%s330 + $0x130] sm:$0xff]
      %v900 = vld [vmem:[%s330 + $0x138] sm:$0xff]
      %v901 = vld [vmem:[%s330 + $0x140] sm:$0xff]
      %v902 = vld [vmem:[%s330 + $0x148] sm:$0xff]
      %v903 = vld [vmem:[%s330 + $0x150] sm:$0xff]
      %v904 = vld [vmem:[%s330 + $0x158] sm:$0xff]
      %v905 = vld [vmem:[%s330 + $0x160] sm:$0xff]
      %v906 = vld [vmem:[%s330 + $0x168] sm:$0xff]
      %v907 = vld [vmem:[%s330 + $0x170] sm:$0xff]
      %v908 = vld [vmem:[%s330 + $0x178] sm:$0xff]
      %v909 = vld [vmem:[%s330 + $0x180] sm:$0xff]
      %v910 = vld [vmem:[%s330 + $0x188] sm:$0xff]
      %v911 = vld [vmem:[%s330 + $0x190] sm:$0xff]
      %v912 = vld [vmem:[%s330 + $0x198] sm:$0xff]
      %v913 = vld [vmem:[%s330 + $0x1a0] sm:$0xff]
      %v914 = vld [vmem:[%s330 + $0x1a8] sm:$0xff]
      %v915 = vld [vmem:[%s330 + $0x1b0] sm:$0xff]
      %v916 = vld [vmem:[%s330 + $0x1b8] sm:$0xff]
      %v917 = vld [vmem:[%s330 + $0x1c0] sm:$0xff]
      %v918 = vld [vmem:[%s330 + $0x1c8] sm:$0xff]
      %v919 = vld [vmem:[%s330 + $0x1d0] sm:$0xff]
      %v920 = vld [vmem:[%s330 + $0x1d8] sm:$0xff]
      %v921 = vld [vmem:[%s330 + $0x1e0] sm:$0xff]
      %v922 = vld [vmem:[%s330 + $0x1e8] sm:$0xff]
      %v923 = vld [vmem:[%s330 + $0x1f0] sm:$0xff]
      %v924 = vld [vmem:[%s330 + $0x1f8] sm:$0xff]
      %v989 = vunpack.c.l.b16 %v861
      %v990 = vunpack.c.h.b16 %v861
      %v991 = vunpack.c.l.b16 %v862
      %v992 = vunpack.c.h.b16 %v862
      %v993 = vunpack.c.l.b16 %v863
      %v994 = vunpack.c.h.b16 %v863
      %v995 = vunpack.c.l.b16 %v864
      %v996 = vunpack.c.h.b16 %v864
      %v997 = vunpack.c.l.b16 %v865
      %v998 = vunpack.c.h.b16 %v865
      %v999 = vunpack.c.l.b16 %v866
      %v1000 = vunpack.c.h.b16 %v866
      %v1001 = vunpack.c.l.b16 %v867
      %v1002 = vunpack.c.h.b16 %v867
      %v1003 = vunpack.c.l.b16 %v868
      %v1004 = vunpack.c.h.b16 %v868
      %v1005 = vunpack.c.l.b16 %v869
      %v1006 = vunpack.c.h.b16 %v869
      %v1007 = vunpack.c.l.b16 %v870
      %v1008 = vunpack.c.h.b16 %v870
      %v1009 = vunpack.c.l.b16 %v871
      %v1010 = vunpack.c.h.b16 %v871
      %v1011 = vunpack.c.l.b16 %v872
      %v1012 = vunpack.c.h.b16 %v872
      %v1013 = vunpack.c.l.b16 %v873
      %v1014 = vunpack.c.h.b16 %v873
      %v1015 = vunpack.c.l.b16 %v874
      %v1016 = vunpack.c.h.b16 %v874
      %v1017 = vunpack.c.l.b16 %v875
      %v1018 = vunpack.c.h.b16 %v875
      %v1019 = vunpack.c.l.b16 %v876
      %v1020 = vunpack.c.h.b16 %v876
      %v1021 = vunpack.c.l.b16 %v877
      %v1022 = vunpack.c.h.b16 %v877
      %v1023 = vunpack.c.l.b16 %v878
      %v1024 = vunpack.c.h.b16 %v878
      %v1025 = vunpack.c.l.b16 %v879
      %v1026 = vunpack.c.h.b16 %v879
      %v1027 = vunpack.c.l.b16 %v880
      %v1028 = vunpack.c.h.b16 %v880
      %v1029 = vunpack.c.l.b16 %v881
      %v1030 = vunpack.c.h.b16 %v881
      %v1031 = vunpack.c.l.b16 %v882
      %v1032 = vunpack.c.h.b16 %v882
      %v1033 = vunpack.c.l.b16 %v883
      %v1034 = vunpack.c.h.b16 %v883
      %v1035 = vunpack.c.l.b16 %v884
      %v1036 = vunpack.c.h.b16 %v884
      %v1037 = vunpack.c.l.b16 %v885
      %v1038 = vunpack.c.h.b16 %v885
      %v1039 = vunpack.c.l.b16 %v886
      %v1040 = vunpack.c.h.b16 %v886
      %v1041 = vunpack.c.l.b16 %v887
      %v1042 = vunpack.c.h.b16 %v887
      %v1043 = vunpack.c.l.b16 %v888
      %v1044 = vunpack.c.h.b16 %v888
      %v1045 = vunpack.c.l.b16 %v889
      %v1046 = vunpack.c.h.b16 %v889
      %v1047 = vunpack.c.l.b16 %v890
      %v1048 = vunpack.c.h.b16 %v890
      %v1049 = vunpack.c.l.b16 %v891
      %v1050 = vunpack.c.h.b16 %v891
      %v1051 = vunpack.c.l.b16 %v892
      %v1052 = vunpack.c.h.b16 %v892
      %v1053 = vunpack.c.l.b16 %v893
      %v1054 = vunpack.c.h.b16 %v893
      %v1055 = vunpack.c.l.b16 %v894
      %v1056 = vunpack.c.h.b16 %v894
      %v1057 = vunpack.c.l.b16 %v895
      %v1058 = vunpack.c.h.b16 %v895
      %v1059 = vunpack.c.l.b16 %v896
      %v1060 = vunpack.c.h.b16 %v896
      %v1061 = vunpack.c.l.b16 %v897
      %v1062 = vunpack.c.h.b16 %v897
      %v1063 = vunpack.c.l.b16 %v898
      %v1064 = vunpack.c.h.b16 %v898
      %v1065 = vunpack.c.l.b16 %v899
      %v1066 = vunpack.c.h.b16 %v899
      %v1067 = vunpack.c.l.b16 %v900
      %v1068 = vunpack.c.h.b16 %v900
      %v1069 = vunpack.c.l.b16 %v901
      %v1070 = vunpack.c.h.b16 %v901
      %v1071 = vunpack.c.l.b16 %v902
      %v1072 = vunpack.c.h.b16 %v902
      %v1073 = vunpack.c.l.b16 %v903
      %v1074 = vunpack.c.h.b16 %v903
      %v1075 = vunpack.c.l.b16 %v904
      %v1076 = vunpack.c.h.b16 %v904
      %v1077 = vunpack.c.l.b16 %v905
      %v1078 = vunpack.c.h.b16 %v905
      %v1079 = vunpack.c.l.b16 %v906
      %v1080 = vunpack.c.h.b16 %v906
      %v1081 = vunpack.c.l.b16 %v907
      %v1082 = vunpack.c.h.b16 %v907
      %v1083 = vunpack.c.l.b16 %v908
      %v1084 = vunpack.c.h.b16 %v908
      %v1085 = vunpack.c.l.b16 %v909
      %v1086 = vunpack.c.h.b16 %v909
      %v1087 = vunpack.c.l.b16 %v910
      %v1088 = vunpack.c.h.b16 %v910
      %v1089 = vunpack.c.l.b16 %v911
      %v1090 = vunpack.c.h.b16 %v911
      %v1091 = vunpack.c.l.b16 %v912
      %v1092 = vunpack.c.h.b16 %v912
      %v1093 = vunpack.c.l.b16 %v913
      %v1094 = vunpack.c.h.b16 %v913
      %v1095 = vunpack.c.l.b16 %v914
      %v1096 = vunpack.c.h.b16 %v914
      %v1097 = vunpack.c.l.b16 %v915
      %v1098 = vunpack.c.h.b16 %v915
      %v1099 = vunpack.c.l.b16 %v916
      %v1100 = vunpack.c.h.b16 %v916
      %v1101 = vunpack.c.l.b16 %v917
      %v1102 = vunpack.c.h.b16 %v917
      %v1103 = vunpack.c.l.b16 %v918
      %v1104 = vunpack.c.h.b16 %v918
      %v1105 = vunpack.c.l.b16 %v919
      %v1106 = vunpack.c.h.b16 %v919
      %v1107 = vunpack.c.l.b16 %v920
      %v1108 = vunpack.c.h.b16 %v920
      %v1109 = vunpack.c.l.b16 %v921
      %v1110 = vunpack.c.h.b16 %v921
      %v1111 = vunpack.c.l.b16 %v922
      %v1112 = vunpack.c.h.b16 %v922
      %v1113 = vunpack.c.l.b16 %v923
      %v1114 = vunpack.c.h.b16 %v923
      %v1115 = vunpack.c.l.b16 %v924
      %v1116 = vunpack.c.h.b16 %v924
      %v1117 = vpack.c.b16 %v991, %v989
      %v1118 = vpack.c.b16 %v992, %v990
      %v1119 = vpack.c.b16 %v995, %v993
      %v1120 = vpack.c.b16 %v996, %v994
      %v1121 = vpack.c.b16 %v999, %v997
      %v1122 = vpack.c.b16 %v1000, %v998
      %v1123 = vpack.c.b16 %v1003, %v1001
      %v1124 = vpack.c.b16 %v1004, %v1002
      %v1125 = vpack.c.b16 %v1007, %v1005
      %v1126 = vpack.c.b16 %v1008, %v1006
      %v1127 = vpack.c.b16 %v1011, %v1009
      %v1128 = vpack.c.b16 %v1012, %v1010
      %v1129 = vpack.c.b16 %v1015, %v1013
      %v1130 = vpack.c.b16 %v1016, %v1014
      %v1131 = vpack.c.b16 %v1019, %v1017
      %v1132 = vpack.c.b16 %v1020, %v1018
      %v1133 = vpack.c.b16 %v1023, %v1021
      %v1134 = vpack.c.b16 %v1024, %v1022
      %v1135 = vpack.c.b16 %v1027, %v1025
      %v1136 = vpack.c.b16 %v1028, %v1026
      %v1137 = vpack.c.b16 %v1031, %v1029
      %v1138 = vpack.c.b16 %v1032, %v1030
      %v1139 = vpack.c.b16 %v1035, %v1033
      %v1140 = vpack.c.b16 %v1036, %v1034
      %v1141 = vpack.c.b16 %v1039, %v1037
      %v1142 = vpack.c.b16 %v1040, %v1038
      %v1143 = vpack.c.b16 %v1043, %v1041
      %v1144 = vpack.c.b16 %v1044, %v1042
      %v1145 = vpack.c.b16 %v1047, %v1045
      %v1146 = vpack.c.b16 %v1048, %v1046
      %v1147 = vpack.c.b16 %v1051, %v1049
      %v1148 = vpack.c.b16 %v1052, %v1050
      %v1149 = vpack.c.b16 %v1055, %v1053
      %v1150 = vpack.c.b16 %v1056, %v1054
      %v1151 = vpack.c.b16 %v1059, %v1057
      %v1152 = vpack.c.b16 %v1060, %v1058
      %v1153 = vpack.c.b16 %v1063, %v1061
      %v1154 = vpack.c.b16 %v1064, %v1062
      %v1155 = vpack.c.b16 %v1067, %v1065
      %v1156 = vpack.c.b16 %v1068, %v1066
      %v1157 = vpack.c.b16 %v1071, %v1069
      %v1158 = vpack.c.b16 %v1072, %v1070
      %v1159 = vpack.c.b16 %v1075, %v1073
      %v1160 = vpack.c.b16 %v1076, %v1074
      %v1161 = vpack.c.b16 %v1079, %v1077
      %v1162 = vpack.c.b16 %v1080, %v1078
      %v1163 = vpack.c.b16 %v1083, %v1081
      %v1164 = vpack.c.b16 %v1084, %v1082
      %v1165 = vpack.c.b16 %v1087, %v1085
      %v1166 = vpack.c.b16 %v1088, %v1086
      %v1167 = vpack.c.b16 %v1091, %v1089
      %v1168 = vpack.c.b16 %v1092, %v1090
      %v1169 = vpack.c.b16 %v1095, %v1093
      %v1170 = vpack.c.b16 %v1096, %v1094
      %v1171 = vpack.c.b16 %v1099, %v1097
      %v1172 = vpack.c.b16 %v1100, %v1098
      %v1173 = vpack.c.b16 %v1103, %v1101
      %v1174 = vpack.c.b16 %v1104, %v1102
      %v1175 = vpack.c.b16 %v1107, %v1105
      %v1176 = vpack.c.b16 %v1108, %v1106
      %v1177 = vpack.c.b16 %v1111, %v1109
      %v1178 = vpack.c.b16 %v1112, %v1110
      %v1179 = vpack.c.b16 %v1115, %v1113
      %v1180 = vpack.c.b16 %v1116, %v1114
      %1245 = vmatprep.subr.bf16.mxu0 %v1118
      %1246 = vmatpush1.bf16.msra.mxu0 %v1117
      %1247 = vmatprep.subr.bf16.mxu0 %v1120
      %1248 = vmatpush1.bf16.msra.mxu0 %v1119
      %1249 = vmatprep.subr.bf16.mxu0 %v1122
      %1250 = vmatpush1.bf16.msra.mxu0 %v1121
      %1251 = vmatprep.subr.bf16.mxu0 %v1124
      %1252 = vmatpush1.bf16.msra.mxu0 %v1123
      %1253 = vmatprep.subr.bf16.mxu0 %v1126
      %1254 = vmatpush1.bf16.msra.mxu0 %v1125
      %1255 = vmatprep.subr.bf16.mxu0 %v1128
      %1256 = vmatpush1.bf16.msra.mxu0 %v1127
      %1257 = vmatprep.subr.bf16.mxu0 %v1130
      %1258 = vmatpush1.bf16.msra.mxu0 %v1129
      %1259 = vmatprep.subr.bf16.mxu0 %v1132
      %1260 = vmatpush1.bf16.msra.mxu0 %v1131
      %1261 = vmatprep.subr.bf16.mxu0 %v1134
      %1262 = vmatpush1.bf16.msra.mxu0 %v1133
      %1263 = vmatprep.subr.bf16.mxu0 %v1136
      %1264 = vmatpush1.bf16.msra.mxu0 %v1135
      %1265 = vmatprep.subr.bf16.mxu0 %v1138
      %1266 = vmatpush1.bf16.msra.mxu0 %v1137
      %1267 = vmatprep.subr.bf16.mxu0 %v1140
      %1268 = vmatpush1.bf16.msra.mxu0 %v1139
      %1269 = vmatprep.subr.bf16.mxu0 %v1142
      %1270 = vmatpush1.bf16.msra.mxu0 %v1141
      %1271 = vmatprep.subr.bf16.mxu0 %v1144
      %1272 = vmatpush1.bf16.msra.mxu0 %v1143
      %1273 = vmatprep.subr.bf16.mxu0 %v1146
      %1274 = vmatpush1.bf16.msra.mxu0 %v1145
      %1275 = vmatprep.subr.bf16.mxu0 %v1148
      %1276 = vmatpush1.bf16.msra.mxu0 %v1147
      %1277 = vmatprep.mubr.bf16.mxu0 %v858
      %1278 = vmatmul.mubr.bf16.gmra.mrb[0].mxu0 %v857
      %v1279 = vpop.f32.mrb[0].mxu0
      %v1280 = vadd.f32 0.0, %v1279
      %v1281 = vpop.f32.mrb[0].mxu0
      %v1282 = vadd.f32 0.0, %v1281
      %v1283 = vpop.f32.mrb[0].mxu0
      %v1284 = vadd.f32 0.0, %v1283
      %v1285 = vpop.f32.mrb[0].mxu0
      %v1286 = vadd.f32 0.0, %v1285
      %1287 = vdwg.mxu0
      %1288 = vmatprep.subr.bf16.mxu0 %v1150
      %1289 = vmatpush1.bf16.msra.mxu0 %v1149
      %1290 = vmatprep.subr.bf16.mxu0 %v1152
      %1291 = vmatpush1.bf16.msra.mxu0 %v1151
      %1292 = vmatprep.subr.bf16.mxu0 %v1154
      %1293 = vmatpush1.bf16.msra.mxu0 %v1153
      %1294 = vmatprep.subr.bf16.mxu0 %v1156
      %1295 = vmatpush1.bf16.msra.mxu0 %v1155
      %1296 = vmatprep.subr.bf16.mxu0 %v1158
      %1297 = vmatpush1.bf16.msra.mxu0 %v1157
      %1298 = vmatprep.subr.bf16.mxu0 %v1160
      %1299 = vmatpush1.bf16.msra.mxu0 %v1159
      %1300 = vmatprep.subr.bf16.mxu0 %v1162
      %1301 = vmatpush1.bf16.msra.mxu0 %v1161
      %1302 = vmatprep.subr.bf16.mxu0 %v1164
      %1303 = vmatpush1.bf16.msra.mxu0 %v1163
      %1304 = vmatprep.subr.bf16.mxu0 %v1166
      %1305 = vmatpush1.bf16.msra.mxu0 %v1165
      %1306 = vmatprep.subr.bf16.mxu0 %v1168
      %1307 = vmatpush1.bf16.msra.mxu0 %v1167
      %1308 = vmatprep.subr.bf16.mxu0 %v1170
      %1309 = vmatpush1.bf16.msra.mxu0 %v1169
      %1310 = vmatprep.subr.bf16.mxu0 %v1172
      %1311 = vmatpush1.bf16.msra.mxu0 %v1171
      %1312 = vmatprep.subr.bf16.mxu0 %v1174
      %1313 = vmatpush1.bf16.msra.mxu0 %v1173
      %1314 = vmatprep.subr.bf16.mxu0 %v1176
      %1315 = vmatpush1.bf16.msra.mxu0 %v1175
      %1316 = vmatprep.subr.bf16.mxu0 %v1178
      %1317 = vmatpush1.bf16.msra.mxu0 %v1177
      %1318 = vmatprep.subr.bf16.mxu0 %v1180
      %1319 = vmatpush1.bf16.msra.mxu0 %v1179
      %1320 = vmatprep.mubr.bf16.mxu0 %v860
      %1321 = vmatmul.mubr.bf16.gmra.mrb[0].mxu0 %v859
      %v1322 = vpop.f32.mrb[0].mxu0
      %v1323 = vadd.f32 %v1280, %v1322
      %v1324 = vpop.f32.mrb[0].mxu0
      %v1325 = vadd.f32 %v1282, %v1324
      %v1326 = vpop.f32.mrb[0].mxu0
      %v1327 = vadd.f32 %v1284, %v1326
      %v1328 = vpop.f32.mrb[0].mxu0
      %v1329 = vadd.f32 %v1286, %v1328
      %1330 = vdwg.mxu0
      %v1331 = vadd.f32 %v853, %v1323
      %v1332 = vadd.f32 %v854, %v1325
      %v1333 = vadd.f32 %v855, %v1327
      %v1334 = vadd.f32 %v856, %v1329
      %1335 = vst [vmem:[#allocation2] sm:$0xff] %v1331
      %1336 = vst [vmem:[#allocation2 + $0x8] sm:$0xff] %v1332
      %1337 = vst [vmem:[#allocation2 + $0x10] sm:$0xff] %v1333
      %1338 = vst [vmem:[#allocation2 + $0x18] sm:$0xff] %v1334
      // Predicated region
      $region49: #{mod_rztx_decoder_layer.15} parent=43 // pred_check
        %p1339 = pneg %p339
      $region50: #{mod_rztx_decoder_layer.15} parent=43 // pred_check_branch
        %1341 = sbr.rel (%p1339) target = $region52
      $region51: #{mod_rztx_decoder_layer.15} parent=43 // pred_region
        %v1342 = vld [vmem:[%s312] sm:$0xff]
        %v1343 = vld [vmem:[%s312 + $0x8] sm:$0xff]
        %v1344 = vld [vmem:[%s312 + $0x10] sm:$0xff]
        %v1345 = vld [vmem:[%s312 + $0x18] sm:$0xff]
        %s1346 = sld [smem:[#allocation3]]
        %v1347 = vld [vmem:[#allocation2] sm:$0xff]
        %v1348 = vld [vmem:[#allocation2 + $0x8] sm:$0xff]
        %v1349 = vld [vmem:[#allocation2 + $0x10] sm:$0xff]
        %v1350 = vld [vmem:[#allocation2 + $0x18] sm:$0xff]
        %v1351 = vld [vmem:[%s4] sm:$0x3]
        %v1353 = vlaneseq
        %v1354 = vshrl.u32 %v1353, 7
        %v1355 = vsub.s32 0, %v1354
        %v1356 = vrot.slane %v1351, %v1355
        %v1357 = vlaneseq
        %v1358 = vshrl.u32 %v1357, 7
        %v1359 = vsub.s32 1, %v1358
        %v1360 = vrot.slane %v1351, %v1359
        %v1363 = vadd.f32 %v1347, %v1356
        %v1364 = vadd.f32 %v1348, %v1360
        %v1365 = vadd.f32 %v1349, %v1356
        %v1366 = vadd.f32 %v1350, %v1360
        %v1367 = vstv %s1346
        %v1368 = vmul.f32 %v1367, %v1363
        %v1369 = vmul.f32 %v1367, %v1364
        %v1370 = vmul.f32 %v1367, %v1365
        %v1371 = vmul.f32 %v1367, %v1366
        %v1372 = vadd.f32 %v1342, %v1368
        %v1373 = vadd.f32 %v1343, %v1369
        %v1374 = vadd.f32 %v1344, %v1370
        %v1375 = vadd.f32 %v1345, %v1371
        %1376 = vst [vmem:[%s337] sm:$0xff] %v1372
        %1377 = vst [vmem:[%s337 + $0x8] sm:$0xff] %v1373
        %1378 = vst [vmem:[%s337 + $0x10] sm:$0xff] %v1374
        %1379 = vst [vmem:[%s337 + $0x18] sm:$0xff] %v1375
      $region52: #{mod_rztx_decoder_layer.15} parent=43 // pred_fallthru
        _
      %s1380 = smul.u32 2, %s22
      %p1381 = scmp.lt.s32.totalorder %s1380, 3
      %s1382 = scalar_select %p1381, %s1380, 3
      %s1383 = smul.addr %s1382, 2
      %s1384 = smul.addr %s1383, 8
      %s1385 = scalar_lea.vmem %s6, %s1384
      // Predicated region
      $region53: #{mod_rztx_decoder_layer.15} parent=43 // pred_check
        %p1386 = pneg %p194
      $region54: #{mod_rztx_decoder_layer.15} parent=43 // pred_check_branch
        %1388 = sbr.rel (%p1386) target = $region56
      $region55: #{mod_rztx_decoder_layer.15} parent=43 // pred_region
        %s1389 = smul.u32 2, %s22
      $region56: #{mod_rztx_decoder_layer.15} parent=43 // pred_fallthru
        _
    $region44: #{mod_rztx_decoder_layer.15} parent=5 // pred_fallthru
      _
    %p1390 = scmp.le.s32.totalorder 2, %s13
    // Predicated region
    $region57: #{mod_rztx_decoder_layer.15} parent=5 // pred_check
      %p1391 = pneg %p1390
    $region58: #{mod_rztx_decoder_layer.15} parent=5 // pred_check_branch
      %1393 = sbr.rel (%p1391) target = $region60
    $region59: #{mod_rztx_decoder_layer.15} parent=5 // pred_region
      %s1394 = ssub.s32 %s13, 2
      // Predicated region
      $region61: #{mod_rztx_decoder_layer.15} parent=59 // pred_check
        %p1395 = pneg %p200
      $region62: #{mod_rztx_decoder_layer.15} parent=59 // pred_check_branch
        %1397 = sbr.rel (%p1395) target = $region64
      $region63: #{mod_rztx_decoder_layer.15} parent=59 // pred_region
        %s1398 = smul.u32 2, %s24
        %p1399 = scmp.lt.s32.totalorder %s1398, 3
        %s1400 = scalar_select %p1399, %s1398, 3
        %s1401 = smul.addr %s1400, 2
        %s1402 = smul.addr %s1401, 8
        %s1403 = scalar_lea.vmem %s6, %s1402
      $region64: #{mod_rztx_decoder_layer.15} parent=59 // pred_fallthru
        _
    $region60: #{mod_rztx_decoder_layer.15} parent=5 // pred_fallthru
      _
  $region6: #{mod_rztx_decoder_layer.15} parent=0 // loop_footer
    %s17 = sadd.s32 1, %s13
  $region7: #{mod_rztx_decoder_layer.15} parent=0 // loop_footer_branch
    %12 = sbr.rel target = $region3
  $region8: #{mod_rztx_decoder_layer.15} parent=0 // loop_exit
    _

</llo_original>
